<compile_context>
chip_gen: v6e
topology: v6e:2x2x1
jax: 0.10.0
libtpu: 0.0.40
codegen_flags: <defaults>
</compile_context>

<pallas_src>
import jax
import jax.numpy as jnp
from jax.experimental import pallas as pl
from jax.experimental.pallas import tpu as pltpu


def _round_up(x, m):
    return ((x + m - 1) // m) * m


def _leaky_relu(h, slope=0.2):
    return jnp.where(h > 0, h, slope * h)


def generator_mlp_kernel(x_ref,
                         w1_ref, b1_ref,
                         w2_ref, b2_ref,
                         w3_ref, b3_ref,
                         w4_ref, b4_ref,
                         o_ref):
    # Fused 4-layer MLP on one (TB, K) activation tile.  Weights are bf16 and
    # VMEM-resident across grid steps; all matmuls accumulate in f32 on the
    # MXU, leaky-relu runs on the VPU, tanh on the EUP.
    h = jnp.dot(x_ref[...], w1_ref[...],
                preferred_element_type=jnp.float32) + b1_ref[...]
    h = _leaky_relu(h)

    h = jnp.dot(h.astype(jnp.bfloat16), w2_ref[...],
                preferred_element_type=jnp.float32) + b2_ref[...]
    h = _leaky_relu(h)

    h = jnp.dot(h.astype(jnp.bfloat16), w3_ref[...],
                preferred_element_type=jnp.float32) + b3_ref[...]
    h = _leaky_relu(h)

    h = jnp.dot(h.astype(jnp.bfloat16), w4_ref[...],
                preferred_element_type=jnp.float32) + b4_ref[...]
    o_ref[...] = jnp.tanh(h).astype(o_ref.dtype)


def init_generator_params(key, width, noise_dim, s_chan, a_chan):
    """f32 master parameters, shapes matching the nn.Module (stored (in,out))."""
    in_dim = noise_dim + width * width * s_chan
    out_dim = width * width * a_chan
    dims = [(in_dim, 256), (256, 512), (512, 1024), (1024, out_dim)]
    params = []
    for i, (din, dout) in enumerate(dims):
        kw, kb = jax.random.split(jax.random.fold_in(key, i))
        scale = 1.0 / jnp.sqrt(jnp.float32(din))
        w = jax.random.uniform(kw, (din, dout), jnp.float32, -scale, scale)
        b = jax.random.uniform(kb, (1, dout), jnp.float32, -scale, scale)
        params += [w, b]
    return params


def pack_kernel_params(params_f32, noise_dim):
    """bf16 weights; W1 gets zero rows so the packed layer-1 K is 128-aligned."""
    w1, b1, w2, b2, w3, b3, w4, b4 = params_f32
    z_pad = _round_up(max(noise_dim, 1), 128)
    pad_rows = z_pad - noise_dim
    w1_packed = jnp.concatenate(
        [w1[:noise_dim],
         jnp.zeros((pad_rows, w1.shape[1]), w1.dtype),
         w1[noise_dim:]],
        axis=0)
    bf16 = jnp.bfloat16
    return [
        w1_packed.astype(bf16),   # (z_pad + W*W*s_chan, 256)
        b1,
        w2.astype(bf16), b2,
        w3.astype(bf16), b3,
        w4.astype(bf16), b4,
    ]


def generator_forward(z, scenes, kernel_params, *, width, noise_dim, s_chan,
                      a_chan, batch_tile=512, out_dtype=jnp.float32):
    """JAX wrapper mirroring Generator.forward (kernel_params from pack_kernel_params)."""
    B = z.shape[0]
    c_dim = width * width * s_chan
    out_dim = width * width * a_chan
    z_pad = _round_up(max(noise_dim, 1), 128)
    k_packed = z_pad + c_dim

    # Layout glue only: flatten, lane-pad z to a 128 multiple, pack z+scenes
    # into one bf16 slab (single fused XLA op). The batch dim is NOT padded.
    z_flat = z.reshape(B, noise_dim)
    c_flat = scenes.reshape(B, c_dim)
    pieces = [z_flat]
    if z_pad > noise_dim:
        pieces.append(jnp.zeros((B, z_pad - noise_dim), z_flat.dtype))
    pieces.append(c_flat)
    x = jnp.concatenate(pieces, axis=1).astype(jnp.bfloat16)

    # Batch tiling: once B >= 16, force at least 2 grid steps (both v7x TCs
    # get work) with TB a multiple of 8; large batches tile at batch_tile
    # rows.  The ragged last block is handled by Pallas (only M is ragged, so
    # garbage rows only flow to discarded output rows).
    if B < 16:
        TB = B
    else:
        TB = min(batch_tile, _round_up(pl.cdiv(B, 2), 8))
    grid = (pl.cdiv(B, TB),)

    in_specs = [pl.BlockSpec((TB, k_packed), lambda i: (i, 0))]
    # Constant block index -> weights/biases fetched once, stay VMEM-resident.
    in_specs += [pl.BlockSpec(p.shape, lambda i: (0, 0)) for p in kernel_params]
    out_specs = pl.BlockSpec((TB, out_dim), lambda i: (i, 0))

    # VMEM budget sized from the chosen TB (resident bf16 weights are still
    # double-buffer allocated by the default pipeliner), clamped to <= 32 MiB
    # so it is safe on v7x's 64 MiB per-TensorCore VMEM.
    out_bytes = jnp.dtype(out_dtype).itemsize
    param_bytes = sum(int(p.size) * p.dtype.itemsize for p in kernel_params)
    vmem_limit = int(2 * param_bytes                               # weight buffers
                     + 2 * TB * k_packed * 2                       # bf16 input tiles
                     + 2 * TB * out_dim * out_bytes                # output tiles
                     + TB * (256 + 512 + 1024 + out_dim) * 4       # f32 intermediates
                     + (4 << 20))                                  # headroom
    vmem_limit = max(16 << 20, min(vmem_limit, 32 << 20))

    flops = 2 * B * ((noise_dim + c_dim) * 256 + 256 * 512 + 512 * 1024
                     + 1024 * out_dim)
    bytes_accessed = (param_bytes                     # weights read once (resident)
                      + B * k_packed * 2              # bf16 packed input
                      + B * out_dim * out_bytes)      # output

    out = pl.pallas_call(
        generator_mlp_kernel,
        out_shape=jax.ShapeDtypeStruct((B, out_dim), out_dtype),
        grid_spec=pltpu.PrefetchScalarGridSpec(
            num_scalar_prefetch=0,
            grid=grid,
            in_specs=in_specs,
            out_specs=out_specs),
        compiler_params=pltpu.CompilerParams(
            dimension_semantics=("parallel",),
            vmem_limit_bytes=vmem_limit),
        cost_estimate=pl.CostEstimate(
            flops=flops,
            transcendentals=B * out_dim,
            bytes_accessed=bytes_accessed),
    )(x, *kernel_params)

    # Layout glue: NCHW view to match torch's out.view(B, C, W, W).
    return out.reshape(B, a_chan, width, width)


def _reference_forward(z, scenes, params_f32, *, width, noise_dim, s_chan, a_chan):
    """Pure-JAX f32 reference matching the PyTorch module exactly."""
    B = z.shape[0]
    x = jnp.concatenate(
        [z.reshape(B, noise_dim), scenes.reshape(B, width * width * s_chan)],
        axis=1).astype(jnp.float32)
    w1, b1, w2, b2, w3, b3, w4, b4 = params_f32
    h = _leaky_relu(x @ w1 + b1)
    h = _leaky_relu(h @ w2 + b2)
    h = _leaky_relu(h @ w3 + b3)
    h = jnp.tanh(h @ w4 + b4)
    return h.reshape(B, a_chan, width, width)


if __name__ == "__main__":
    # Small, module-consistent shapes.
    WIDTH, NOISE_DIM, S_CHAN, A_CHAN = 16, 32, 1, 1

    key = jax.random.PRNGKey(0)
    k_z, k_s, k_p = jax.random.split(key, 3)

    params_f32 = init_generator_params(k_p, WIDTH, NOISE_DIM, S_CHAN, A_CHAN)
    kernel_params = pack_kernel_params(params_f32, NOISE_DIM)

    # Case 1: tiny batch (single grid step).
    B1 = 8
    z1 = jax.random.normal(k_z, (B1, NOISE_DIM), jnp.float32)
    s1 = jax.random.normal(k_s, (B1, S_CHAN, WIDTH, WIDTH), jnp.float32)
    out1 = jax.block_until_ready(
        generator_forward(z1, s1, kernel_params, width=WIDTH,
                          noise_dim=NOISE_DIM, s_chan=S_CHAN, a_chan=A_CHAN))
    ref1 = _reference_forward(z1, s1, params_f32, width=WIDTH,
                              noise_dim=NOISE_DIM, s_chan=S_CHAN, a_chan=A_CHAN)
    assert out1.shape == (B1, A_CHAN, WIDTH, WIDTH)
    err1 = float(jnp.max(jnp.abs(out1 - ref1)))
    assert err1 < 5e-2, f"case1 max abs err {err1}"

    # Case 2: multi-step grid with a ragged (unpadded) last batch block.
    B2 = 40
    z2 = jax.random.normal(jax.random.fold_in(k_z, 1), (B2, NOISE_DIM), jnp.float32)
    s2 = jax.random.normal(jax.random.fold_in(k_s, 1),
                           (B2, S_CHAN, WIDTH, WIDTH), jnp.float32)
    out2 = jax.block_until_ready(
        generator_forward(z2, s2, kernel_params, width=WIDTH,
                          noise_dim=NOISE_DIM, s_chan=S_CHAN, a_chan=A_CHAN))
    ref2 = _reference_forward(z2, s2, params_f32, width=WIDTH,
                              noise_dim=NOISE_DIM, s_chan=S_CHAN, a_chan=A_CHAN)
    assert out2.shape == (B2, A_CHAN, WIDTH, WIDTH)
    err2 = float(jnp.max(jnp.abs(out2 - ref2)))
    assert err2 < 5e-2, f"case2 max abs err {err2}"

    print("KERNEL_OK")
</pallas_src>

<mosaic_0001>
module attributes {stable_mosaic.version = 11 : i64} {
  func.func @generator_mlp_kernel(%arg0: i32, %arg1: memref<8x384xbf16, #tpu.memory_space<vmem>>, %arg2: memref<384x256xbf16, #tpu.memory_space<vmem>>, %arg3: memref<1x256xf32, #tpu.memory_space<vmem>>, %arg4: memref<256x512xbf16, #tpu.memory_space<vmem>>, %arg5: memref<1x512xf32, #tpu.memory_space<vmem>>, %arg6: memref<512x1024xbf16, #tpu.memory_space<vmem>>, %arg7: memref<1x1024xf32, #tpu.memory_space<vmem>>, %arg8: memref<1024x256xbf16, #tpu.memory_space<vmem>>, %arg9: memref<1x256xf32, #tpu.memory_space<vmem>>, %arg10: memref<8x256xf32, #tpu.memory_space<vmem>>) attributes {dimension_semantics = [#tpu.dimension_semantics<parallel>], iteration_bounds = array<i64: 1>, scalar_prefetch = 0 : i64, scratch_operands = 0 : i64, tpu.core_type = #tpu.core_type<tc>, window_params = [{transform_indices = @transform_0, window_bounds = array<i64: 8, 384>}, {pipeline_mode = #tpu.pipeline_mode<synchronous>, transform_indices = @transform_1, window_bounds = array<i64: 384, 256>}, {pipeline_mode = #tpu.pipeline_mode<synchronous>, transform_indices = @transform_2, window_bounds = array<i64: 1, 256>}, {pipeline_mode = #tpu.pipeline_mode<synchronous>, transform_indices = @transform_3, window_bounds = array<i64: 256, 512>}, {pipeline_mode = #tpu.pipeline_mode<synchronous>, transform_indices = @transform_4, window_bounds = array<i64: 1, 512>}, {pipeline_mode = #tpu.pipeline_mode<synchronous>, transform_indices = @transform_5, window_bounds = array<i64: 512, 1024>}, {pipeline_mode = #tpu.pipeline_mode<synchronous>, transform_indices = @transform_6, window_bounds = array<i64: 1, 1024>}, {pipeline_mode = #tpu.pipeline_mode<synchronous>, transform_indices = @transform_7, window_bounds = array<i64: 1024, 256>}, {pipeline_mode = #tpu.pipeline_mode<synchronous>, transform_indices = @transform_8, window_bounds = array<i64: 1, 256>}, {transform_indices = @transform_9, window_bounds = array<i64: 8, 256>}]} {
    %c0 = arith.constant 0 : index
    %c0_0 = arith.constant 0 : index
    %0 = vector.load %arg1[%c0, %c0_0] : memref<8x384xbf16, #tpu.memory_space<vmem>>, vector<8x384xbf16>
    %c0_1 = arith.constant 0 : index
    %c0_2 = arith.constant 0 : index
    %1 = vector.load %arg2[%c0_1, %c0_2] : memref<384x256xbf16, #tpu.memory_space<vmem>>, vector<384x256xbf16>
    %cst = arith.constant dense<0.000000e+00> : vector<8x256xf32>
    %2 = tpu.matmul %0, %1, %cst {dimension_numbers = #tpu.dot_dimension_numbers<[1], [0], [0], [1], [0, 0, 1, 1], [], []>} : vector<8x384xbf16>, vector<384x256xbf16>, vector<8x256xf32> -> vector<8x256xf32>
    %c0_3 = arith.constant 0 : index
    %c0_4 = arith.constant 0 : index
    %3 = vector.load %arg3[%c0_3, %c0_4] : memref<1x256xf32, #tpu.memory_space<vmem>>, vector<1x256xf32>
    %4 = vector.broadcast %3 : vector<1x256xf32> to vector<8x256xf32>
    %5 = arith.addf %2, %4 : vector<8x256xf32>
    %cst_5 = arith.constant 0.000000e+00 : f32
    %6 = vector.broadcast %cst_5 : f32 to vector<8x256xf32>
    %7 = arith.cmpf ogt, %5, %6 : vector<8x256xf32>
    %cst_6 = arith.constant 2.000000e-01 : f32
    %8 = vector.broadcast %cst_6 : f32 to vector<8x256xf32>
    %9 = arith.mulf %8, %5 : vector<8x256xf32>
    %10 = arith.select %7, %5, %9 : vector<8x256xi1>, vector<8x256xf32>
    %11 = arith.truncf %10 : vector<8x256xf32> to vector<8x256xbf16>
    %c0_7 = arith.constant 0 : index
    %c0_8 = arith.constant 0 : index
    %12 = vector.load %arg4[%c0_7, %c0_8] : memref<256x512xbf16, #tpu.memory_space<vmem>>, vector<256x512xbf16>
    %cst_9 = arith.constant dense<0.000000e+00> : vector<8x512xf32>
    %13 = tpu.matmul %11, %12, %cst_9 {dimension_numbers = #tpu.dot_dimension_numbers<[1], [0], [0], [1], [0, 0, 1, 1], [], []>} : vector<8x256xbf16>, vector<256x512xbf16>, vector<8x512xf32> -> vector<8x512xf32>
    %c0_10 = arith.constant 0 : index
    %c0_11 = arith.constant 0 : index
    %14 = vector.load %arg5[%c0_10, %c0_11] : memref<1x512xf32, #tpu.memory_space<vmem>>, vector<1x512xf32>
    %15 = vector.broadcast %14 : vector<1x512xf32> to vector<8x512xf32>
    %16 = arith.addf %13, %15 : vector<8x512xf32>
    %cst_12 = arith.constant 0.000000e+00 : f32
    %17 = vector.broadcast %cst_12 : f32 to vector<8x512xf32>
    %18 = arith.cmpf ogt, %16, %17 : vector<8x512xf32>
    %cst_13 = arith.constant 2.000000e-01 : f32
    %19 = vector.broadcast %cst_13 : f32 to vector<8x512xf32>
    %20 = arith.mulf %19, %16 : vector<8x512xf32>
    %21 = arith.select %18, %16, %20 : vector<8x512xi1>, vector<8x512xf32>
    %22 = arith.truncf %21 : vector<8x512xf32> to vector<8x512xbf16>
    %c0_14 = arith.constant 0 : index
    %c0_15 = arith.constant 0 : index
    %23 = vector.load %arg6[%c0_14, %c0_15] : memref<512x1024xbf16, #tpu.memory_space<vmem>>, vector<512x1024xbf16>
    %cst_16 = arith.constant dense<0.000000e+00> : vector<8x1024xf32>
    %24 = tpu.matmul %22, %23, %cst_16 {dimension_numbers = #tpu.dot_dimension_numbers<[1], [0], [0], [1], [0, 0, 1, 1], [], []>} : vector<8x512xbf16>, vector<512x1024xbf16>, vector<8x1024xf32> -> vector<8x1024xf32>
    %c0_17 = arith.constant 0 : index
    %c0_18 = arith.constant 0 : index
    %25 = vector.load %arg7[%c0_17, %c0_18] : memref<1x1024xf32, #tpu.memory_space<vmem>>, vector<1x1024xf32>
    %26 = vector.broadcast %25 : vector<1x1024xf32> to vector<8x1024xf32>
    %27 = arith.addf %24, %26 : vector<8x1024xf32>
    %cst_19 = arith.constant 0.000000e+00 : f32
    %28 = vector.broadcast %cst_19 : f32 to vector<8x1024xf32>
    %29 = arith.cmpf ogt, %27, %28 : vector<8x1024xf32>
    %cst_20 = arith.constant 2.000000e-01 : f32
    %30 = vector.broadcast %cst_20 : f32 to vector<8x1024xf32>
    %31 = arith.mulf %30, %27 : vector<8x1024xf32>
    %32 = arith.select %29, %27, %31 : vector<8x1024xi1>, vector<8x1024xf32>
    %33 = arith.truncf %32 : vector<8x1024xf32> to vector<8x1024xbf16>
    %c0_21 = arith.constant 0 : index
    %c0_22 = arith.constant 0 : index
    %34 = vector.load %arg8[%c0_21, %c0_22] : memref<1024x256xbf16, #tpu.memory_space<vmem>>, vector<1024x256xbf16>
    %cst_23 = arith.constant dense<0.000000e+00> : vector<8x256xf32>
    %35 = tpu.matmul %33, %34, %cst_23 {dimension_numbers = #tpu.dot_dimension_numbers<[1], [0], [0], [1], [0, 0, 1, 1], [], []>} : vector<8x1024xbf16>, vector<1024x256xbf16>, vector<8x256xf32> -> vector<8x256xf32>
    %c0_24 = arith.constant 0 : index
    %c0_25 = arith.constant 0 : index
    %36 = vector.load %arg9[%c0_24, %c0_25] : memref<1x256xf32, #tpu.memory_space<vmem>>, vector<1x256xf32>
    %37 = vector.broadcast %36 : vector<1x256xf32> to vector<8x256xf32>
    %38 = arith.addf %35, %37 : vector<8x256xf32>
    %39 = math.tanh %38 : vector<8x256xf32>
    %c0_26 = arith.constant 0 : index
    %c0_27 = arith.constant 0 : index
    %40 = vector.load %arg10[%c0_26, %c0_27] : memref<8x256xf32, #tpu.memory_space<vmem>>, vector<8x256xf32>
    tpu.vector_store %arg10[%c0_26, %c0_27], %39 {strides = array<i32>} : memref<8x256xf32, #tpu.memory_space<vmem>>, vector<8x256xf32>,
    return
  }
  func.func @transform_0(%arg0: i32) -> (i32, i32) {
    %c0_i32 = arith.constant 0 : i32
    %c0_i32_0 = arith.constant 0 : i32
    return %arg0, %c0_i32 : i32, i32
  }
  func.func @transform_1(%arg0: i32) -> (i32, i32) {
    %c0_i32 = arith.constant 0 : i32
    %c0_i32_0 = arith.constant 0 : i32
    %c0_i32_1 = arith.constant 0 : i32
    return %c0_i32, %c0_i32_0 : i32, i32
  }
  func.func @transform_2(%arg0: i32) -> (i32, i32) {
    %c0_i32 = arith.constant 0 : i32
    %c0_i32_0 = arith.constant 0 : i32
    %c0_i32_1 = arith.constant 0 : i32
    return %c0_i32, %c0_i32_0 : i32, i32
  }
  func.func @transform_3(%arg0: i32) -> (i32, i32) {
    %c0_i32 = arith.constant 0 : i32
    %c0_i32_0 = arith.constant 0 : i32
    %c0_i32_1 = arith.constant 0 : i32
    return %c0_i32, %c0_i32_0 : i32, i32
  }
  func.func @transform_4(%arg0: i32) -> (i32, i32) {
    %c0_i32 = arith.constant 0 : i32
    %c0_i32_0 = arith.constant 0 : i32
    %c0_i32_1 = arith.constant 0 : i32
    return %c0_i32, %c0_i32_0 : i32, i32
  }
  func.func @transform_5(%arg0: i32) -> (i32, i32) {
    %c0_i32 = arith.constant 0 : i32
    %c0_i32_0 = arith.constant 0 : i32
    %c0_i32_1 = arith.constant 0 : i32
    return %c0_i32, %c0_i32_0 : i32, i32
  }
  func.func @transform_6(%arg0: i32) -> (i32, i32) {
    %c0_i32 = arith.constant 0 : i32
    %c0_i32_0 = arith.constant 0 : i32
    %c0_i32_1 = arith.constant 0 : i32
    return %c0_i32, %c0_i32_0 : i32, i32
  }
  func.func @transform_7(%arg0: i32) -> (i32, i32) {
    %c0_i32 = arith.constant 0 : i32
    %c0_i32_0 = arith.constant 0 : i32
    %c0_i32_1 = arith.constant 0 : i32
    return %c0_i32, %c0_i32_0 : i32, i32
  }
  func.func @transform_8(%arg0: i32) -> (i32, i32) {
    %c0_i32 = arith.constant 0 : i32
    %c0_i32_0 = arith.constant 0 : i32
    %c0_i32_1 = arith.constant 0 : i32
    return %c0_i32, %c0_i32_0 : i32, i32
  }
  func.func @transform_9(%arg0: i32) -> (i32, i32) {
    %c0_i32 = arith.constant 0 : i32
    %c0_i32_0 = arith.constant 0 : i32
    return %arg0, %c0_i32 : i32, i32
  }
}

</mosaic_0001>

<llo_original>
// kernel: tpu_custom_call.1
$region0: #{tpu_custom_call.1}
  #allocation0 [shape = 'u32[]', space=smem, size = 0x4, offset = 0x4, fixed_abs, tag = 'smem constant byte address 0x4 - core index']
  #allocation1 [shape = 'u32[144,128]{1,0:T(1,128)}', space=vmem, size = 0x12000, scoped, tag = 'internal scratch']
  %s0 = inlined_call_operand.hbm [shape: bf16[8,384], index: 0, kind: input, shape index: {}]
  %s1 = inlined_call_operand.hbm [shape: bf16[384,256], index: 1, kind: input, shape index: {}]
  %s2 = inlined_call_operand.vmem [shape: f32[1,256], index: 2, kind: input, shape index: {}]
  %s3 = inlined_call_operand.hbm [shape: bf16[256,512], index: 3, kind: input, shape index: {}]
  %s4 = inlined_call_operand.hbm [shape: f32[1,512], index: 4, kind: input, shape index: {}]
  %s5 = inlined_call_operand.hbm [shape: bf16[512,1024], index: 5, kind: input, shape index: {}]
  %s6 = inlined_call_operand.vmem [shape: f32[1,1024], index: 6, kind: input, shape index: {}]
  %s7 = inlined_call_operand.hbm [shape: bf16[1024,256], index: 7, kind: input, shape index: {}]
  %s8 = inlined_call_operand.vmem [shape: f32[1,256], index: 8, kind: input, shape index: {}]
  %s9 = inlined_call_operand.hbm [shape: f32[8,256], index: 9, kind: output, shape index: {}]
  %s10 = sld [smem:[#allocation0]]
  $region70: #{tpu_custom_call.1} parent=0
    _
  %s12 = ssub.s32 1, %s10
  %s13 = scalar_select 0, %s12, %s10
  $region1: #{tpu_custom_call.1} parent=0
    #allocation2 [shape = 'u8[6144]{0}', space=vmem, size = 0x1800, scoped, tag = 'input window, operand 0, single buffered']
    #allocation3 [shape = 's32[1]{0}', space=sflag, size = 0x4, scoped, tag = 'scoped memory for tpu_custom_call.1']
    #allocation4 [shape = 's32[1]{0}', space=sflag, size = 0x4, scoped, tag = 'scoped memory for tpu_custom_call.1']
    #allocation5 [shape = 'u8[196608]{0}', space=vmem, size = 0x30000, scoped, tag = 'input window, operand 1, single buffered']
    #allocation6 [shape = 's32[1]{0}', space=sflag, size = 0x4, scoped, tag = 'scoped memory for tpu_custom_call.1']
    #allocation7 [shape = 'u8[262144]{0}', space=vmem, size = 0x40000, scoped, tag = 'input window, operand 3, single buffered']
    #allocation8 [shape = 'u8[2048]{0}', space=vmem, size = 0x800, scoped, tag = 'input window, operand 4, single buffered']
    #allocation9 [shape = 's32[1]{0}', space=sflag, size = 0x4, scoped, tag = 'scoped memory for tpu_custom_call.1']
    #allocation10 [shape = 'u8[1048576]{0}', space=vmem, size = 0x100000, scoped, tag = 'input window, operand 5, single buffered']
    #allocation11 [shape = 'u8[524288]{0}', space=vmem, size = 0x80000, scoped, tag = 'input window, operand 7, single buffered']
    #allocation12 [shape = 's32[1]{0}', space=sflag, size = 0x4, scoped, tag = 'scoped memory for tpu_custom_call.1']
    #allocation13 [shape = 'u8[8192]{0}', space=vmem, size = 0x2000, scoped, tag = 'output window, operand 0, single buffered']
    %14 = vsyncpa [#allocation3], 0
    %15 = vsyncpa [#allocation6], 0
    %16 = vsyncpa [#allocation9], 0
    %17 = vsyncpa [#allocation12], 0
    %18 = vsyncpa [#allocation4], 0
    // Predicated region
    $region2: #{tpu_custom_call.1} parent=1 // pred_check
      _
    $region3: #{tpu_custom_call.1} parent=1 // pred_check_branch
      %20 = sbr.rel (0) target = $region5
    $region4: #{tpu_custom_call.1} parent=1 // pred_region
      %s22 = ssub.s32 192, 192
      %23 = vsyncadd [#allocation3], %s22
      %s25 = sshll.u32 [#allocation2], 4
      %s26 = int_to_ptr.vmem [resolvable:$true] %s25
      %28 = dma.hbm_to_vmem [thread:$0]  %s0, 192, %s26, [#allocation3]
    $region5: #{tpu_custom_call.1} parent=1 // pred_fallthru
      _
    // Predicated region
    $region6: #{tpu_custom_call.1} parent=1 // pred_check
      _
    $region7: #{tpu_custom_call.1} parent=1 // pred_check_branch
      %30 = sbr.rel (0) target = $region9
    $region8: #{tpu_custom_call.1} parent=1 // pred_region
      %s32 = ssub.s32 6144, 6144
      %33 = vsyncadd [#allocation6], %s32
      %s34 = sshll.u32 [#allocation5], 4
      %s35 = int_to_ptr.vmem [resolvable:$true] %s34
      %40 = dma.hbm_to_vmem [thread:$0]  %s1, 6144, %s35, [#allocation6], 128, 128, 8
    $region9: #{tpu_custom_call.1} parent=1 // pred_fallthru
      _
    // Predicated region
    $region10: #{tpu_custom_call.1} parent=1 // pred_check
      _
    $region11: #{tpu_custom_call.1} parent=1 // pred_check_branch
      %42 = sbr.rel (0) target = $region13
    $region12: #{tpu_custom_call.1} parent=1 // pred_region
      _
    $region13: #{tpu_custom_call.1} parent=1 // pred_fallthru
      _
    // Predicated region
    $region14: #{tpu_custom_call.1} parent=1 // pred_check
      _
    $region15: #{tpu_custom_call.1} parent=1 // pred_check_branch
      %44 = sbr.rel (0) target = $region17
    $region16: #{tpu_custom_call.1} parent=1 // pred_region
      %s46 = ssub.s32 8192, 8192
      %47 = vsyncadd [#allocation6], %s46
      %s48 = sshll.u32 [#allocation7], 4
      %s49 = int_to_ptr.vmem [resolvable:$true] %s48
      %54 = dma.hbm_to_vmem [thread:$0]  %s3, 8192, %s49, [#allocation6], 256, 256, 16
    $region17: #{tpu_custom_call.1} parent=1 // pred_fallthru
      _
    // Predicated region
    $region18: #{tpu_custom_call.1} parent=1 // pred_check
      _
    $region19: #{tpu_custom_call.1} parent=1 // pred_check_branch
      %56 = sbr.rel (0) target = $region21
    $region20: #{tpu_custom_call.1} parent=1 // pred_region
      %s58 = ssub.s32 64, 64
      %59 = vsyncadd [#allocation9], %s58
      %s61 = sshll.u32 [#allocation8], 4
      %s62 = int_to_ptr.vmem [resolvable:$true] %s61
      %64 = dma.hbm_to_vmem [thread:$0]  %s4, 64, %s62, [#allocation9]
    $region21: #{tpu_custom_call.1} parent=1 // pred_fallthru
      _
    // Predicated region
    $region22: #{tpu_custom_call.1} parent=1 // pred_check
      _
    $region23: #{tpu_custom_call.1} parent=1 // pred_check_branch
      %66 = sbr.rel (0) target = $region25
    $region24: #{tpu_custom_call.1} parent=1 // pred_region
      %s68 = ssub.s32 32768, 32768
      %69 = vsyncadd [#allocation9], %s68
      %s70 = sshll.u32 [#allocation10], 4
      %s71 = int_to_ptr.vmem [resolvable:$true] %s70
      %76 = dma.hbm_to_vmem [thread:$0]  %s5, 32768, %s71, [#allocation9], 512, 512, 32
    $region25: #{tpu_custom_call.1} parent=1 // pred_fallthru
      _
    // Predicated region
    $region26: #{tpu_custom_call.1} parent=1 // pred_check
      _
    $region27: #{tpu_custom_call.1} parent=1 // pred_check_branch
      %78 = sbr.rel (0) target = $region29
    $region28: #{tpu_custom_call.1} parent=1 // pred_region
      _
    $region29: #{tpu_custom_call.1} parent=1 // pred_fallthru
      _
    // Predicated region
    $region30: #{tpu_custom_call.1} parent=1 // pred_check
      _
    $region31: #{tpu_custom_call.1} parent=1 // pred_check_branch
      %80 = sbr.rel (0) target = $region33
    $region32: #{tpu_custom_call.1} parent=1 // pred_region
      %s82 = ssub.s32 16384, 16384
      %83 = vsyncadd [#allocation12], %s82
      %s84 = sshll.u32 [#allocation11], 4
      %s85 = int_to_ptr.vmem [resolvable:$true] %s84
      %90 = dma.hbm_to_vmem [thread:$0]  %s7, 16384, %s85, [#allocation12], 128, 128, 8
    $region33: #{tpu_custom_call.1} parent=1 // pred_fallthru
      _
    // Predicated region
    $region34: #{tpu_custom_call.1} parent=1 // pred_check
      _
    $region35: #{tpu_custom_call.1} parent=1 // pred_check_branch
      %92 = sbr.rel (0) target = $region37
    $region36: #{tpu_custom_call.1} parent=1 // pred_region
      _
    $region37: #{tpu_custom_call.1} parent=1 // pred_fallthru
      _
    // Predicated region
    $region38: #{tpu_custom_call.1} parent=1 // pred_check
      _
    $region39: #{tpu_custom_call.1} parent=1 // pred_check_branch
      %94 = sbr.rel (0) target = $region41
    $region40: #{tpu_custom_call.1} parent=1 // pred_region
      %95 = dma.done [#allocation3], 192
    $region41: #{tpu_custom_call.1} parent=1 // pred_fallthru
      _
    // Predicated region
    $region42: #{tpu_custom_call.1} parent=1 // pred_check
      _
    $region43: #{tpu_custom_call.1} parent=1 // pred_check_branch
      %97 = sbr.rel (0) target = $region45
    $region44: #{tpu_custom_call.1} parent=1 // pred_region
      %98 = dma.done [#allocation6], 6144
    $region45: #{tpu_custom_call.1} parent=1 // pred_fallthru
      _
    // Predicated region
    $region46: #{tpu_custom_call.1} parent=1 // pred_check
      _
    $region47: #{tpu_custom_call.1} parent=1 // pred_check_branch
      %100 = sbr.rel (0) target = $region49
    $region48: #{tpu_custom_call.1} parent=1 // pred_region
      %101 = dma.done [#allocation6], 8192
    $region49: #{tpu_custom_call.1} parent=1 // pred_fallthru
      _
    // Predicated region
    $region50: #{tpu_custom_call.1} parent=1 // pred_check
      _
    $region51: #{tpu_custom_call.1} parent=1 // pred_check_branch
      %103 = sbr.rel (0) target = $region53
    $region52: #{tpu_custom_call.1} parent=1 // pred_region
      %104 = dma.done [#allocation9], 64
    $region53: #{tpu_custom_call.1} parent=1 // pred_fallthru
      _
    // Predicated region
    $region54: #{tpu_custom_call.1} parent=1 // pred_check
      _
    $region55: #{tpu_custom_call.1} parent=1 // pred_check_branch
      %106 = sbr.rel (0) target = $region57
    $region56: #{tpu_custom_call.1} parent=1 // pred_region
      %107 = dma.done [#allocation9], 32768
    $region57: #{tpu_custom_call.1} parent=1 // pred_fallthru
      _
    // Predicated region
    $region58: #{tpu_custom_call.1} parent=1 // pred_check
      _
    $region59: #{tpu_custom_call.1} parent=1 // pred_check_branch
      %109 = sbr.rel (0) target = $region61
    $region60: #{tpu_custom_call.1} parent=1 // pred_region
      %110 = dma.done [#allocation12], 16384
    $region61: #{tpu_custom_call.1} parent=1 // pred_fallthru
      _
    %v112 = vld [vmem:[#allocation2] sm:$0xff]
    %v113 = vld [vmem:[#allocation2 + $0x8] sm:$0xf]
    %v114 = vld [vmem:[#allocation5] sm:$0xff]
    %v115 = vld [vmem:[#allocation5 + $0x8] sm:$0xff]
    %v116 = vld [vmem:[#allocation5 + $0x10] sm:$0xff]
    %v117 = vld [vmem:[#allocation5 + $0x18] sm:$0xff]
    %v118 = vld [vmem:[#allocation5 + $0x20] sm:$0xff]
    %v119 = vld [vmem:[#allocation5 + $0x28] sm:$0xff]
    %v120 = vld [vmem:[#allocation5 + $0x30] sm:$0xff]
    %v121 = vld [vmem:[#allocation5 + $0x38] sm:$0xff]
    %v122 = vld [vmem:[#allocation5 + $0x40] sm:$0xff]
    %v123 = vld [vmem:[#allocation5 + $0x48] sm:$0xff]
    %v124 = vld [vmem:[#allocation5 + $0x50] sm:$0xff]
    %v125 = vld [vmem:[#allocation5 + $0x58] sm:$0xff]
    %v126 = vld [vmem:[#allocation5 + $0x60] sm:$0xff]
    %v127 = vld [vmem:[#allocation5 + $0x68] sm:$0xff]
    %v128 = vld [vmem:[#allocation5 + $0x70] sm:$0xff]
    %v129 = vld [vmem:[#allocation5 + $0x78] sm:$0xff]
    %v130 = vld [vmem:[#allocation5 + $0x80] sm:$0xff]
    %v131 = vld [vmem:[#allocation5 + $0x88] sm:$0xff]
    %v132 = vld [vmem:[#allocation5 + $0x90] sm:$0xff]
    %v133 = vld [vmem:[#allocation5 + $0x98] sm:$0xff]
    %v134 = vld [vmem:[#allocation5 + $0xa0] sm:$0xff]
    %v135 = vld [vmem:[#allocation5 + $0xa8] sm:$0xff]
    %v136 = vld [vmem:[#allocation5 + $0xb0] sm:$0xff]
    %v137 = vld [vmem:[#allocation5 + $0xb8] sm:$0xff]
    %v138 = vld [vmem:[#allocation5 + $0xc0] sm:$0xff]
    %v139 = vld [vmem:[#allocation5 + $0xc8] sm:$0xff]
    %v140 = vld [vmem:[#allocation5 + $0xd0] sm:$0xff]
    %v141 = vld [vmem:[#allocation5 + $0xd8] sm:$0xff]
    %v142 = vld [vmem:[#allocation5 + $0xe0] sm:$0xff]
    %v143 = vld [vmem:[#allocation5 + $0xe8] sm:$0xff]
    %v144 = vld [vmem:[#allocation5 + $0xf0] sm:$0xff]
    %v145 = vld [vmem:[#allocation5 + $0xf8] sm:$0xff]
    %v146 = vld [vmem:[#allocation5 + $0x100] sm:$0xff]
    %v147 = vld [vmem:[#allocation5 + $0x108] sm:$0xff]
    %v148 = vld [vmem:[#allocation5 + $0x110] sm:$0xff]
    %v149 = vld [vmem:[#allocation5 + $0x118] sm:$0xff]
    %v150 = vld [vmem:[#allocation5 + $0x120] sm:$0xff]
    %v151 = vld [vmem:[#allocation5 + $0x128] sm:$0xff]
    %v152 = vld [vmem:[#allocation5 + $0x130] sm:$0xff]
    %v153 = vld [vmem:[#allocation5 + $0x138] sm:$0xff]
    %v154 = vld [vmem:[#allocation5 + $0x140] sm:$0xff]
    %v155 = vld [vmem:[#allocation5 + $0x148] sm:$0xff]
    %v156 = vld [vmem:[#allocation5 + $0x150] sm:$0xff]
    %v157 = vld [vmem:[#allocation5 + $0x158] sm:$0xff]
    %v158 = vld [vmem:[#allocation5 + $0x160] sm:$0xff]
    %v159 = vld [vmem:[#allocation5 + $0x168] sm:$0xff]
    %v160 = vld [vmem:[#allocation5 + $0x170] sm:$0xff]
    %v161 = vld [vmem:[#allocation5 + $0x178] sm:$0xff]
    %v162 = vld [vmem:[%s2] sm:$0x3]
    %v164 = vlaneseq
    %v165 = vshrl.u32 %v164, 7
    %v166 = vsub.s32 0, %v165
    %v167 = vrot.slane %v162, %v166
    %v168 = vlaneseq
    %v169 = vshrl.u32 %v168, 7
    %v170 = vsub.s32 1, %v169
    %v171 = vrot.slane %v162, %v170
    %v176 = vunpack.c.l.b16 %v112
    %v177 = vunpack.c.h.b16 %v112
    %v178 = vunpack.c.l.b16 %v113
    %v179 = vpack.c.b16 %v176, %v176
    %v180 = vpack.c.b16 %v177, %v177
    %v181 = vpack.c.b16 %v178, %v178
    %v233 = vunpack.c.l.b16 %v114
    %v234 = vunpack.c.h.b16 %v114
    %v235 = vunpack.c.l.b16 %v115
    %v236 = vunpack.c.h.b16 %v115
    %v237 = vunpack.c.l.b16 %v116
    %v238 = vunpack.c.h.b16 %v116
    %v239 = vunpack.c.l.b16 %v117
    %v240 = vunpack.c.h.b16 %v117
    %v241 = vunpack.c.l.b16 %v118
    %v242 = vunpack.c.h.b16 %v118
    %v243 = vunpack.c.l.b16 %v119
    %v244 = vunpack.c.h.b16 %v119
    %v245 = vunpack.c.l.b16 %v120
    %v246 = vunpack.c.h.b16 %v120
    %v247 = vunpack.c.l.b16 %v121
    %v248 = vunpack.c.h.b16 %v121
    %v249 = vunpack.c.l.b16 %v122
    %v250 = vunpack.c.h.b16 %v122
    %v251 = vunpack.c.l.b16 %v123
    %v252 = vunpack.c.h.b16 %v123
    %v253 = vunpack.c.l.b16 %v124
    %v254 = vunpack.c.h.b16 %v124
    %v255 = vunpack.c.l.b16 %v125
    %v256 = vunpack.c.h.b16 %v125
    %v257 = vunpack.c.l.b16 %v126
    %v258 = vunpack.c.h.b16 %v126
    %v259 = vunpack.c.l.b16 %v127
    %v260 = vunpack.c.h.b16 %v127
    %v261 = vunpack.c.l.b16 %v128
    %v262 = vunpack.c.h.b16 %v128
    %v263 = vunpack.c.l.b16 %v129
    %v264 = vunpack.c.h.b16 %v129
    %v265 = vunpack.c.l.b16 %v130
    %v266 = vunpack.c.h.b16 %v130
    %v267 = vunpack.c.l.b16 %v131
    %v268 = vunpack.c.h.b16 %v131
    %v269 = vunpack.c.l.b16 %v132
    %v270 = vunpack.c.h.b16 %v132
    %v271 = vunpack.c.l.b16 %v133
    %v272 = vunpack.c.h.b16 %v133
    %v273 = vunpack.c.l.b16 %v134
    %v274 = vunpack.c.h.b16 %v134
    %v275 = vunpack.c.l.b16 %v135
    %v276 = vunpack.c.h.b16 %v135
    %v277 = vunpack.c.l.b16 %v136
    %v278 = vunpack.c.h.b16 %v136
    %v279 = vunpack.c.l.b16 %v137
    %v280 = vunpack.c.h.b16 %v137
    %v281 = vunpack.c.l.b16 %v138
    %v282 = vunpack.c.h.b16 %v138
    %v283 = vunpack.c.l.b16 %v139
    %v284 = vunpack.c.h.b16 %v139
    %v285 = vunpack.c.l.b16 %v140
    %v286 = vunpack.c.h.b16 %v140
    %v287 = vunpack.c.l.b16 %v141
    %v288 = vunpack.c.h.b16 %v141
    %v289 = vunpack.c.l.b16 %v142
    %v290 = vunpack.c.h.b16 %v142
    %v291 = vunpack.c.l.b16 %v143
    %v292 = vunpack.c.h.b16 %v143
    %v293 = vunpack.c.l.b16 %v144
    %v294 = vunpack.c.h.b16 %v144
    %v295 = vunpack.c.l.b16 %v145
    %v296 = vunpack.c.h.b16 %v145
    %v297 = vunpack.c.l.b16 %v146
    %v298 = vunpack.c.h.b16 %v146
    %v299 = vunpack.c.l.b16 %v147
    %v300 = vunpack.c.h.b16 %v147
    %v301 = vunpack.c.l.b16 %v148
    %v302 = vunpack.c.h.b16 %v148
    %v303 = vunpack.c.l.b16 %v149
    %v304 = vunpack.c.h.b16 %v149
    %v305 = vunpack.c.l.b16 %v150
    %v306 = vunpack.c.h.b16 %v150
    %v307 = vunpack.c.l.b16 %v151
    %v308 = vunpack.c.h.b16 %v151
    %v309 = vunpack.c.l.b16 %v152
    %v310 = vunpack.c.h.b16 %v152
    %v311 = vunpack.c.l.b16 %v153
    %v312 = vunpack.c.h.b16 %v153
    %v313 = vunpack.c.l.b16 %v154
    %v314 = vunpack.c.h.b16 %v154
    %v315 = vunpack.c.l.b16 %v155
    %v316 = vunpack.c.h.b16 %v155
    %v317 = vunpack.c.l.b16 %v156
    %v318 = vunpack.c.h.b16 %v156
    %v319 = vunpack.c.l.b16 %v157
    %v320 = vunpack.c.h.b16 %v157
    %v321 = vunpack.c.l.b16 %v158
    %v322 = vunpack.c.h.b16 %v158
    %v323 = vunpack.c.l.b16 %v159
    %v324 = vunpack.c.h.b16 %v159
    %v325 = vunpack.c.l.b16 %v160
    %v326 = vunpack.c.h.b16 %v160
    %v327 = vunpack.c.l.b16 %v161
    %v328 = vunpack.c.h.b16 %v161
    %v329 = vpack.c.b16 %v235, %v233
    %v330 = vpack.c.b16 %v236, %v234
    %v331 = vpack.c.b16 %v239, %v237
    %v332 = vpack.c.b16 %v240, %v238
    %v333 = vpack.c.b16 %v243, %v241
    %v334 = vpack.c.b16 %v244, %v242
    %v335 = vpack.c.b16 %v247, %v245
    %v336 = vpack.c.b16 %v248, %v246
    %v337 = vpack.c.b16 %v251, %v249
    %v338 = vpack.c.b16 %v252, %v250
    %v339 = vpack.c.b16 %v255, %v253
    %v340 = vpack.c.b16 %v256, %v254
    %v341 = vpack.c.b16 %v259, %v257
    %v342 = vpack.c.b16 %v260, %v258
    %v343 = vpack.c.b16 %v263, %v261
    %v344 = vpack.c.b16 %v264, %v262
    %v345 = vpack.c.b16 %v267, %v265
    %v346 = vpack.c.b16 %v268, %v266
    %v347 = vpack.c.b16 %v271, %v269
    %v348 = vpack.c.b16 %v272, %v270
    %v349 = vpack.c.b16 %v275, %v273
    %v350 = vpack.c.b16 %v276, %v274
    %v351 = vpack.c.b16 %v279, %v277
    %v352 = vpack.c.b16 %v280, %v278
    %v353 = vpack.c.b16 %v283, %v281
    %v354 = vpack.c.b16 %v284, %v282
    %v355 = vpack.c.b16 %v287, %v285
    %v356 = vpack.c.b16 %v288, %v286
    %v357 = vpack.c.b16 %v291, %v289
    %v358 = vpack.c.b16 %v292, %v290
    %v359 = vpack.c.b16 %v295, %v293
    %v360 = vpack.c.b16 %v296, %v294
    %v361 = vpack.c.b16 %v299, %v297
    %v362 = vpack.c.b16 %v300, %v298
    %v363 = vpack.c.b16 %v303, %v301
    %v364 = vpack.c.b16 %v304, %v302
    %v365 = vpack.c.b16 %v307, %v305
    %v366 = vpack.c.b16 %v308, %v306
    %v367 = vpack.c.b16 %v311, %v309
    %v368 = vpack.c.b16 %v312, %v310
    %v369 = vpack.c.b16 %v315, %v313
    %v370 = vpack.c.b16 %v316, %v314
    %v371 = vpack.c.b16 %v319, %v317
    %v372 = vpack.c.b16 %v320, %v318
    %v373 = vpack.c.b16 %v323, %v321
    %v374 = vpack.c.b16 %v324, %v322
    %v375 = vpack.c.b16 %v327, %v325
    %v376 = vpack.c.b16 %v328, %v326
    %425 = vmatprep.subr.bf16.mxu0 %v344
    %426 = vmatpush1.bf16.msra.mxu0 %v343
    %427 = vmatprep.subr.bf16.mxu0 %v342
    %428 = vmatpush1.bf16.msra.mxu0 %v341
    %429 = vmatprep.subr.bf16.mxu0 %v340
    %430 = vmatpush1.bf16.msra.mxu0 %v339
    %431 = vmatprep.subr.bf16.mxu0 %v338
    %432 = vmatpush1.bf16.msra.mxu0 %v337
    %433 = vmatprep.subr.bf16.mxu0 %v336
    %434 = vmatpush1.bf16.msra.mxu0 %v335
    %435 = vmatprep.subr.bf16.mxu0 %v334
    %436 = vmatpush1.bf16.msra.mxu0 %v333
    %437 = vmatprep.subr.bf16.mxu0 %v332
    %438 = vmatpush1.bf16.msra.mxu0 %v331
    %439 = vmatprep.subr.bf16.mxu0 %v330
    %440 = vmatpush1.bf16.msra.mxu0 %v329
    %441 = vmatprep.subr.bf16.mxu0 %v360
    %442 = vmatpush2.bf16.msra.mxu0 %v359
    %443 = vmatprep.subr.bf16.mxu0 %v358
    %444 = vmatpush2.bf16.msra.mxu0 %v357
    %445 = vmatprep.subr.bf16.mxu0 %v356
    %446 = vmatpush2.bf16.msra.mxu0 %v355
    %447 = vmatprep.subr.bf16.mxu0 %v354
    %448 = vmatpush2.bf16.msra.mxu0 %v353
    %449 = vmatprep.subr.bf16.mxu0 %v352
    %450 = vmatpush2.bf16.msra.mxu0 %v351
    %451 = vmatprep.subr.bf16.mxu0 %v350
    %452 = vmatpush2.bf16.msra.mxu0 %v349
    %453 = vmatprep.subr.bf16.mxu0 %v348
    %454 = vmatpush2.bf16.msra.mxu0 %v347
    %455 = vmatprep.subr.bf16.mxu0 %v346
    %456 = vmatpush2.bf16.msra.mxu0 %v345
    %457 = vmatprep.mubr.bf16.mxu0 %v180
    %458 = vmatmul.mubr.bf16.gmra.mxu0 %v179
    %v459 = vpop.f32.mrf.mxu0
    %v460 = vadd.f32 %v167, %v459
    %v461 = vpop.f32.mrf.mxu0
    %v462 = vadd.f32 %v171, %v461
    %v463 = vpop.f32.mrf.mxu0
    %v464 = vpop.f32.mrf.mxu0
    %465 = vdwg.mxu0
    %466 = vmatprep.subr.bf16.mxu0 %v376
    %467 = vmatpush1.bf16.msra.mxu0 %v375
    %468 = vmatprep.subr.bf16.mxu0 %v374
    %469 = vmatpush1.bf16.msra.mxu0 %v373
    %470 = vmatprep.subr.bf16.mxu0 %v372
    %471 = vmatpush1.bf16.msra.mxu0 %v371
    %472 = vmatprep.subr.bf16.mxu0 %v370
    %473 = vmatpush1.bf16.msra.mxu0 %v369
    %474 = vmatprep.subr.bf16.mxu0 %v368
    %475 = vmatpush1.bf16.msra.mxu0 %v367
    %476 = vmatprep.subr.bf16.mxu0 %v366
    %477 = vmatpush1.bf16.msra.mxu0 %v365
    %478 = vmatprep.subr.bf16.mxu0 %v364
    %479 = vmatpush1.bf16.msra.mxu0 %v363
    %480 = vmatprep.subr.bf16.mxu0 %v362
    %481 = vmatpush1.bf16.msra.mxu0 %v361
    %482 = vmatprep.subr.bf16.mxu0 0
    %483 = vmatpush2.bf16.msra.mxu0 0
    %484 = vmatprep.subr.bf16.mxu0 0
    %485 = vmatpush2.bf16.msra.mxu0 0
    %486 = vmatprep.subr.bf16.mxu0 0
    %487 = vmatpush2.bf16.msra.mxu0 0
    %488 = vmatprep.subr.bf16.mxu0 0
    %489 = vmatpush2.bf16.msra.mxu0 0
    %490 = vmatprep.subr.bf16.mxu0 0
    %491 = vmatpush2.bf16.msra.mxu0 0
    %492 = vmatprep.subr.bf16.mxu0 0
    %493 = vmatpush2.bf16.msra.mxu0 0
    %494 = vmatprep.subr.bf16.mxu0 0
    %495 = vmatpush2.bf16.msra.mxu0 0
    %496 = vmatprep.subr.bf16.mxu0 0
    %497 = vmatpush2.bf16.msra.mxu0 0
    %498 = vmatprep.mubr.bf16.mxu0 0
    %499 = vmatmul.mubr.bf16.gmra.mxu0 %v181
    %v500 = vpop.f32.mrf.mxu0
    %v501 = vadd.f32 %v460, %v500
    %v502 = vpop.f32.mrf.mxu0
    %v503 = vadd.f32 %v462, %v502
    %v504 = vpop.f32.mrf.mxu0
    %v505 = vpop.f32.mrf.mxu0
    %506 = vdwg.mxu0
    %vm507 = vcmp.gt.f32.partialorder %v501, 0.0
    %vm508 = vcmp.gt.f32.partialorder %v503, 0.0
    %v509 = vmul.f32 %v501, 0.2
    %v510 = vmul.f32 %v503, 0.2
    %v511 = vsel %vm507, %v501, %v509
    %v512 = vsel %vm508, %v503, %v510
    %v513 = vpack.c.bf16 %v511, %v511
    %v514 = vpack.c.bf16 %v512, %v512
    %v515 = vld [vmem:[#allocation7] sm:$0xff]
    %v516 = vld [vmem:[#allocation7 + $0x8] sm:$0xff]
    %v517 = vld [vmem:[#allocation7 + $0x10] sm:$0xff]
    %v518 = vld [vmem:[#allocation7 + $0x18] sm:$0xff]
    %v519 = vld [vmem:[#allocation7 + $0x20] sm:$0xff]
    %v520 = vld [vmem:[#allocation7 + $0x28] sm:$0xff]
    %v521 = vld [vmem:[#allocation7 + $0x30] sm:$0xff]
    %v522 = vld [vmem:[#allocation7 + $0x38] sm:$0xff]
    %v523 = vld [vmem:[#allocation7 + $0x40] sm:$0xff]
    %v524 = vld [vmem:[#allocation7 + $0x48] sm:$0xff]
    %v525 = vld [vmem:[#allocation7 + $0x50] sm:$0xff]
    %v526 = vld [vmem:[#allocation7 + $0x58] sm:$0xff]
    %v527 = vld [vmem:[#allocation7 + $0x60] sm:$0xff]
    %v528 = vld [vmem:[#allocation7 + $0x68] sm:$0xff]
    %v529 = vld [vmem:[#allocation7 + $0x70] sm:$0xff]
    %v530 = vld [vmem:[#allocation7 + $0x78] sm:$0xff]
    %v531 = vld [vmem:[#allocation7 + $0x80] sm:$0xff]
    %v532 = vld [vmem:[#allocation7 + $0x88] sm:$0xff]
    %v533 = vld [vmem:[#allocation7 + $0x90] sm:$0xff]
    %v534 = vld [vmem:[#allocation7 + $0x98] sm:$0xff]
    %v535 = vld [vmem:[#allocation7 + $0xa0] sm:$0xff]
    %v536 = vld [vmem:[#allocation7 + $0xa8] sm:$0xff]
    %v537 = vld [vmem:[#allocation7 + $0xb0] sm:$0xff]
    %v538 = vld [vmem:[#allocation7 + $0xb8] sm:$0xff]
    %v539 = vld [vmem:[#allocation7 + $0xc0] sm:$0xff]
    %v540 = vld [vmem:[#allocation7 + $0xc8] sm:$0xff]
    %v541 = vld [vmem:[#allocation7 + $0xd0] sm:$0xff]
    %v542 = vld [vmem:[#allocation7 + $0xd8] sm:$0xff]
    %v543 = vld [vmem:[#allocation7 + $0xe0] sm:$0xff]
    %v544 = vld [vmem:[#allocation7 + $0xe8] sm:$0xff]
    %v545 = vld [vmem:[#allocation7 + $0xf0] sm:$0xff]
    %v546 = vld [vmem:[#allocation7 + $0xf8] sm:$0xff]
    %v547 = vld [vmem:[#allocation7 + $0x100] sm:$0xff]
    %v548 = vld [vmem:[#allocation7 + $0x108] sm:$0xff]
    %v549 = vld [vmem:[#allocation7 + $0x110] sm:$0xff]
    %v550 = vld [vmem:[#allocation7 + $0x118] sm:$0xff]
    %v551 = vld [vmem:[#allocation7 + $0x120] sm:$0xff]
    %v552 = vld [vmem:[#allocation7 + $0x128] sm:$0xff]
    %v553 = vld [vmem:[#allocation7 + $0x130] sm:$0xff]
    %v554 = vld [vmem:[#allocation7 + $0x138] sm:$0xff]
    %v555 = vld [vmem:[#allocation7 + $0x140] sm:$0xff]
    %v556 = vld [vmem:[#allocation7 + $0x148] sm:$0xff]
    %v557 = vld [vmem:[#allocation7 + $0x150] sm:$0xff]
    %v558 = vld [vmem:[#allocation7 + $0x158] sm:$0xff]
    %v559 = vld [vmem:[#allocation7 + $0x160] sm:$0xff]
    %v560 = vld [vmem:[#allocation7 + $0x168] sm:$0xff]
    %v561 = vld [vmem:[#allocation7 + $0x170] sm:$0xff]
    %v562 = vld [vmem:[#allocation7 + $0x178] sm:$0xff]
    %v563 = vld [vmem:[#allocation7 + $0x180] sm:$0xff]
    %v564 = vld [vmem:[#allocation7 + $0x188] sm:$0xff]
    %v565 = vld [vmem:[#allocation7 + $0x190] sm:$0xff]
    %v566 = vld [vmem:[#allocation7 + $0x198] sm:$0xff]
    %v567 = vld [vmem:[#allocation7 + $0x1a0] sm:$0xff]
    %v568 = vld [vmem:[#allocation7 + $0x1a8] sm:$0xff]
    %v569 = vld [vmem:[#allocation7 + $0x1b0] sm:$0xff]
    %v570 = vld [vmem:[#allocation7 + $0x1b8] sm:$0xff]
    %v571 = vld [vmem:[#allocation7 + $0x1c0] sm:$0xff]
    %v572 = vld [vmem:[#allocation7 + $0x1c8] sm:$0xff]
    %v573 = vld [vmem:[#allocation7 + $0x1d0] sm:$0xff]
    %v574 = vld [vmem:[#allocation7 + $0x1d8] sm:$0xff]
    %v575 = vld [vmem:[#allocation7 + $0x1e0] sm:$0xff]
    %v576 = vld [vmem:[#allocation7 + $0x1e8] sm:$0xff]
    %v577 = vld [vmem:[#allocation7 + $0x1f0] sm:$0xff]
    %v578 = vld [vmem:[#allocation7 + $0x1f8] sm:$0xff]
    %v579 = vld [vmem:[#allocation8] sm:$0xf]
    %v581 = vlaneseq
    %v582 = vshrl.u32 %v581, 7
    %v583 = vsub.s32 0, %v582
    %v584 = vrot.slane %v579, %v583
    %v585 = vlaneseq
    %v586 = vshrl.u32 %v585, 7
    %v587 = vsub.s32 1, %v586
    %v588 = vrot.slane %v579, %v587
    %v589 = vlaneseq
    %v590 = vshrl.u32 %v589, 7
    %v591 = vsub.s32 2, %v590
    %v592 = vrot.slane %v579, %v591
    %v593 = vlaneseq
    %v594 = vshrl.u32 %v593, 7
    %v595 = vsub.s32 3, %v594
    %v596 = vrot.slane %v579, %v595
    %v665 = vunpack.c.l.b16 %v515
    %v666 = vunpack.c.h.b16 %v515
    %v667 = vunpack.c.l.b16 %v516
    %v668 = vunpack.c.h.b16 %v516
    %v669 = vunpack.c.l.b16 %v517
    %v670 = vunpack.c.h.b16 %v517
    %v671 = vunpack.c.l.b16 %v518
    %v672 = vunpack.c.h.b16 %v518
    %v673 = vunpack.c.l.b16 %v519
    %v674 = vunpack.c.h.b16 %v519
    %v675 = vunpack.c.l.b16 %v520
    %v676 = vunpack.c.h.b16 %v520
    %v677 = vunpack.c.l.b16 %v521
    %v678 = vunpack.c.h.b16 %v521
    %v679 = vunpack.c.l.b16 %v522
    %v680 = vunpack.c.h.b16 %v522
    %v681 = vunpack.c.l.b16 %v523
    %v682 = vunpack.c.h.b16 %v523
    %v683 = vunpack.c.l.b16 %v524
    %v684 = vunpack.c.h.b16 %v524
    %v685 = vunpack.c.l.b16 %v525
    %v686 = vunpack.c.h.b16 %v525
    %v687 = vunpack.c.l.b16 %v526
    %v688 = vunpack.c.h.b16 %v526
    %v689 = vunpack.c.l.b16 %v527
    %v690 = vunpack.c.h.b16 %v527
    %v691 = vunpack.c.l.b16 %v528
    %v692 = vunpack.c.h.b16 %v528
    %v693 = vunpack.c.l.b16 %v529
    %v694 = vunpack.c.h.b16 %v529
    %v695 = vunpack.c.l.b16 %v530
    %v696 = vunpack.c.h.b16 %v530
    %v697 = vunpack.c.l.b16 %v531
    %v698 = vunpack.c.h.b16 %v531
    %v699 = vunpack.c.l.b16 %v532
    %v700 = vunpack.c.h.b16 %v532
    %v701 = vunpack.c.l.b16 %v533
    %v702 = vunpack.c.h.b16 %v533
    %v703 = vunpack.c.l.b16 %v534
    %v704 = vunpack.c.h.b16 %v534
    %v705 = vunpack.c.l.b16 %v535
    %v706 = vunpack.c.h.b16 %v535
    %v707 = vunpack.c.l.b16 %v536
    %v708 = vunpack.c.h.b16 %v536
    %v709 = vunpack.c.l.b16 %v537
    %v710 = vunpack.c.h.b16 %v537
    %v711 = vunpack.c.l.b16 %v538
    %v712 = vunpack.c.h.b16 %v538
    %v713 = vunpack.c.l.b16 %v539
    %v714 = vunpack.c.h.b16 %v539
    %v715 = vunpack.c.l.b16 %v540
    %v716 = vunpack.c.h.b16 %v540
    %v717 = vunpack.c.l.b16 %v541
    %v718 = vunpack.c.h.b16 %v541
    %v719 = vunpack.c.l.b16 %v542
    %v720 = vunpack.c.h.b16 %v542
    %v721 = vunpack.c.l.b16 %v543
    %v722 = vunpack.c.h.b16 %v543
    %v723 = vunpack.c.l.b16 %v544
    %v724 = vunpack.c.h.b16 %v544
    %v725 = vunpack.c.l.b16 %v545
    %v726 = vunpack.c.h.b16 %v545
    %v727 = vunpack.c.l.b16 %v546
    %v728 = vunpack.c.h.b16 %v546
    %v729 = vunpack.c.l.b16 %v547
    %v730 = vunpack.c.h.b16 %v547
    %v731 = vunpack.c.l.b16 %v548
    %v732 = vunpack.c.h.b16 %v548
    %v733 = vunpack.c.l.b16 %v549
    %v734 = vunpack.c.h.b16 %v549
    %v735 = vunpack.c.l.b16 %v550
    %v736 = vunpack.c.h.b16 %v550
    %v737 = vunpack.c.l.b16 %v551
    %v738 = vunpack.c.h.b16 %v551
    %v739 = vunpack.c.l.b16 %v552
    %v740 = vunpack.c.h.b16 %v552
    %v741 = vunpack.c.l.b16 %v553
    %v742 = vunpack.c.h.b16 %v553
    %v743 = vunpack.c.l.b16 %v554
    %v744 = vunpack.c.h.b16 %v554
    %v745 = vunpack.c.l.b16 %v555
    %v746 = vunpack.c.h.b16 %v555
    %v747 = vunpack.c.l.b16 %v556
    %v748 = vunpack.c.h.b16 %v556
    %v749 = vunpack.c.l.b16 %v557
    %v750 = vunpack.c.h.b16 %v557
    %v751 = vunpack.c.l.b16 %v558
    %v752 = vunpack.c.h.b16 %v558
    %v753 = vunpack.c.l.b16 %v559
    %v754 = vunpack.c.h.b16 %v559
    %v755 = vunpack.c.l.b16 %v560
    %v756 = vunpack.c.h.b16 %v560
    %v757 = vunpack.c.l.b16 %v561
    %v758 = vunpack.c.h.b16 %v561
    %v759 = vunpack.c.l.b16 %v562
    %v760 = vunpack.c.h.b16 %v562
    %v761 = vunpack.c.l.b16 %v563
    %v762 = vunpack.c.h.b16 %v563
    %v763 = vunpack.c.l.b16 %v564
    %v764 = vunpack.c.h.b16 %v564
    %v765 = vunpack.c.l.b16 %v565
    %v766 = vunpack.c.h.b16 %v565
    %v767 = vunpack.c.l.b16 %v566
    %v768 = vunpack.c.h.b16 %v566
    %v769 = vunpack.c.l.b16 %v567
    %v770 = vunpack.c.h.b16 %v567
    %v771 = vunpack.c.l.b16 %v568
    %v772 = vunpack.c.h.b16 %v568
    %v773 = vunpack.c.l.b16 %v569
    %v774 = vunpack.c.h.b16 %v569
    %v775 = vunpack.c.l.b16 %v570
    %v776 = vunpack.c.h.b16 %v570
    %v777 = vunpack.c.l.b16 %v571
    %v778 = vunpack.c.h.b16 %v571
    %v779 = vunpack.c.l.b16 %v572
    %v780 = vunpack.c.h.b16 %v572
    %v781 = vunpack.c.l.b16 %v573
    %v782 = vunpack.c.h.b16 %v573
    %v783 = vunpack.c.l.b16 %v574
    %v784 = vunpack.c.h.b16 %v574
    %v785 = vunpack.c.l.b16 %v575
    %v786 = vunpack.c.h.b16 %v575
    %v787 = vunpack.c.l.b16 %v576
    %v788 = vunpack.c.h.b16 %v576
    %v789 = vunpack.c.l.b16 %v577
    %v790 = vunpack.c.h.b16 %v577
    %v791 = vunpack.c.l.b16 %v578
    %v792 = vunpack.c.h.b16 %v578
    %v793 = vpack.c.b16 %v669, %v665
    %v794 = vpack.c.b16 %v670, %v666
    %v795 = vpack.c.b16 %v671, %v667
    %v796 = vpack.c.b16 %v672, %v668
    %v797 = vpack.c.b16 %v677, %v673
    %v798 = vpack.c.b16 %v678, %v674
    %v799 = vpack.c.b16 %v679, %v675
    %v800 = vpack.c.b16 %v680, %v676
    %v801 = vpack.c.b16 %v685, %v681
    %v802 = vpack.c.b16 %v686, %v682
    %v803 = vpack.c.b16 %v687, %v683
    %v804 = vpack.c.b16 %v688, %v684
    %v805 = vpack.c.b16 %v693, %v689
    %v806 = vpack.c.b16 %v694, %v690
    %v807 = vpack.c.b16 %v695, %v691
    %v808 = vpack.c.b16 %v696, %v692
    %v809 = vpack.c.b16 %v701, %v697
    %v810 = vpack.c.b16 %v702, %v698
    %v811 = vpack.c.b16 %v703, %v699
    %v812 = vpack.c.b16 %v704, %v700
    %v813 = vpack.c.b16 %v709, %v705
    %v814 = vpack.c.b16 %v710, %v706
    %v815 = vpack.c.b16 %v711, %v707
    %v816 = vpack.c.b16 %v712, %v708
    %v817 = vpack.c.b16 %v717, %v713
    %v818 = vpack.c.b16 %v718, %v714
    %v819 = vpack.c.b16 %v719, %v715
    %v820 = vpack.c.b16 %v720, %v716
    %v821 = vpack.c.b16 %v725, %v721
    %v822 = vpack.c.b16 %v726, %v722
    %v823 = vpack.c.b16 %v727, %v723
    %v824 = vpack.c.b16 %v728, %v724
    %v825 = vpack.c.b16 %v733, %v729
    %v826 = vpack.c.b16 %v734, %v730
    %v827 = vpack.c.b16 %v735, %v731
    %v828 = vpack.c.b16 %v736, %v732
    %v829 = vpack.c.b16 %v741, %v737
    %v830 = vpack.c.b16 %v742, %v738
    %v831 = vpack.c.b16 %v743, %v739
    %v832 = vpack.c.b16 %v744, %v740
    %v833 = vpack.c.b16 %v749, %v745
    %v834 = vpack.c.b16 %v750, %v746
    %v835 = vpack.c.b16 %v751, %v747
    %v836 = vpack.c.b16 %v752, %v748
    %v837 = vpack.c.b16 %v757, %v753
    %v838 = vpack.c.b16 %v758, %v754
    %v839 = vpack.c.b16 %v759, %v755
    %v840 = vpack.c.b16 %v760, %v756
    %v841 = vpack.c.b16 %v765, %v761
    %v842 = vpack.c.b16 %v766, %v762
    %v843 = vpack.c.b16 %v767, %v763
    %v844 = vpack.c.b16 %v768, %v764
    %v845 = vpack.c.b16 %v773, %v769
    %v846 = vpack.c.b16 %v774, %v770
    %v847 = vpack.c.b16 %v775, %v771
    %v848 = vpack.c.b16 %v776, %v772
    %v849 = vpack.c.b16 %v781, %v777
    %v850 = vpack.c.b16 %v782, %v778
    %v851 = vpack.c.b16 %v783, %v779
    %v852 = vpack.c.b16 %v784, %v780
    %v853 = vpack.c.b16 %v789, %v785
    %v854 = vpack.c.b16 %v790, %v786
    %v855 = vpack.c.b16 %v791, %v787
    %v856 = vpack.c.b16 %v792, %v788
    %921 = vmatprep.subr.bf16.mxu0 %v822
    %922 = vmatpush1.bf16.msra.mxu0 %v821
    %923 = vmatprep.subr.bf16.mxu0 %v818
    %924 = vmatpush1.bf16.msra.mxu0 %v817
    %925 = vmatprep.subr.bf16.mxu0 %v814
    %926 = vmatpush1.bf16.msra.mxu0 %v813
    %927 = vmatprep.subr.bf16.mxu0 %v810
    %928 = vmatpush1.bf16.msra.mxu0 %v809
    %929 = vmatprep.subr.bf16.mxu0 %v806
    %930 = vmatpush1.bf16.msra.mxu0 %v805
    %931 = vmatprep.subr.bf16.mxu0 %v802
    %932 = vmatpush1.bf16.msra.mxu0 %v801
    %933 = vmatprep.subr.bf16.mxu0 %v798
    %934 = vmatpush1.bf16.msra.mxu0 %v797
    %935 = vmatprep.subr.bf16.mxu0 %v794
    %936 = vmatpush1.bf16.msra.mxu0 %v793
    %937 = vmatprep.subr.bf16.mxu0 %v854
    %938 = vmatpush2.bf16.msra.mxu0 %v853
    %939 = vmatprep.subr.bf16.mxu0 %v850
    %940 = vmatpush2.bf16.msra.mxu0 %v849
    %941 = vmatprep.subr.bf16.mxu0 %v846
    %942 = vmatpush2.bf16.msra.mxu0 %v845
    %943 = vmatprep.subr.bf16.mxu0 %v842
    %944 = vmatpush2.bf16.msra.mxu0 %v841
    %945 = vmatprep.subr.bf16.mxu0 %v838
    %946 = vmatpush2.bf16.msra.mxu0 %v837
    %947 = vmatprep.subr.bf16.mxu0 %v834
    %948 = vmatpush2.bf16.msra.mxu0 %v833
    %949 = vmatprep.subr.bf16.mxu0 %v830
    %950 = vmatpush2.bf16.msra.mxu0 %v829
    %951 = vmatprep.subr.bf16.mxu0 %v826
    %952 = vmatpush2.bf16.msra.mxu0 %v825
    %953 = vmatprep.mubr.bf16.mxu0 %v514
    %954 = vmatmul.mubr.bf16.gmra.mxu0 %v513
    %v955 = vpop.f32.mrf.mxu0
    %v956 = vadd.f32 %v584, %v955
    %v957 = vpop.f32.mrf.mxu0
    %v958 = vadd.f32 %v588, %v957
    %v959 = vpop.f32.mrf.mxu0
    %v960 = vpop.f32.mrf.mxu0
    %961 = vdwg.mxu0
    %962 = vmatprep.subr.bf16.mxu0 %v824
    %963 = vmatpush1.bf16.msra.mxu0 %v823
    %964 = vmatprep.subr.bf16.mxu0 %v820
    %965 = vmatpush1.bf16.msra.mxu0 %v819
    %966 = vmatprep.subr.bf16.mxu0 %v816
    %967 = vmatpush1.bf16.msra.mxu0 %v815
    %968 = vmatprep.subr.bf16.mxu0 %v812
    %969 = vmatpush1.bf16.msra.mxu0 %v811
    %970 = vmatprep.subr.bf16.mxu0 %v808
    %971 = vmatpush1.bf16.msra.mxu0 %v807
    %972 = vmatprep.subr.bf16.mxu0 %v804
    %973 = vmatpush1.bf16.msra.mxu0 %v803
    %974 = vmatprep.subr.bf16.mxu0 %v800
    %975 = vmatpush1.bf16.msra.mxu0 %v799
    %976 = vmatprep.subr.bf16.mxu0 %v796
    %977 = vmatpush1.bf16.msra.mxu0 %v795
    %978 = vmatprep.subr.bf16.mxu0 %v856
    %979 = vmatpush2.bf16.msra.mxu0 %v855
    %980 = vmatprep.subr.bf16.mxu0 %v852
    %981 = vmatpush2.bf16.msra.mxu0 %v851
    %982 = vmatprep.subr.bf16.mxu0 %v848
    %983 = vmatpush2.bf16.msra.mxu0 %v847
    %984 = vmatprep.subr.bf16.mxu0 %v844
    %985 = vmatpush2.bf16.msra.mxu0 %v843
    %986 = vmatprep.subr.bf16.mxu0 %v840
    %987 = vmatpush2.bf16.msra.mxu0 %v839
    %988 = vmatprep.subr.bf16.mxu0 %v836
    %989 = vmatpush2.bf16.msra.mxu0 %v835
    %990 = vmatprep.subr.bf16.mxu0 %v832
    %991 = vmatpush2.bf16.msra.mxu0 %v831
    %992 = vmatprep.subr.bf16.mxu0 %v828
    %993 = vmatpush2.bf16.msra.mxu0 %v827
    %994 = vmatprep.mubr.bf16.mxu0 %v514
    %995 = vmatmul.mubr.bf16.gmra.mxu0 %v513
    %v996 = vpop.f32.mrf.mxu0
    %v997 = vadd.f32 %v592, %v996
    %v998 = vpop.f32.mrf.mxu0
    %v999 = vadd.f32 %v596, %v998
    %v1000 = vpop.f32.mrf.mxu0
    %v1001 = vpop.f32.mrf.mxu0
    %1002 = vdwg.mxu0
    %vm1003 = vcmp.gt.f32.partialorder %v956, 0.0
    %vm1004 = vcmp.gt.f32.partialorder %v958, 0.0
    %vm1005 = vcmp.gt.f32.partialorder %v997, 0.0
    %vm1006 = vcmp.gt.f32.partialorder %v999, 0.0
    %v1007 = vmul.f32 %v956, 0.2
    %v1008 = vmul.f32 %v958, 0.2
    %v1009 = vmul.f32 %v997, 0.2
    %v1010 = vmul.f32 %v999, 0.2
    %v1011 = vsel %vm1003, %v956, %v1007
    %v1012 = vsel %vm1004, %v958, %v1008
    %v1013 = vsel %vm1005, %v997, %v1009
    %v1014 = vsel %vm1006, %v999, %v1010
    %v1015 = vpack.c.bf16 %v1011, %v1011
    %v1016 = vpack.c.bf16 %v1012, %v1012
    %v1017 = vpack.c.bf16 %v1013, %v1013
    %v1018 = vpack.c.bf16 %v1014, %v1014
    %v1019 = vld [vmem:[#allocation10] sm:$0xff]
    %v1020 = vld [vmem:[#allocation10 + $0x8] sm:$0xff]
    %v1021 = vld [vmem:[#allocation10 + $0x10] sm:$0xff]
    %v1022 = vld [vmem:[#allocation10 + $0x18] sm:$0xff]
    %v1023 = vld [vmem:[#allocation10 + $0x20] sm:$0xff]
    %v1024 = vld [vmem:[#allocation10 + $0x28] sm:$0xff]
    %v1025 = vld [vmem:[#allocation10 + $0x30] sm:$0xff]
    %v1026 = vld [vmem:[#allocation10 + $0x38] sm:$0xff]
    %v1027 = vld [vmem:[#allocation10 + $0x40] sm:$0xff]
    %v1028 = vld [vmem:[#allocation10 + $0x48] sm:$0xff]
    %v1029 = vld [vmem:[#allocation10 + $0x50] sm:$0xff]
    %v1030 = vld [vmem:[#allocation10 + $0x58] sm:$0xff]
    %v1031 = vld [vmem:[#allocation10 + $0x60] sm:$0xff]
    %v1032 = vld [vmem:[#allocation10 + $0x68] sm:$0xff]
    %v1033 = vld [vmem:[#allocation10 + $0x70] sm:$0xff]
    %v1034 = vld [vmem:[#allocation10 + $0x78] sm:$0xff]
    %v1035 = vld [vmem:[#allocation10 + $0x80] sm:$0xff]
    %v1036 = vld [vmem:[#allocation10 + $0x88] sm:$0xff]
    %v1037 = vld [vmem:[#allocation10 + $0x90] sm:$0xff]
    %v1038 = vld [vmem:[#allocation10 + $0x98] sm:$0xff]
    %v1039 = vld [vmem:[#allocation10 + $0xa0] sm:$0xff]
    %v1040 = vld [vmem:[#allocation10 + $0xa8] sm:$0xff]
    %v1041 = vld [vmem:[#allocation10 + $0xb0] sm:$0xff]
    %v1042 = vld [vmem:[#allocation10 + $0xb8] sm:$0xff]
    %v1043 = vld [vmem:[#allocation10 + $0xc0] sm:$0xff]
    %v1044 = vld [vmem:[#allocation10 + $0xc8] sm:$0xff]
    %v1045 = vld [vmem:[#allocation10 + $0xd0] sm:$0xff]
    %v1046 = vld [vmem:[#allocation10 + $0xd8] sm:$0xff]
    %v1047 = vld [vmem:[#allocation10 + $0xe0] sm:$0xff]
    %v1048 = vld [vmem:[#allocation10 + $0xe8] sm:$0xff]
    %v1049 = vld [vmem:[#allocation10 + $0xf0] sm:$0xff]
    %v1050 = vld [vmem:[#allocation10 + $0xf8] sm:$0xff]
    %v1051 = vld [vmem:[#allocation10 + $0x100] sm:$0xff]
    %v1052 = vld [vmem:[#allocation10 + $0x108] sm:$0xff]
    %v1053 = vld [vmem:[#allocation10 + $0x110] sm:$0xff]
    %v1054 = vld [vmem:[#allocation10 + $0x118] sm:$0xff]
    %v1055 = vld [vmem:[#allocation10 + $0x120] sm:$0xff]
    %v1056 = vld [vmem:[#allocation10 + $0x128] sm:$0xff]
    %v1057 = vld [vmem:[#allocation10 + $0x130] sm:$0xff]
    %v1058 = vld [vmem:[#allocation10 + $0x138] sm:$0xff]
    %v1059 = vld [vmem:[#allocation10 + $0x140] sm:$0xff]
    %v1060 = vld [vmem:[#allocation10 + $0x148] sm:$0xff]
    %v1061 = vld [vmem:[#allocation10 + $0x150] sm:$0xff]
    %v1062 = vld [vmem:[#allocation10 + $0x158] sm:$0xff]
    %v1063 = vld [vmem:[#allocation10 + $0x160] sm:$0xff]
    %v1064 = vld [vmem:[#allocation10 + $0x168] sm:$0xff]
    %v1065 = vld [vmem:[#allocation10 + $0x170] sm:$0xff]
    %v1066 = vld [vmem:[#allocation10 + $0x178] sm:$0xff]
    %v1067 = vld [vmem:[#allocation10 + $0x180] sm:$0xff]
    %v1068 = vld [vmem:[#allocation10 + $0x188] sm:$0xff]
    %v1069 = vld [vmem:[#allocation10 + $0x190] sm:$0xff]
    %v1070 = vld [vmem:[#allocation10 + $0x198] sm:$0xff]
    %v1071 = vld [vmem:[#allocation10 + $0x1a0] sm:$0xff]
    %v1072 = vld [vmem:[#allocation10 + $0x1a8] sm:$0xff]
    %v1073 = vld [vmem:[#allocation10 + $0x1b0] sm:$0xff]
    %v1074 = vld [vmem:[#allocation10 + $0x1b8] sm:$0xff]
    %v1075 = vld [vmem:[#allocation10 + $0x1c0] sm:$0xff]
    %v1076 = vld [vmem:[#allocation10 + $0x1c8] sm:$0xff]
    %v1077 = vld [vmem:[#allocation10 + $0x1d0] sm:$0xff]
    %v1078 = vld [vmem:[#allocation10 + $0x1d8] sm:$0xff]
    %v1079 = vld [vmem:[#allocation10 + $0x1e0] sm:$0xff]
    %v1080 = vld [vmem:[#allocation10 + $0x1e8] sm:$0xff]
    %v1081 = vld [vmem:[#allocation10 + $0x1f0] sm:$0xff]
    %v1082 = vld [vmem:[#allocation10 + $0x1f8] sm:$0xff]
    %v1083 = vld [vmem:[#allocation10 + $0x200] sm:$0xff]
    %v1084 = vld [vmem:[#allocation10 + $0x208] sm:$0xff]
    %v1085 = vld [vmem:[#allocation10 + $0x210] sm:$0xff]
    %v1086 = vld [vmem:[#allocation10 + $0x218] sm:$0xff]
    %v1087 = vld [vmem:[#allocation10 + $0x220] sm:$0xff]
    %v1088 = vld [vmem:[#allocation10 + $0x228] sm:$0xff]
    %v1089 = vld [vmem:[#allocation10 + $0x230] sm:$0xff]
    %v1090 = vld [vmem:[#allocation10 + $0x238] sm:$0xff]
    %v1091 = vld [vmem:[#allocation10 + $0x240] sm:$0xff]
    %v1092 = vld [vmem:[#allocation10 + $0x248] sm:$0xff]
    %v1093 = vld [vmem:[#allocation10 + $0x250] sm:$0xff]
    %v1094 = vld [vmem:[#allocation10 + $0x258] sm:$0xff]
    %v1095 = vld [vmem:[#allocation10 + $0x260] sm:$0xff]
    %v1096 = vld [vmem:[#allocation10 + $0x268] sm:$0xff]
    %v1097 = vld [vmem:[#allocation10 + $0x270] sm:$0xff]
    %v1098 = vld [vmem:[#allocation10 + $0x278] sm:$0xff]
    %v1099 = vld [vmem:[#allocation10 + $0x280] sm:$0xff]
    %v1100 = vld [vmem:[#allocation10 + $0x288] sm:$0xff]
    %v1101 = vld [vmem:[#allocation10 + $0x290] sm:$0xff]
    %v1102 = vld [vmem:[#allocation10 + $0x298] sm:$0xff]
    %v1103 = vld [vmem:[#allocation10 + $0x2a0] sm:$0xff]
    %v1104 = vld [vmem:[#allocation10 + $0x2a8] sm:$0xff]
    %v1105 = vld [vmem:[#allocation10 + $0x2b0] sm:$0xff]
    %v1106 = vld [vmem:[#allocation10 + $0x2b8] sm:$0xff]
    %v1107 = vld [vmem:[#allocation10 + $0x2c0] sm:$0xff]
    %v1108 = vld [vmem:[#allocation10 + $0x2c8] sm:$0xff]
    %v1109 = vld [vmem:[#allocation10 + $0x2d0] sm:$0xff]
    %v1110 = vld [vmem:[#allocation10 + $0x2d8] sm:$0xff]
    %v1111 = vld [vmem:[#allocation10 + $0x2e0] sm:$0xff]
    %v1112 = vld [vmem:[#allocation10 + $0x2e8] sm:$0xff]
    %v1113 = vld [vmem:[#allocation10 + $0x2f0] sm:$0xff]
    %v1114 = vld [vmem:[#allocation10 + $0x2f8] sm:$0xff]
    %v1115 = vld [vmem:[#allocation10 + $0x300] sm:$0xff]
    %v1116 = vld [vmem:[#allocation10 + $0x308] sm:$0xff]
    %v1117 = vld [vmem:[#allocation10 + $0x310] sm:$0xff]
    %v1118 = vld [vmem:[#allocation10 + $0x318] sm:$0xff]
    %v1119 = vld [vmem:[#allocation10 + $0x320] sm:$0xff]
    %v1120 = vld [vmem:[#allocation10 + $0x328] sm:$0xff]
    %v1121 = vld [vmem:[#allocation10 + $0x330] sm:$0xff]
    %v1122 = vld [vmem:[#allocation10 + $0x338] sm:$0xff]
    %v1123 = vld [vmem:[#allocation10 + $0x340] sm:$0xff]
    %v1124 = vld [vmem:[#allocation10 + $0x348] sm:$0xff]
    %v1125 = vld [vmem:[#allocation10 + $0x350] sm:$0xff]
    %v1126 = vld [vmem:[#allocation10 + $0x358] sm:$0xff]
    %v1127 = vld [vmem:[#allocation10 + $0x360] sm:$0xff]
    %v1128 = vld [vmem:[#allocation10 + $0x368] sm:$0xff]
    %v1129 = vld [vmem:[#allocation10 + $0x370] sm:$0xff]
    %v1130 = vld [vmem:[#allocation10 + $0x378] sm:$0xff]
    %v1131 = vld [vmem:[#allocation10 + $0x380] sm:$0xff]
    %v1132 = vld [vmem:[#allocation10 + $0x388] sm:$0xff]
    %v1133 = vld [vmem:[#allocation10 + $0x390] sm:$0xff]
    %v1134 = vld [vmem:[#allocation10 + $0x398] sm:$0xff]
    %v1135 = vld [vmem:[#allocation10 + $0x3a0] sm:$0xff]
    %v1136 = vld [vmem:[#allocation10 + $0x3a8] sm:$0xff]
    %v1137 = vld [vmem:[#allocation10 + $0x3b0] sm:$0xff]
    %v1138 = vld [vmem:[#allocation10 + $0x3b8] sm:$0xff]
    %v1139 = vld [vmem:[#allocation10 + $0x3c0] sm:$0xff]
    %v1140 = vld [vmem:[#allocation10 + $0x3c8] sm:$0xff]
    %v1141 = vld [vmem:[#allocation10 + $0x3d0] sm:$0xff]
    %v1142 = vld [vmem:[#allocation10 + $0x3d8] sm:$0xff]
    %v1143 = vld [vmem:[#allocation10 + $0x3e0] sm:$0xff]
    %v1144 = vld [vmem:[#allocation10 + $0x3e8] sm:$0xff]
    %v1145 = vld [vmem:[#allocation10 + $0x3f0] sm:$0xff]
    %v1146 = vld [vmem:[#allocation10 + $0x3f8] sm:$0xff]
    %v1147 = vld [vmem:[#allocation10 + $0x400] sm:$0xff]
    %v1148 = vld [vmem:[#allocation10 + $0x408] sm:$0xff]
    %v1149 = vld [vmem:[#allocation10 + $0x410] sm:$0xff]
    %v1150 = vld [vmem:[#allocation10 + $0x418] sm:$0xff]
    %v1151 = vld [vmem:[#allocation10 + $0x420] sm:$0xff]
    %v1152 = vld [vmem:[#allocation10 + $0x428] sm:$0xff]
    %v1153 = vld [vmem:[#allocation10 + $0x430] sm:$0xff]
    %v1154 = vld [vmem:[#allocation10 + $0x438] sm:$0xff]
    %v1155 = vld [vmem:[#allocation10 + $0x440] sm:$0xff]
    %v1156 = vld [vmem:[#allocation10 + $0x448] sm:$0xff]
    %v1157 = vld [vmem:[#allocation10 + $0x450] sm:$0xff]
    %v1158 = vld [vmem:[#allocation10 + $0x458] sm:$0xff]
    %v1159 = vld [vmem:[#allocation10 + $0x460] sm:$0xff]
    %v1160 = vld [vmem:[#allocation10 + $0x468] sm:$0xff]
    %v1161 = vld [vmem:[#allocation10 + $0x470] sm:$0xff]
    %v1162 = vld [vmem:[#allocation10 + $0x478] sm:$0xff]
    %v1163 = vld [vmem:[#allocation10 + $0x480] sm:$0xff]
    %v1164 = vld [vmem:[#allocation10 + $0x488] sm:$0xff]
    %v1165 = vld [vmem:[#allocation10 + $0x490] sm:$0xff]
    %v1166 = vld [vmem:[#allocation10 + $0x498] sm:$0xff]
    %v1167 = vld [vmem:[#allocation10 + $0x4a0] sm:$0xff]
    %v1168 = vld [vmem:[#allocation10 + $0x4a8] sm:$0xff]
    %v1169 = vld [vmem:[#allocation10 + $0x4b0] sm:$0xff]
    %v1170 = vld [vmem:[#allocation10 + $0x4b8] sm:$0xff]
    %v1171 = vld [vmem:[#allocation10 + $0x4c0] sm:$0xff]
    %v1172 = vld [vmem:[#allocation10 + $0x4c8] sm:$0xff]
    %v1173 = vld [vmem:[#allocation10 + $0x4d0] sm:$0xff]
    %v1174 = vld [vmem:[#allocation10 + $0x4d8] sm:$0xff]
    %v1175 = vld [vmem:[#allocation10 + $0x4e0] sm:$0xff]
    %v1176 = vld [vmem:[#allocation10 + $0x4e8] sm:$0xff]
    %v1177 = vld [vmem:[#allocation10 + $0x4f0] sm:$0xff]
    %v1178 = vld [vmem:[#allocation10 + $0x4f8] sm:$0xff]
    %v1179 = vld [vmem:[#allocation10 + $0x500] sm:$0xff]
    %v1180 = vld [vmem:[#allocation10 + $0x508] sm:$0xff]
    %v1181 = vld [vmem:[#allocation10 + $0x510] sm:$0xff]
    %v1182 = vld [vmem:[#allocation10 + $0x518] sm:$0xff]
    %v1183 = vld [vmem:[#allocation10 + $0x520] sm:$0xff]
    %v1184 = vld [vmem:[#allocation10 + $0x528] sm:$0xff]
    %v1185 = vld [vmem:[#allocation10 + $0x530] sm:$0xff]
    %v1186 = vld [vmem:[#allocation10 + $0x538] sm:$0xff]
    %v1187 = vld [vmem:[#allocation10 + $0x540] sm:$0xff]
    %v1188 = vld [vmem:[#allocation10 + $0x548] sm:$0xff]
    %v1189 = vld [vmem:[#allocation10 + $0x550] sm:$0xff]
    %v1190 = vld [vmem:[#allocation10 + $0x558] sm:$0xff]
    %v1191 = vld [vmem:[#allocation10 + $0x560] sm:$0xff]
    %v1192 = vld [vmem:[#allocation10 + $0x568] sm:$0xff]
    %v1193 = vld [vmem:[#allocation10 + $0x570] sm:$0xff]
    %v1194 = vld [vmem:[#allocation10 + $0x578] sm:$0xff]
    %v1195 = vld [vmem:[#allocation10 + $0x580] sm:$0xff]
    %v1196 = vld [vmem:[#allocation10 + $0x588] sm:$0xff]
    %v1197 = vld [vmem:[#allocation10 + $0x590] sm:$0xff]
    %v1198 = vld [vmem:[#allocation10 + $0x598] sm:$0xff]
    %v1199 = vld [vmem:[#allocation10 + $0x5a0] sm:$0xff]
    %v1200 = vld [vmem:[#allocation10 + $0x5a8] sm:$0xff]
    %v1201 = vld [vmem:[#allocation10 + $0x5b0] sm:$0xff]
    %v1202 = vld [vmem:[#allocation10 + $0x5b8] sm:$0xff]
    %v1203 = vld [vmem:[#allocation10 + $0x5c0] sm:$0xff]
    %v1204 = vld [vmem:[#allocation10 + $0x5c8] sm:$0xff]
    %v1205 = vld [vmem:[#allocation10 + $0x5d0] sm:$0xff]
    %v1206 = vld [vmem:[#allocation10 + $0x5d8] sm:$0xff]
    %v1207 = vld [vmem:[#allocation10 + $0x5e0] sm:$0xff]
    %v1208 = vld [vmem:[#allocation10 + $0x5e8] sm:$0xff]
    %v1209 = vld [vmem:[#allocation10 + $0x5f0] sm:$0xff]
    %v1210 = vld [vmem:[#allocation10 + $0x5f8] sm:$0xff]
    %v1211 = vld [vmem:[#allocation10 + $0x600] sm:$0xff]
    %v1212 = vld [vmem:[#allocation10 + $0x608] sm:$0xff]
    %v1213 = vld [vmem:[#allocation10 + $0x610] sm:$0xff]
    %v1214 = vld [vmem:[#allocation10 + $0x618] sm:$0xff]
    %v1215 = vld [vmem:[#allocation10 + $0x620] sm:$0xff]
    %v1216 = vld [vmem:[#allocation10 + $0x628] sm:$0xff]
    %v1217 = vld [vmem:[#allocation10 + $0x630] sm:$0xff]
    %v1218 = vld [vmem:[#allocation10 + $0x638] sm:$0xff]
    %v1219 = vld [vmem:[#allocation10 + $0x640] sm:$0xff]
    %v1220 = vld [vmem:[#allocation10 + $0x648] sm:$0xff]
    %v1221 = vld [vmem:[#allocation10 + $0x650] sm:$0xff]
    %v1222 = vld [vmem:[#allocation10 + $0x658] sm:$0xff]
    %v1223 = vld [vmem:[#allocation10 + $0x660] sm:$0xff]
    %v1224 = vld [vmem:[#allocation10 + $0x668] sm:$0xff]
    %v1225 = vld [vmem:[#allocation10 + $0x670] sm:$0xff]
    %v1226 = vld [vmem:[#allocation10 + $0x678] sm:$0xff]
    %v1227 = vld [vmem:[#allocation10 + $0x680] sm:$0xff]
    %v1228 = vld [vmem:[#allocation10 + $0x688] sm:$0xff]
    %v1229 = vld [vmem:[#allocation10 + $0x690] sm:$0xff]
    %v1230 = vld [vmem:[#allocation10 + $0x698] sm:$0xff]
    %v1231 = vld [vmem:[#allocation10 + $0x6a0] sm:$0xff]
    %v1232 = vld [vmem:[#allocation10 + $0x6a8] sm:$0xff]
    %v1233 = vld [vmem:[#allocation10 + $0x6b0] sm:$0xff]
    %v1234 = vld [vmem:[#allocation10 + $0x6b8] sm:$0xff]
    %v1235 = vld [vmem:[#allocation10 + $0x6c0] sm:$0xff]
    %v1236 = vld [vmem:[#allocation10 + $0x6c8] sm:$0xff]
    %v1237 = vld [vmem:[#allocation10 + $0x6d0] sm:$0xff]
    %v1238 = vld [vmem:[#allocation10 + $0x6d8] sm:$0xff]
    %v1239 = vld [vmem:[#allocation10 + $0x6e0] sm:$0xff]
    %v1240 = vld [vmem:[#allocation10 + $0x6e8] sm:$0xff]
    %v1241 = vld [vmem:[#allocation10 + $0x6f0] sm:$0xff]
    %v1242 = vld [vmem:[#allocation10 + $0x6f8] sm:$0xff]
    %v1243 = vld [vmem:[#allocation10 + $0x700] sm:$0xff]
    %v1244 = vld [vmem:[#allocation10 + $0x708] sm:$0xff]
    %v1245 = vld [vmem:[#allocation10 + $0x710] sm:$0xff]
    %v1246 = vld [vmem:[#allocation10 + $0x718] sm:$0xff]
    %v1247 = vld [vmem:[#allocation10 + $0x720] sm:$0xff]
    %v1248 = vld [vmem:[#allocation10 + $0x728] sm:$0xff]
    %v1249 = vld [vmem:[#allocation10 + $0x730] sm:$0xff]
    %v1250 = vld [vmem:[#allocation10 + $0x738] sm:$0xff]
    %v1251 = vld [vmem:[#allocation10 + $0x740] sm:$0xff]
    %v1252 = vld [vmem:[#allocation10 + $0x748] sm:$0xff]
    %v1253 = vld [vmem:[#allocation10 + $0x750] sm:$0xff]
    %v1254 = vld [vmem:[#allocation10 + $0x758] sm:$0xff]
    %v1255 = vld [vmem:[#allocation10 + $0x760] sm:$0xff]
    %v1256 = vld [vmem:[#allocation10 + $0x768] sm:$0xff]
    %v1257 = vld [vmem:[#allocation10 + $0x770] sm:$0xff]
    %v1258 = vld [vmem:[#allocation10 + $0x778] sm:$0xff]
    %v1259 = vld [vmem:[#allocation10 + $0x780] sm:$0xff]
    %v1260 = vld [vmem:[#allocation10 + $0x788] sm:$0xff]
    %v1261 = vld [vmem:[#allocation10 + $0x790] sm:$0xff]
    %v1262 = vld [vmem:[#allocation10 + $0x798] sm:$0xff]
    %v1263 = vld [vmem:[#allocation10 + $0x7a0] sm:$0xff]
    %v1264 = vld [vmem:[#allocation10 + $0x7a8] sm:$0xff]
    %v1265 = vld [vmem:[#allocation10 + $0x7b0] sm:$0xff]
    %v1266 = vld [vmem:[#allocation10 + $0x7b8] sm:$0xff]
    %v1267 = vld [vmem:[#allocation10 + $0x7c0] sm:$0xff]
    %v1268 = vld [vmem:[#allocation10 + $0x7c8] sm:$0xff]
    %v1269 = vld [vmem:[#allocation10 + $0x7d0] sm:$0xff]
    %v1270 = vld [vmem:[#allocation10 + $0x7d8] sm:$0xff]
    %v1271 = vld [vmem:[#allocation10 + $0x7e0] sm:$0xff]
    %v1272 = vld [vmem:[#allocation10 + $0x7e8] sm:$0xff]
    %v1273 = vld [vmem:[#allocation10 + $0x7f0] sm:$0xff]
    %v1274 = vld [vmem:[#allocation10 + $0x7f8] sm:$0xff]
    %v1275 = vld [vmem:[%s6] sm:$0xff]
    %v1277 = vlaneseq
    %v1278 = vshrl.u32 %v1277, 7
    %v1279 = vsub.s32 0, %v1278
    %v1280 = vrot.slane %v1275, %v1279
    %v1281 = vlaneseq
    %v1282 = vshrl.u32 %v1281, 7
    %v1283 = vsub.s32 1, %v1282
    %v1284 = vrot.slane %v1275, %v1283
    %v1285 = vlaneseq
    %v1286 = vshrl.u32 %v1285, 7
    %v1287 = vsub.s32 2, %v1286
    %v1288 = vrot.slane %v1275, %v1287
    %v1289 = vlaneseq
    %v1290 = vshrl.u32 %v1289, 7
    %v1291 = vsub.s32 3, %v1290
    %v1292 = vrot.slane %v1275, %v1291
    %v1293 = vlaneseq
    %v1294 = vshrl.u32 %v1293, 7
    %v1295 = vsub.s32 4, %v1294
    %v1296 = vrot.slane %v1275, %v1295
    %v1297 = vlaneseq
    %v1298 = vshrl.u32 %v1297, 7
    %v1299 = vsub.s32 5, %v1298
    %v1300 = vrot.slane %v1275, %v1299
    %v1301 = vlaneseq
    %v1302 = vshrl.u32 %v1301, 7
    %v1303 = vsub.s32 6, %v1302
    %v1304 = vrot.slane %v1275, %v1303
    %v1305 = vlaneseq
    %v1306 = vshrl.u32 %v1305, 7
    %v1307 = vsub.s32 7, %v1306
    %v1308 = vrot.slane %v1275, %v1307
    %v1573 = vunpack.c.l.b16 %v1019
    %v1574 = vunpack.c.h.b16 %v1019
    %v1575 = vunpack.c.l.b16 %v1020
    %v1576 = vunpack.c.h.b16 %v1020
    %v1577 = vunpack.c.l.b16 %v1021
    %v1578 = vunpack.c.h.b16 %v1021
    %v1579 = vunpack.c.l.b16 %v1022
    %v1580 = vunpack.c.h.b16 %v1022
    %v1581 = vunpack.c.l.b16 %v1023
    %v1582 = vunpack.c.h.b16 %v1023
    %v1583 = vunpack.c.l.b16 %v1024
    %v1584 = vunpack.c.h.b16 %v1024
    %v1585 = vunpack.c.l.b16 %v1025
    %v1586 = vunpack.c.h.b16 %v1025
    %v1587 = vunpack.c.l.b16 %v1026
    %v1588 = vunpack.c.h.b16 %v1026
    %v1589 = vunpack.c.l.b16 %v1027
    %v1590 = vunpack.c.h.b16 %v1027
    %v1591 = vunpack.c.l.b16 %v1028
    %v1592 = vunpack.c.h.b16 %v1028
    %v1593 = vunpack.c.l.b16 %v1029
    %v1594 = vunpack.c.h.b16 %v1029
    %v1595 = vunpack.c.l.b16 %v1030
    %v1596 = vunpack.c.h.b16 %v1030
    %v1597 = vunpack.c.l.b16 %v1031
    %v1598 = vunpack.c.h.b16 %v1031
    %v1599 = vunpack.c.l.b16 %v1032
    %v1600 = vunpack.c.h.b16 %v1032
    %v1601 = vunpack.c.l.b16 %v1033
    %v1602 = vunpack.c.h.b16 %v1033
    %v1603 = vunpack.c.l.b16 %v1034
    %v1604 = vunpack.c.h.b16 %v1034
    %v1605 = vunpack.c.l.b16 %v1035
    %v1606 = vunpack.c.h.b16 %v1035
    %v1607 = vunpack.c.l.b16 %v1036
    %v1608 = vunpack.c.h.b16 %v1036
    %v1609 = vunpack.c.l.b16 %v1037
    %v1610 = vunpack.c.h.b16 %v1037
    %v1611 = vunpack.c.l.b16 %v1038
    %v1612 = vunpack.c.h.b16 %v1038
    %v1613 = vunpack.c.l.b16 %v1039
    %v1614 = vunpack.c.h.b16 %v1039
    %v1615 = vunpack.c.l.b16 %v1040
    %v1616 = vunpack.c.h.b16 %v1040
    %v1617 = vunpack.c.l.b16 %v1041
    %v1618 = vunpack.c.h.b16 %v1041
    %v1619 = vunpack.c.l.b16 %v1042
    %v1620 = vunpack.c.h.b16 %v1042
    %v1621 = vunpack.c.l.b16 %v1043
    %v1622 = vunpack.c.h.b16 %v1043
    %v1623 = vunpack.c.l.b16 %v1044
    %v1624 = vunpack.c.h.b16 %v1044
    %v1625 = vunpack.c.l.b16 %v1045
    %v1626 = vunpack.c.h.b16 %v1045
    %v1627 = vunpack.c.l.b16 %v1046
    %v1628 = vunpack.c.h.b16 %v1046
    %v1629 = vunpack.c.l.b16 %v1047
    %v1630 = vunpack.c.h.b16 %v1047
    %v1631 = vunpack.c.l.b16 %v1048
    %v1632 = vunpack.c.h.b16 %v1048
    %v1633 = vunpack.c.l.b16 %v1049
    %v1634 = vunpack.c.h.b16 %v1049
    %v1635 = vunpack.c.l.b16 %v1050
    %v1636 = vunpack.c.h.b16 %v1050
    %v1637 = vunpack.c.l.b16 %v1051
    %v1638 = vunpack.c.h.b16 %v1051
    %v1639 = vunpack.c.l.b16 %v1052
    %v1640 = vunpack.c.h.b16 %v1052
    %v1641 = vunpack.c.l.b16 %v1053
    %v1642 = vunpack.c.h.b16 %v1053
    %v1643 = vunpack.c.l.b16 %v1054
    %v1644 = vunpack.c.h.b16 %v1054
    %v1645 = vunpack.c.l.b16 %v1055
    %v1646 = vunpack.c.h.b16 %v1055
    %v1647 = vunpack.c.l.b16 %v1056
    %v1648 = vunpack.c.h.b16 %v1056
    %v1649 = vunpack.c.l.b16 %v1057
    %v1650 = vunpack.c.h.b16 %v1057
    %v1651 = vunpack.c.l.b16 %v1058
    %v1652 = vunpack.c.h.b16 %v1058
    %v1653 = vunpack.c.l.b16 %v1059
    %v1654 = vunpack.c.h.b16 %v1059
    %v1655 = vunpack.c.l.b16 %v1060
    %v1656 = vunpack.c.h.b16 %v1060
    %v1657 = vunpack.c.l.b16 %v1061
    %v1658 = vunpack.c.h.b16 %v1061
    %v1659 = vunpack.c.l.b16 %v1062
    %v1660 = vunpack.c.h.b16 %v1062
    %v1661 = vunpack.c.l.b16 %v1063
    %v1662 = vunpack.c.h.b16 %v1063
    %v1663 = vunpack.c.l.b16 %v1064
    %v1664 = vunpack.c.h.b16 %v1064
    %v1665 = vunpack.c.l.b16 %v1065
    %v1666 = vunpack.c.h.b16 %v1065
    %v1667 = vunpack.c.l.b16 %v1066
    %v1668 = vunpack.c.h.b16 %v1066
    %v1669 = vunpack.c.l.b16 %v1067
    %v1670 = vunpack.c.h.b16 %v1067
    %v1671 = vunpack.c.l.b16 %v1068
    %v1672 = vunpack.c.h.b16 %v1068
    %v1673 = vunpack.c.l.b16 %v1069
    %v1674 = vunpack.c.h.b16 %v1069
    %v1675 = vunpack.c.l.b16 %v1070
    %v1676 = vunpack.c.h.b16 %v1070
    %v1677 = vunpack.c.l.b16 %v1071
    %v1678 = vunpack.c.h.b16 %v1071
    %v1679 = vunpack.c.l.b16 %v1072
    %v1680 = vunpack.c.h.b16 %v1072
    %v1681 = vunpack.c.l.b16 %v1073
    %v1682 = vunpack.c.h.b16 %v1073
    %v1683 = vunpack.c.l.b16 %v1074
    %v1684 = vunpack.c.h.b16 %v1074
    %v1685 = vunpack.c.l.b16 %v1075
    %v1686 = vunpack.c.h.b16 %v1075
    %v1687 = vunpack.c.l.b16 %v1076
    %v1688 = vunpack.c.h.b16 %v1076
    %v1689 = vunpack.c.l.b16 %v1077
    %v1690 = vunpack.c.h.b16 %v1077
    %v1691 = vunpack.c.l.b16 %v1078
    %v1692 = vunpack.c.h.b16 %v1078
    %v1693 = vunpack.c.l.b16 %v1079
    %v1694 = vunpack.c.h.b16 %v1079
    %v1695 = vunpack.c.l.b16 %v1080
    %v1696 = vunpack.c.h.b16 %v1080
    %v1697 = vunpack.c.l.b16 %v1081
    %v1698 = vunpack.c.h.b16 %v1081
    %v1699 = vunpack.c.l.b16 %v1082
    %v1700 = vunpack.c.h.b16 %v1082
    %v1701 = vunpack.c.l.b16 %v1083
    %v1702 = vunpack.c.h.b16 %v1083
    %v1703 = vunpack.c.l.b16 %v1084
    %v1704 = vunpack.c.h.b16 %v1084
    %v1705 = vunpack.c.l.b16 %v1085
    %v1706 = vunpack.c.h.b16 %v1085
    %v1707 = vunpack.c.l.b16 %v1086
    %v1708 = vunpack.c.h.b16 %v1086
    %v1709 = vunpack.c.l.b16 %v1087
    %v1710 = vunpack.c.h.b16 %v1087
    %v1711 = vunpack.c.l.b16 %v1088
    %v1712 = vunpack.c.h.b16 %v1088
    %v1713 = vunpack.c.l.b16 %v1089
    %v1714 = vunpack.c.h.b16 %v1089
    %v1715 = vunpack.c.l.b16 %v1090
    %v1716 = vunpack.c.h.b16 %v1090
    %v1717 = vunpack.c.l.b16 %v1091
    %v1718 = vunpack.c.h.b16 %v1091
    %v1719 = vunpack.c.l.b16 %v1092
    %v1720 = vunpack.c.h.b16 %v1092
    %v1721 = vunpack.c.l.b16 %v1093
    %v1722 = vunpack.c.h.b16 %v1093
    %v1723 = vunpack.c.l.b16 %v1094
    %v1724 = vunpack.c.h.b16 %v1094
    %v1725 = vunpack.c.l.b16 %v1095
    %v1726 = vunpack.c.h.b16 %v1095
    %v1727 = vunpack.c.l.b16 %v1096
    %v1728 = vunpack.c.h.b16 %v1096
    %v1729 = vunpack.c.l.b16 %v1097
    %v1730 = vunpack.c.h.b16 %v1097
    %v1731 = vunpack.c.l.b16 %v1098
    %v1732 = vunpack.c.h.b16 %v1098
    %v1733 = vunpack.c.l.b16 %v1099
    %v1734 = vunpack.c.h.b16 %v1099
    %v1735 = vunpack.c.l.b16 %v1100
    %v1736 = vunpack.c.h.b16 %v1100
    %v1737 = vunpack.c.l.b16 %v1101
    %v1738 = vunpack.c.h.b16 %v1101
    %v1739 = vunpack.c.l.b16 %v1102
    %v1740 = vunpack.c.h.b16 %v1102
    %v1741 = vunpack.c.l.b16 %v1103
    %v1742 = vunpack.c.h.b16 %v1103
    %v1743 = vunpack.c.l.b16 %v1104
    %v1744 = vunpack.c.h.b16 %v1104
    %v1745 = vunpack.c.l.b16 %v1105
    %v1746 = vunpack.c.h.b16 %v1105
    %v1747 = vunpack.c.l.b16 %v1106
    %v1748 = vunpack.c.h.b16 %v1106
    %v1749 = vunpack.c.l.b16 %v1107
    %v1750 = vunpack.c.h.b16 %v1107
    %v1751 = vunpack.c.l.b16 %v1108
    %v1752 = vunpack.c.h.b16 %v1108
    %v1753 = vunpack.c.l.b16 %v1109
    %v1754 = vunpack.c.h.b16 %v1109
    %v1755 = vunpack.c.l.b16 %v1110
    %v1756 = vunpack.c.h.b16 %v1110
    %v1757 = vunpack.c.l.b16 %v1111
    %v1758 = vunpack.c.h.b16 %v1111
    %v1759 = vunpack.c.l.b16 %v1112
    %v1760 = vunpack.c.h.b16 %v1112
    %v1761 = vunpack.c.l.b16 %v1113
    %v1762 = vunpack.c.h.b16 %v1113
    %v1763 = vunpack.c.l.b16 %v1114
    %v1764 = vunpack.c.h.b16 %v1114
    %v1765 = vunpack.c.l.b16 %v1115
    %v1766 = vunpack.c.h.b16 %v1115
    %v1767 = vunpack.c.l.b16 %v1116
    %v1768 = vunpack.c.h.b16 %v1116
    %v1769 = vunpack.c.l.b16 %v1117
    %v1770 = vunpack.c.h.b16 %v1117
    %v1771 = vunpack.c.l.b16 %v1118
    %v1772 = vunpack.c.h.b16 %v1118
    %v1773 = vunpack.c.l.b16 %v1119
    %v1774 = vunpack.c.h.b16 %v1119
    %v1775 = vunpack.c.l.b16 %v1120
    %v1776 = vunpack.c.h.b16 %v1120
    %v1777 = vunpack.c.l.b16 %v1121
    %v1778 = vunpack.c.h.b16 %v1121
    %v1779 = vunpack.c.l.b16 %v1122
    %v1780 = vunpack.c.h.b16 %v1122
    %v1781 = vunpack.c.l.b16 %v1123
    %v1782 = vunpack.c.h.b16 %v1123
    %v1783 = vunpack.c.l.b16 %v1124
    %v1784 = vunpack.c.h.b16 %v1124
    %v1785 = vunpack.c.l.b16 %v1125
    %v1786 = vunpack.c.h.b16 %v1125
    %v1787 = vunpack.c.l.b16 %v1126
    %v1788 = vunpack.c.h.b16 %v1126
    %v1789 = vunpack.c.l.b16 %v1127
    %v1790 = vunpack.c.h.b16 %v1127
    %v1791 = vunpack.c.l.b16 %v1128
    %v1792 = vunpack.c.h.b16 %v1128
    %v1793 = vunpack.c.l.b16 %v1129
    %v1794 = vunpack.c.h.b16 %v1129
    %v1795 = vunpack.c.l.b16 %v1130
    %v1796 = vunpack.c.h.b16 %v1130
    %v1797 = vunpack.c.l.b16 %v1131
    %v1798 = vunpack.c.h.b16 %v1131
    %v1799 = vunpack.c.l.b16 %v1132
    %v1800 = vunpack.c.h.b16 %v1132
    %v1801 = vunpack.c.l.b16 %v1133
    %v1802 = vunpack.c.h.b16 %v1133
    %v1803 = vunpack.c.l.b16 %v1134
    %v1804 = vunpack.c.h.b16 %v1134
    %v1805 = vunpack.c.l.b16 %v1135
    %v1806 = vunpack.c.h.b16 %v1135
    %v1807 = vunpack.c.l.b16 %v1136
    %v1808 = vunpack.c.h.b16 %v1136
    %v1809 = vunpack.c.l.b16 %v1137
    %v1810 = vunpack.c.h.b16 %v1137
    %v1811 = vunpack.c.l.b16 %v1138
    %v1812 = vunpack.c.h.b16 %v1138
    %v1813 = vunpack.c.l.b16 %v1139
    %v1814 = vunpack.c.h.b16 %v1139
    %v1815 = vunpack.c.l.b16 %v1140
    %v1816 = vunpack.c.h.b16 %v1140
    %v1817 = vunpack.c.l.b16 %v1141
    %v1818 = vunpack.c.h.b16 %v1141
    %v1819 = vunpack.c.l.b16 %v1142
    %v1820 = vunpack.c.h.b16 %v1142
    %v1821 = vunpack.c.l.b16 %v1143
    %v1822 = vunpack.c.h.b16 %v1143
    %v1823 = vunpack.c.l.b16 %v1144
    %v1824 = vunpack.c.h.b16 %v1144
    %v1825 = vunpack.c.l.b16 %v1145
    %v1826 = vunpack.c.h.b16 %v1145
    %v1827 = vunpack.c.l.b16 %v1146
    %v1828 = vunpack.c.h.b16 %v1146
    %v1829 = vunpack.c.l.b16 %v1147
    %v1830 = vunpack.c.h.b16 %v1147
    %v1831 = vunpack.c.l.b16 %v1148
    %v1832 = vunpack.c.h.b16 %v1148
    %v1833 = vunpack.c.l.b16 %v1149
    %v1834 = vunpack.c.h.b16 %v1149
    %v1835 = vunpack.c.l.b16 %v1150
    %v1836 = vunpack.c.h.b16 %v1150
    %v1837 = vunpack.c.l.b16 %v1151
    %v1838 = vunpack.c.h.b16 %v1151
    %v1839 = vunpack.c.l.b16 %v1152
    %v1840 = vunpack.c.h.b16 %v1152
    %v1841 = vunpack.c.l.b16 %v1153
    %v1842 = vunpack.c.h.b16 %v1153
    %v1843 = vunpack.c.l.b16 %v1154
    %v1844 = vunpack.c.h.b16 %v1154
    %v1845 = vunpack.c.l.b16 %v1155
    %v1846 = vunpack.c.h.b16 %v1155
    %v1847 = vunpack.c.l.b16 %v1156
    %v1848 = vunpack.c.h.b16 %v1156
    %v1849 = vunpack.c.l.b16 %v1157
    %v1850 = vunpack.c.h.b16 %v1157
    %v1851 = vunpack.c.l.b16 %v1158
    %v1852 = vunpack.c.h.b16 %v1158
    %v1853 = vunpack.c.l.b16 %v1159
    %v1854 = vunpack.c.h.b16 %v1159
    %v1855 = vunpack.c.l.b16 %v1160
    %v1856 = vunpack.c.h.b16 %v1160
    %v1857 = vunpack.c.l.b16 %v1161
    %v1858 = vunpack.c.h.b16 %v1161
    %v1859 = vunpack.c.l.b16 %v1162
    %v1860 = vunpack.c.h.b16 %v1162
    %v1861 = vunpack.c.l.b16 %v1163
    %v1862 = vunpack.c.h.b16 %v1163
    %v1863 = vunpack.c.l.b16 %v1164
    %v1864 = vunpack.c.h.b16 %v1164
    %v1865 = vunpack.c.l.b16 %v1165
    %v1866 = vunpack.c.h.b16 %v1165
    %v1867 = vunpack.c.l.b16 %v1166
    %v1868 = vunpack.c.h.b16 %v1166
    %v1869 = vunpack.c.l.b16 %v1167
    %v1870 = vunpack.c.h.b16 %v1167
    %v1871 = vunpack.c.l.b16 %v1168
    %v1872 = vunpack.c.h.b16 %v1168
    %v1873 = vunpack.c.l.b16 %v1169
    %v1874 = vunpack.c.h.b16 %v1169
    %v1875 = vunpack.c.l.b16 %v1170
    %v1876 = vunpack.c.h.b16 %v1170
    %v1877 = vunpack.c.l.b16 %v1171
    %v1878 = vunpack.c.h.b16 %v1171
    %v1879 = vunpack.c.l.b16 %v1172
    %v1880 = vunpack.c.h.b16 %v1172
    %v1881 = vunpack.c.l.b16 %v1173
    %v1882 = vunpack.c.h.b16 %v1173
    %v1883 = vunpack.c.l.b16 %v1174
    %v1884 = vunpack.c.h.b16 %v1174
    %v1885 = vunpack.c.l.b16 %v1175
    %v1886 = vunpack.c.h.b16 %v1175
    %v1887 = vunpack.c.l.b16 %v1176
    %v1888 = vunpack.c.h.b16 %v1176
    %v1889 = vunpack.c.l.b16 %v1177
    %v1890 = vunpack.c.h.b16 %v1177
    %v1891 = vunpack.c.l.b16 %v1178
    %v1892 = vunpack.c.h.b16 %v1178
    %v1893 = vunpack.c.l.b16 %v1179
    %v1894 = vunpack.c.h.b16 %v1179
    %v1895 = vunpack.c.l.b16 %v1180
    %v1896 = vunpack.c.h.b16 %v1180
    %v1897 = vunpack.c.l.b16 %v1181
    %v1898 = vunpack.c.h.b16 %v1181
    %v1899 = vunpack.c.l.b16 %v1182
    %v1900 = vunpack.c.h.b16 %v1182
    %v1901 = vunpack.c.l.b16 %v1183
    %v1902 = vunpack.c.h.b16 %v1183
    %v1903 = vunpack.c.l.b16 %v1184
    %v1904 = vunpack.c.h.b16 %v1184
    %v1905 = vunpack.c.l.b16 %v1185
    %v1906 = vunpack.c.h.b16 %v1185
    %v1907 = vunpack.c.l.b16 %v1186
    %v1908 = vunpack.c.h.b16 %v1186
    %v1909 = vunpack.c.l.b16 %v1187
    %v1910 = vunpack.c.h.b16 %v1187
    %v1911 = vunpack.c.l.b16 %v1188
    %v1912 = vunpack.c.h.b16 %v1188
    %v1913 = vunpack.c.l.b16 %v1189
    %v1914 = vunpack.c.h.b16 %v1189
    %v1915 = vunpack.c.l.b16 %v1190
    %v1916 = vunpack.c.h.b16 %v1190
    %v1917 = vunpack.c.l.b16 %v1191
    %v1918 = vunpack.c.h.b16 %v1191
    %v1919 = vunpack.c.l.b16 %v1192
    %v1920 = vunpack.c.h.b16 %v1192
    %v1921 = vunpack.c.l.b16 %v1193
    %v1922 = vunpack.c.h.b16 %v1193
    %v1923 = vunpack.c.l.b16 %v1194
    %v1924 = vunpack.c.h.b16 %v1194
    %v1925 = vunpack.c.l.b16 %v1195
    %v1926 = vunpack.c.h.b16 %v1195
    %v1927 = vunpack.c.l.b16 %v1196
    %v1928 = vunpack.c.h.b16 %v1196
    %v1929 = vunpack.c.l.b16 %v1197
    %v1930 = vunpack.c.h.b16 %v1197
    %v1931 = vunpack.c.l.b16 %v1198
    %v1932 = vunpack.c.h.b16 %v1198
    %v1933 = vunpack.c.l.b16 %v1199
    %v1934 = vunpack.c.h.b16 %v1199
    %v1935 = vunpack.c.l.b16 %v1200
    %v1936 = vunpack.c.h.b16 %v1200
    %v1937 = vunpack.c.l.b16 %v1201
    %v1938 = vunpack.c.h.b16 %v1201
    %v1939 = vunpack.c.l.b16 %v1202
    %v1940 = vunpack.c.h.b16 %v1202
    %v1941 = vunpack.c.l.b16 %v1203
    %v1942 = vunpack.c.h.b16 %v1203
    %v1943 = vunpack.c.l.b16 %v1204
    %v1944 = vunpack.c.h.b16 %v1204
    %v1945 = vunpack.c.l.b16 %v1205
    %v1946 = vunpack.c.h.b16 %v1205
    %v1947 = vunpack.c.l.b16 %v1206
    %v1948 = vunpack.c.h.b16 %v1206
    %v1949 = vunpack.c.l.b16 %v1207
    %v1950 = vunpack.c.h.b16 %v1207
    %v1951 = vunpack.c.l.b16 %v1208
    %v1952 = vunpack.c.h.b16 %v1208
    %v1953 = vunpack.c.l.b16 %v1209
    %v1954 = vunpack.c.h.b16 %v1209
    %v1955 = vunpack.c.l.b16 %v1210
    %v1956 = vunpack.c.h.b16 %v1210
    %v1957 = vunpack.c.l.b16 %v1211
    %v1958 = vunpack.c.h.b16 %v1211
    %v1959 = vunpack.c.l.b16 %v1212
    %v1960 = vunpack.c.h.b16 %v1212
    %v1961 = vunpack.c.l.b16 %v1213
    %v1962 = vunpack.c.h.b16 %v1213
    %v1963 = vunpack.c.l.b16 %v1214
    %v1964 = vunpack.c.h.b16 %v1214
    %v1965 = vunpack.c.l.b16 %v1215
    %v1966 = vunpack.c.h.b16 %v1215
    %v1967 = vunpack.c.l.b16 %v1216
    %v1968 = vunpack.c.h.b16 %v1216
    %v1969 = vunpack.c.l.b16 %v1217
    %v1970 = vunpack.c.h.b16 %v1217
    %v1971 = vunpack.c.l.b16 %v1218
    %v1972 = vunpack.c.h.b16 %v1218
    %v1973 = vunpack.c.l.b16 %v1219
    %v1974 = vunpack.c.h.b16 %v1219
    %v1975 = vunpack.c.l.b16 %v1220
    %v1976 = vunpack.c.h.b16 %v1220
    %v1977 = vunpack.c.l.b16 %v1221
    %v1978 = vunpack.c.h.b16 %v1221
    %v1979 = vunpack.c.l.b16 %v1222
    %v1980 = vunpack.c.h.b16 %v1222
    %v1981 = vunpack.c.l.b16 %v1223
    %v1982 = vunpack.c.h.b16 %v1223
    %v1983 = vunpack.c.l.b16 %v1224
    %v1984 = vunpack.c.h.b16 %v1224
    %v1985 = vunpack.c.l.b16 %v1225
    %v1986 = vunpack.c.h.b16 %v1225
    %v1987 = vunpack.c.l.b16 %v1226
    %v1988 = vunpack.c.h.b16 %v1226
    %v1989 = vunpack.c.l.b16 %v1227
    %v1990 = vunpack.c.h.b16 %v1227
    %v1991 = vunpack.c.l.b16 %v1228
    %v1992 = vunpack.c.h.b16 %v1228
    %v1993 = vunpack.c.l.b16 %v1229
    %v1994 = vunpack.c.h.b16 %v1229
    %v1995 = vunpack.c.l.b16 %v1230
    %v1996 = vunpack.c.h.b16 %v1230
    %v1997 = vunpack.c.l.b16 %v1231
    %v1998 = vunpack.c.h.b16 %v1231
    %v1999 = vunpack.c.l.b16 %v1232
    %v2000 = vunpack.c.h.b16 %v1232
    %v2001 = vunpack.c.l.b16 %v1233
    %v2002 = vunpack.c.h.b16 %v1233
    %v2003 = vunpack.c.l.b16 %v1234
    %v2004 = vunpack.c.h.b16 %v1234
    %v2005 = vunpack.c.l.b16 %v1235
    %v2006 = vunpack.c.h.b16 %v1235
    %v2007 = vunpack.c.l.b16 %v1236
    %v2008 = vunpack.c.h.b16 %v1236
    %v2009 = vunpack.c.l.b16 %v1237
    %v2010 = vunpack.c.h.b16 %v1237
    %v2011 = vunpack.c.l.b16 %v1238
    %v2012 = vunpack.c.h.b16 %v1238
    %v2013 = vunpack.c.l.b16 %v1239
    %v2014 = vunpack.c.h.b16 %v1239
    %v2015 = vunpack.c.l.b16 %v1240
    %v2016 = vunpack.c.h.b16 %v1240
    %v2017 = vunpack.c.l.b16 %v1241
    %v2018 = vunpack.c.h.b16 %v1241
    %v2019 = vunpack.c.l.b16 %v1242
    %v2020 = vunpack.c.h.b16 %v1242
    %v2021 = vunpack.c.l.b16 %v1243
    %v2022 = vunpack.c.h.b16 %v1243
    %v2023 = vunpack.c.l.b16 %v1244
    %v2024 = vunpack.c.h.b16 %v1244
    %v2025 = vunpack.c.l.b16 %v1245
    %v2026 = vunpack.c.h.b16 %v1245
    %v2027 = vunpack.c.l.b16 %v1246
    %v2028 = vunpack.c.h.b16 %v1246
    %v2029 = vunpack.c.l.b16 %v1247
    %v2030 = vunpack.c.h.b16 %v1247
    %v2031 = vunpack.c.l.b16 %v1248
    %v2032 = vunpack.c.h.b16 %v1248
    %v2033 = vunpack.c.l.b16 %v1249
    %v2034 = vunpack.c.h.b16 %v1249
    %v2035 = vunpack.c.l.b16 %v1250
    %v2036 = vunpack.c.h.b16 %v1250
    %v2037 = vunpack.c.l.b16 %v1251
    %v2038 = vunpack.c.h.b16 %v1251
    %v2039 = vunpack.c.l.b16 %v1252
    %v2040 = vunpack.c.h.b16 %v1252
    %v2041 = vunpack.c.l.b16 %v1253
    %v2042 = vunpack.c.h.b16 %v1253
    %v2043 = vunpack.c.l.b16 %v1254
    %v2044 = vunpack.c.h.b16 %v1254
    %v2045 = vunpack.c.l.b16 %v1255
    %v2046 = vunpack.c.h.b16 %v1255
    %v2047 = vunpack.c.l.b16 %v1256
    %v2048 = vunpack.c.h.b16 %v1256
    %v2049 = vunpack.c.l.b16 %v1257
    %v2050 = vunpack.c.h.b16 %v1257
    %v2051 = vunpack.c.l.b16 %v1258
    %v2052 = vunpack.c.h.b16 %v1258
    %v2053 = vunpack.c.l.b16 %v1259
    %v2054 = vunpack.c.h.b16 %v1259
    %v2055 = vunpack.c.l.b16 %v1260
    %v2056 = vunpack.c.h.b16 %v1260
    %v2057 = vunpack.c.l.b16 %v1261
    %v2058 = vunpack.c.h.b16 %v1261
    %v2059 = vunpack.c.l.b16 %v1262
    %v2060 = vunpack.c.h.b16 %v1262
    %v2061 = vunpack.c.l.b16 %v1263
    %v2062 = vunpack.c.h.b16 %v1263
    %v2063 = vunpack.c.l.b16 %v1264
    %v2064 = vunpack.c.h.b16 %v1264
    %v2065 = vunpack.c.l.b16 %v1265
    %v2066 = vunpack.c.h.b16 %v1265
    %v2067 = vunpack.c.l.b16 %v1266
    %v2068 = vunpack.c.h.b16 %v1266
    %v2069 = vunpack.c.l.b16 %v1267
    %v2070 = vunpack.c.h.b16 %v1267
    %v2071 = vunpack.c.l.b16 %v1268
    %v2072 = vunpack.c.h.b16 %v1268
    %v2073 = vunpack.c.l.b16 %v1269
    %v2074 = vunpack.c.h.b16 %v1269
    %v2075 = vunpack.c.l.b16 %v1270
    %v2076 = vunpack.c.h.b16 %v1270
    %v2077 = vunpack.c.l.b16 %v1271
    %v2078 = vunpack.c.h.b16 %v1271
    %v2079 = vunpack.c.l.b16 %v1272
    %v2080 = vunpack.c.h.b16 %v1272
    %v2081 = vunpack.c.l.b16 %v1273
    %v2082 = vunpack.c.h.b16 %v1273
    %v2083 = vunpack.c.l.b16 %v1274
    %v2084 = vunpack.c.h.b16 %v1274
    %v2085 = vpack.c.b16 %v1581, %v1573
    %v2086 = vpack.c.b16 %v1582, %v1574
    %v2087 = vpack.c.b16 %v1583, %v1575
    %v2088 = vpack.c.b16 %v1584, %v1576
    %v2089 = vpack.c.b16 %v1585, %v1577
    %v2090 = vpack.c.b16 %v1586, %v1578
    %v2091 = vpack.c.b16 %v1587, %v1579
    %v2092 = vpack.c.b16 %v1588, %v1580
    %v2093 = vpack.c.b16 %v1597, %v1589
    %v2094 = vpack.c.b16 %v1598, %v1590
    %v2095 = vpack.c.b16 %v1599, %v1591
    %v2096 = vpack.c.b16 %v1600, %v1592
    %v2097 = vpack.c.b16 %v1601, %v1593
    %v2098 = vpack.c.b16 %v1602, %v1594
    %v2099 = vpack.c.b16 %v1603, %v1595
    %v2100 = vpack.c.b16 %v1604, %v1596
    %v2101 = vpack.c.b16 %v1613, %v1605
    %v2102 = vpack.c.b16 %v1614, %v1606
    %v2103 = vpack.c.b16 %v1615, %v1607
    %v2104 = vpack.c.b16 %v1616, %v1608
    %v2105 = vpack.c.b16 %v1617, %v1609
    %v2106 = vpack.c.b16 %v1618, %v1610
    %v2107 = vpack.c.b16 %v1619, %v1611
    %v2108 = vpack.c.b16 %v1620, %v1612
    %v2109 = vpack.c.b16 %v1629, %v1621
    %v2110 = vpack.c.b16 %v1630, %v1622
    %v2111 = vpack.c.b16 %v1631, %v1623
    %v2112 = vpack.c.b16 %v1632, %v1624
    %v2113 = vpack.c.b16 %v1633, %v1625
    %v2114 = vpack.c.b16 %v1634, %v1626
    %v2115 = vpack.c.b16 %v1635, %v1627
    %v2116 = vpack.c.b16 %v1636, %v1628
    %v2117 = vpack.c.b16 %v1645, %v1637
    %v2118 = vpack.c.b16 %v1646, %v1638
    %v2119 = vpack.c.b16 %v1647, %v1639
    %v2120 = vpack.c.b16 %v1648, %v1640
    %v2121 = vpack.c.b16 %v1649, %v1641
    %v2122 = vpack.c.b16 %v1650, %v1642
    %v2123 = vpack.c.b16 %v1651, %v1643
    %v2124 = vpack.c.b16 %v1652, %v1644
    %v2125 = vpack.c.b16 %v1661, %v1653
    %v2126 = vpack.c.b16 %v1662, %v1654
    %v2127 = vpack.c.b16 %v1663, %v1655
    %v2128 = vpack.c.b16 %v1664, %v1656
    %v2129 = vpack.c.b16 %v1665, %v1657
    %v2130 = vpack.c.b16 %v1666, %v1658
    %v2131 = vpack.c.b16 %v1667, %v1659
    %v2132 = vpack.c.b16 %v1668, %v1660
    %v2133 = vpack.c.b16 %v1677, %v1669
    %v2134 = vpack.c.b16 %v1678, %v1670
    %v2135 = vpack.c.b16 %v1679, %v1671
    %v2136 = vpack.c.b16 %v1680, %v1672
    %v2137 = vpack.c.b16 %v1681, %v1673
    %v2138 = vpack.c.b16 %v1682, %v1674
    %v2139 = vpack.c.b16 %v1683, %v1675
    %v2140 = vpack.c.b16 %v1684, %v1676
    %v2141 = vpack.c.b16 %v1693, %v1685
    %v2142 = vpack.c.b16 %v1694, %v1686
    %v2143 = vpack.c.b16 %v1695, %v1687
    %v2144 = vpack.c.b16 %v1696, %v1688
    %v2145 = vpack.c.b16 %v1697, %v1689
    %v2146 = vpack.c.b16 %v1698, %v1690
    %v2147 = vpack.c.b16 %v1699, %v1691
    %v2148 = vpack.c.b16 %v1700, %v1692
    %v2149 = vpack.c.b16 %v1709, %v1701
    %v2150 = vpack.c.b16 %v1710, %v1702
    %v2151 = vpack.c.b16 %v1711, %v1703
    %v2152 = vpack.c.b16 %v1712, %v1704
    %v2153 = vpack.c.b16 %v1713, %v1705
    %v2154 = vpack.c.b16 %v1714, %v1706
    %v2155 = vpack.c.b16 %v1715, %v1707
    %v2156 = vpack.c.b16 %v1716, %v1708
    %v2157 = vpack.c.b16 %v1725, %v1717
    %v2158 = vpack.c.b16 %v1726, %v1718
    %v2159 = vpack.c.b16 %v1727, %v1719
    %v2160 = vpack.c.b16 %v1728, %v1720
    %v2161 = vpack.c.b16 %v1729, %v1721
    %v2162 = vpack.c.b16 %v1730, %v1722
    %v2163 = vpack.c.b16 %v1731, %v1723
    %v2164 = vpack.c.b16 %v1732, %v1724
    %v2165 = vpack.c.b16 %v1741, %v1733
    %v2166 = vpack.c.b16 %v1742, %v1734
    %v2167 = vpack.c.b16 %v1743, %v1735
    %v2168 = vpack.c.b16 %v1744, %v1736
    %v2169 = vpack.c.b16 %v1745, %v1737
    %v2170 = vpack.c.b16 %v1746, %v1738
    %v2171 = vpack.c.b16 %v1747, %v1739
    %v2172 = vpack.c.b16 %v1748, %v1740
    %v2173 = vpack.c.b16 %v1757, %v1749
    %v2174 = vpack.c.b16 %v1758, %v1750
    %v2175 = vpack.c.b16 %v1759, %v1751
    %v2176 = vpack.c.b16 %v1760, %v1752
    %v2177 = vpack.c.b16 %v1761, %v1753
    %v2178 = vpack.c.b16 %v1762, %v1754
    %v2179 = vpack.c.b16 %v1763, %v1755
    %v2180 = vpack.c.b16 %v1764, %v1756
    %v2181 = vpack.c.b16 %v1773, %v1765
    %v2182 = vpack.c.b16 %v1774, %v1766
    %v2183 = vpack.c.b16 %v1775, %v1767
    %v2184 = vpack.c.b16 %v1776, %v1768
    %v2185 = vpack.c.b16 %v1777, %v1769
    %v2186 = vpack.c.b16 %v1778, %v1770
    %v2187 = vpack.c.b16 %v1779, %v1771
    %v2188 = vpack.c.b16 %v1780, %v1772
    %v2189 = vpack.c.b16 %v1789, %v1781
    %v2190 = vpack.c.b16 %v1790, %v1782
    %v2191 = vpack.c.b16 %v1791, %v1783
    %v2192 = vpack.c.b16 %v1792, %v1784
    %v2193 = vpack.c.b16 %v1793, %v1785
    %v2194 = vpack.c.b16 %v1794, %v1786
    %v2195 = vpack.c.b16 %v1795, %v1787
    %v2196 = vpack.c.b16 %v1796, %v1788
    %v2197 = vpack.c.b16 %v1805, %v1797
    %v2198 = vpack.c.b16 %v1806, %v1798
    %v2199 = vpack.c.b16 %v1807, %v1799
    %v2200 = vpack.c.b16 %v1808, %v1800
    %v2201 = vpack.c.b16 %v1809, %v1801
    %v2202 = vpack.c.b16 %v1810, %v1802
    %v2203 = vpack.c.b16 %v1811, %v1803
    %v2204 = vpack.c.b16 %v1812, %v1804
    %v2205 = vpack.c.b16 %v1821, %v1813
    %v2206 = vpack.c.b16 %v1822, %v1814
    %v2207 = vpack.c.b16 %v1823, %v1815
    %v2208 = vpack.c.b16 %v1824, %v1816
    %v2209 = vpack.c.b16 %v1825, %v1817
    %v2210 = vpack.c.b16 %v1826, %v1818
    %v2211 = vpack.c.b16 %v1827, %v1819
    %v2212 = vpack.c.b16 %v1828, %v1820
    %v2213 = vpack.c.b16 %v1837, %v1829
    %v2214 = vpack.c.b16 %v1838, %v1830
    %v2215 = vpack.c.b16 %v1839, %v1831
    %v2216 = vpack.c.b16 %v1840, %v1832
    %v2217 = vpack.c.b16 %v1841, %v1833
    %v2218 = vpack.c.b16 %v1842, %v1834
    %v2219 = vpack.c.b16 %v1843, %v1835
    %v2220 = vpack.c.b16 %v1844, %v1836
    %v2221 = vpack.c.b16 %v1853, %v1845
    %v2222 = vpack.c.b16 %v1854, %v1846
    %v2223 = vpack.c.b16 %v1855, %v1847
    %v2224 = vpack.c.b16 %v1856, %v1848
    %v2225 = vpack.c.b16 %v1857, %v1849
    %v2226 = vpack.c.b16 %v1858, %v1850
    %v2227 = vpack.c.b16 %v1859, %v1851
    %v2228 = vpack.c.b16 %v1860, %v1852
    %v2229 = vpack.c.b16 %v1869, %v1861
    %v2230 = vpack.c.b16 %v1870, %v1862
    %v2231 = vpack.c.b16 %v1871, %v1863
    %v2232 = vpack.c.b16 %v1872, %v1864
    %v2233 = vpack.c.b16 %v1873, %v1865
    %v2234 = vpack.c.b16 %v1874, %v1866
    %v2235 = vpack.c.b16 %v1875, %v1867
    %v2236 = vpack.c.b16 %v1876, %v1868
    %v2237 = vpack.c.b16 %v1885, %v1877
    %v2238 = vpack.c.b16 %v1886, %v1878
    %v2239 = vpack.c.b16 %v1887, %v1879
    %v2240 = vpack.c.b16 %v1888, %v1880
    %v2241 = vpack.c.b16 %v1889, %v1881
    %v2242 = vpack.c.b16 %v1890, %v1882
    %v2243 = vpack.c.b16 %v1891, %v1883
    %v2244 = vpack.c.b16 %v1892, %v1884
    %v2245 = vpack.c.b16 %v1901, %v1893
    %v2246 = vpack.c.b16 %v1902, %v1894
    %v2247 = vpack.c.b16 %v1903, %v1895
    %v2248 = vpack.c.b16 %v1904, %v1896
    %v2249 = vpack.c.b16 %v1905, %v1897
    %v2250 = vpack.c.b16 %v1906, %v1898
    %v2251 = vpack.c.b16 %v1907, %v1899
    %v2252 = vpack.c.b16 %v1908, %v1900
    %v2253 = vpack.c.b16 %v1917, %v1909
    %v2254 = vpack.c.b16 %v1918, %v1910
    %v2255 = vpack.c.b16 %v1919, %v1911
    %v2256 = vpack.c.b16 %v1920, %v1912
    %v2257 = vpack.c.b16 %v1921, %v1913
    %v2258 = vpack.c.b16 %v1922, %v1914
    %v2259 = vpack.c.b16 %v1923, %v1915
    %v2260 = vpack.c.b16 %v1924, %v1916
    %v2261 = vpack.c.b16 %v1933, %v1925
    %v2262 = vpack.c.b16 %v1934, %v1926
    %v2263 = vpack.c.b16 %v1935, %v1927
    %v2264 = vpack.c.b16 %v1936, %v1928
    %v2265 = vpack.c.b16 %v1937, %v1929
    %v2266 = vpack.c.b16 %v1938, %v1930
    %v2267 = vpack.c.b16 %v1939, %v1931
    %v2268 = vpack.c.b16 %v1940, %v1932
    %v2269 = vpack.c.b16 %v1949, %v1941
    %v2270 = vpack.c.b16 %v1950, %v1942
    %v2271 = vpack.c.b16 %v1951, %v1943
    %v2272 = vpack.c.b16 %v1952, %v1944
    %v2273 = vpack.c.b16 %v1953, %v1945
    %v2274 = vpack.c.b16 %v1954, %v1946
    %v2275 = vpack.c.b16 %v1955, %v1947
    %v2276 = vpack.c.b16 %v1956, %v1948
    %v2277 = vpack.c.b16 %v1965, %v1957
    %v2278 = vpack.c.b16 %v1966, %v1958
    %v2279 = vpack.c.b16 %v1967, %v1959
    %v2280 = vpack.c.b16 %v1968, %v1960
    %v2281 = vpack.c.b16 %v1969, %v1961
    %v2282 = vpack.c.b16 %v1970, %v1962
    %v2283 = vpack.c.b16 %v1971, %v1963
    %v2284 = vpack.c.b16 %v1972, %v1964
    %v2285 = vpack.c.b16 %v1981, %v1973
    %v2286 = vpack.c.b16 %v1982, %v1974
    %v2287 = vpack.c.b16 %v1983, %v1975
    %v2288 = vpack.c.b16 %v1984, %v1976
    %v2289 = vpack.c.b16 %v1985, %v1977
    %v2290 = vpack.c.b16 %v1986, %v1978
    %v2291 = vpack.c.b16 %v1987, %v1979
    %v2292 = vpack.c.b16 %v1988, %v1980
    %v2293 = vpack.c.b16 %v1997, %v1989
    %v2294 = vpack.c.b16 %v1998, %v1990
    %v2295 = vpack.c.b16 %v1999, %v1991
    %v2296 = vpack.c.b16 %v2000, %v1992
    %v2297 = vpack.c.b16 %v2001, %v1993
    %v2298 = vpack.c.b16 %v2002, %v1994
    %v2299 = vpack.c.b16 %v2003, %v1995
    %v2300 = vpack.c.b16 %v2004, %v1996
    %v2301 = vpack.c.b16 %v2013, %v2005
    %v2302 = vpack.c.b16 %v2014, %v2006
    %v2303 = vpack.c.b16 %v2015, %v2007
    %v2304 = vpack.c.b16 %v2016, %v2008
    %v2305 = vpack.c.b16 %v2017, %v2009
    %v2306 = vpack.c.b16 %v2018, %v2010
    %v2307 = vpack.c.b16 %v2019, %v2011
    %v2308 = vpack.c.b16 %v2020, %v2012
    %v2309 = vpack.c.b16 %v2029, %v2021
    %v2310 = vpack.c.b16 %v2030, %v2022
    %v2311 = vpack.c.b16 %v2031, %v2023
    %v2312 = vpack.c.b16 %v2032, %v2024
    %v2313 = vpack.c.b16 %v2033, %v2025
    %v2314 = vpack.c.b16 %v2034, %v2026
    %v2315 = vpack.c.b16 %v2035, %v2027
    %v2316 = vpack.c.b16 %v2036, %v2028
    %v2317 = vpack.c.b16 %v2045, %v2037
    %v2318 = vpack.c.b16 %v2046, %v2038
    %v2319 = vpack.c.b16 %v2047, %v2039
    %v2320 = vpack.c.b16 %v2048, %v2040
    %v2321 = vpack.c.b16 %v2049, %v2041
    %v2322 = vpack.c.b16 %v2050, %v2042
    %v2323 = vpack.c.b16 %v2051, %v2043
    %v2324 = vpack.c.b16 %v2052, %v2044
    %v2325 = vpack.c.b16 %v2061, %v2053
    %v2326 = vpack.c.b16 %v2062, %v2054
    %v2327 = vpack.c.b16 %v2063, %v2055
    %v2328 = vpack.c.b16 %v2064, %v2056
    %v2329 = vpack.c.b16 %v2065, %v2057
    %v2330 = vpack.c.b16 %v2066, %v2058
    %v2331 = vpack.c.b16 %v2067, %v2059
    %v2332 = vpack.c.b16 %v2068, %v2060
    %v2333 = vpack.c.b16 %v2077, %v2069
    %v2334 = vpack.c.b16 %v2078, %v2070
    %v2335 = vpack.c.b16 %v2079, %v2071
    %v2336 = vpack.c.b16 %v2080, %v2072
    %v2337 = vpack.c.b16 %v2081, %v2073
    %v2338 = vpack.c.b16 %v2082, %v2074
    %v2339 = vpack.c.b16 %v2083, %v2075
    %v2340 = vpack.c.b16 %v2084, %v2076
    %2597 = vmatprep.subr.bf16.mxu0 %v2142
    %2598 = vmatpush1.bf16.msra.mxu0 %v2141
    %2599 = vmatprep.subr.bf16.mxu0 %v2134
    %2600 = vmatpush1.bf16.msra.mxu0 %v2133
    %2601 = vmatprep.subr.bf16.mxu0 %v2126
    %2602 = vmatpush1.bf16.msra.mxu0 %v2125
    %2603 = vmatprep.subr.bf16.mxu0 %v2118
    %2604 = vmatpush1.bf16.msra.mxu0 %v2117
    %2605 = vmatprep.subr.bf16.mxu0 %v2110
    %2606 = vmatpush1.bf16.msra.mxu0 %v2109
    %2607 = vmatprep.subr.bf16.mxu0 %v2102
    %2608 = vmatpush1.bf16.msra.mxu0 %v2101
    %2609 = vmatprep.subr.bf16.mxu0 %v2094
    %2610 = vmatpush1.bf16.msra.mxu0 %v2093
    %2611 = vmatprep.subr.bf16.mxu0 %v2086
    %2612 = vmatpush1.bf16.msra.mxu0 %v2085
    %2613 = vmatprep.subr.bf16.mxu0 %v2206
    %2614 = vmatpush2.bf16.msra.mxu0 %v2205
    %2615 = vmatprep.subr.bf16.mxu0 %v2198
    %2616 = vmatpush2.bf16.msra.mxu0 %v2197
    %2617 = vmatprep.subr.bf16.mxu0 %v2190
    %2618 = vmatpush2.bf16.msra.mxu0 %v2189
    %2619 = vmatprep.subr.bf16.mxu0 %v2182
    %2620 = vmatpush2.bf16.msra.mxu0 %v2181
    %2621 = vmatprep.subr.bf16.mxu0 %v2174
    %2622 = vmatpush2.bf16.msra.mxu0 %v2173
    %2623 = vmatprep.subr.bf16.mxu0 %v2166
    %2624 = vmatpush2.bf16.msra.mxu0 %v2165
    %2625 = vmatprep.subr.bf16.mxu0 %v2158
    %2626 = vmatpush2.bf16.msra.mxu0 %v2157
    %2627 = vmatprep.subr.bf16.mxu0 %v2150
    %2628 = vmatpush2.bf16.msra.mxu0 %v2149
    %2629 = vmatprep.mubr.bf16.mxu0 %v1016
    %2630 = vmatmul.mubr.bf16.gmra.mxu0 %v1015
    %v2631 = vpop.f32.mrf.mxu0
    %v2632 = vadd.f32 %v1280, %v2631
    %v2633 = vpop.f32.mrf.mxu0
    %v2634 = vadd.f32 %v1284, %v2633
    %v2635 = vpop.f32.mrf.mxu0
    %v2636 = vpop.f32.mrf.mxu0
    %2637 = vdwg.mxu0
    %2638 = vmatprep.subr.bf16.mxu0 %v2270
    %2639 = vmatpush1.bf16.msra.mxu0 %v2269
    %2640 = vmatprep.subr.bf16.mxu0 %v2262
    %2641 = vmatpush1.bf16.msra.mxu0 %v2261
    %2642 = vmatprep.subr.bf16.mxu0 %v2254
    %2643 = vmatpush1.bf16.msra.mxu0 %v2253
    %2644 = vmatprep.subr.bf16.mxu0 %v2246
    %2645 = vmatpush1.bf16.msra.mxu0 %v2245
    %2646 = vmatprep.subr.bf16.mxu0 %v2238
    %2647 = vmatpush1.bf16.msra.mxu0 %v2237
    %2648 = vmatprep.subr.bf16.mxu0 %v2230
    %2649 = vmatpush1.bf16.msra.mxu0 %v2229
    %2650 = vmatprep.subr.bf16.mxu0 %v2222
    %2651 = vmatpush1.bf16.msra.mxu0 %v2221
    %2652 = vmatprep.subr.bf16.mxu0 %v2214
    %2653 = vmatpush1.bf16.msra.mxu0 %v2213
    %2654 = vmatprep.subr.bf16.mxu0 %v2334
    %2655 = vmatpush2.bf16.msra.mxu0 %v2333
    %2656 = vmatprep.subr.bf16.mxu0 %v2326
    %2657 = vmatpush2.bf16.msra.mxu0 %v2325
    %2658 = vmatprep.subr.bf16.mxu0 %v2318
    %2659 = vmatpush2.bf16.msra.mxu0 %v2317
    %2660 = vmatprep.subr.bf16.mxu0 %v2310
    %2661 = vmatpush2.bf16.msra.mxu0 %v2309
    %2662 = vmatprep.subr.bf16.mxu0 %v2302
    %2663 = vmatpush2.bf16.msra.mxu0 %v2301
    %2664 = vmatprep.subr.bf16.mxu0 %v2294
    %2665 = vmatpush2.bf16.msra.mxu0 %v2293
    %2666 = vmatprep.subr.bf16.mxu0 %v2286
    %2667 = vmatpush2.bf16.msra.mxu0 %v2285
    %2668 = vmatprep.subr.bf16.mxu0 %v2278
    %2669 = vmatpush2.bf16.msra.mxu0 %v2277
    %2670 = vmatprep.mubr.bf16.mxu0 %v1018
    %2671 = vmatmul.mubr.bf16.gmra.mxu0 %v1017
    %v2672 = vpop.f32.mrf.mxu0
    %v2673 = vadd.f32 %v2632, %v2672
    %v2674 = vpop.f32.mrf.mxu0
    %v2675 = vadd.f32 %v2634, %v2674
    %v2676 = vpop.f32.mrf.mxu0
    %v2677 = vpop.f32.mrf.mxu0
    %2678 = vdwg.mxu0
    %2679 = vmatprep.subr.bf16.mxu0 %v2144
    %2680 = vmatpush1.bf16.msra.mxu0 %v2143
    %2681 = vmatprep.subr.bf16.mxu0 %v2136
    %2682 = vmatpush1.bf16.msra.mxu0 %v2135
    %2683 = vmatprep.subr.bf16.mxu0 %v2128
    %2684 = vmatpush1.bf16.msra.mxu0 %v2127
    %2685 = vmatprep.subr.bf16.mxu0 %v2120
    %2686 = vmatpush1.bf16.msra.mxu0 %v2119
    %2687 = vmatprep.subr.bf16.mxu0 %v2112
    %2688 = vmatpush1.bf16.msra.mxu0 %v2111
    %2689 = vmatprep.subr.bf16.mxu0 %v2104
    %2690 = vmatpush1.bf16.msra.mxu0 %v2103
    %2691 = vmatprep.subr.bf16.mxu0 %v2096
    %2692 = vmatpush1.bf16.msra.mxu0 %v2095
    %2693 = vmatprep.subr.bf16.mxu0 %v2088
    %2694 = vmatpush1.bf16.msra.mxu0 %v2087
    %2695 = vmatprep.subr.bf16.mxu0 %v2208
    %2696 = vmatpush2.bf16.msra.mxu0 %v2207
    %2697 = vmatprep.subr.bf16.mxu0 %v2200
    %2698 = vmatpush2.bf16.msra.mxu0 %v2199
    %2699 = vmatprep.subr.bf16.mxu0 %v2192
    %2700 = vmatpush2.bf16.msra.mxu0 %v2191
    %2701 = vmatprep.subr.bf16.mxu0 %v2184
    %2702 = vmatpush2.bf16.msra.mxu0 %v2183
    %2703 = vmatprep.subr.bf16.mxu0 %v2176
    %2704 = vmatpush2.bf16.msra.mxu0 %v2175
    %2705 = vmatprep.subr.bf16.mxu0 %v2168
    %2706 = vmatpush2.bf16.msra.mxu0 %v2167
    %2707 = vmatprep.subr.bf16.mxu0 %v2160
    %2708 = vmatpush2.bf16.msra.mxu0 %v2159
    %2709 = vmatprep.subr.bf16.mxu0 %v2152
    %2710 = vmatpush2.bf16.msra.mxu0 %v2151
    %2711 = vmatprep.mubr.bf16.mxu0 %v1016
    %2712 = vmatmul.mubr.bf16.gmra.mxu0 %v1015
    %v2713 = vpop.f32.mrf.mxu0
    %v2714 = vadd.f32 %v1288, %v2713
    %v2715 = vpop.f32.mrf.mxu0
    %v2716 = vadd.f32 %v1292, %v2715
    %v2717 = vpop.f32.mrf.mxu0
    %v2718 = vpop.f32.mrf.mxu0
    %2719 = vdwg.mxu0
    %2720 = vmatprep.subr.bf16.mxu0 %v2272
    %2721 = vmatpush1.bf16.msra.mxu0 %v2271
    %2722 = vmatprep.subr.bf16.mxu0 %v2264
    %2723 = vmatpush1.bf16.msra.mxu0 %v2263
    %2724 = vmatprep.subr.bf16.mxu0 %v2256
    %2725 = vmatpush1.bf16.msra.mxu0 %v2255
    %2726 = vmatprep.subr.bf16.mxu0 %v2248
    %2727 = vmatpush1.bf16.msra.mxu0 %v2247
    %2728 = vmatprep.subr.bf16.mxu0 %v2240
    %2729 = vmatpush1.bf16.msra.mxu0 %v2239
    %2730 = vmatprep.subr.bf16.mxu0 %v2232
    %2731 = vmatpush1.bf16.msra.mxu0 %v2231
    %2732 = vmatprep.subr.bf16.mxu0 %v2224
    %2733 = vmatpush1.bf16.msra.mxu0 %v2223
    %2734 = vmatprep.subr.bf16.mxu0 %v2216
    %2735 = vmatpush1.bf16.msra.mxu0 %v2215
    %2736 = vmatprep.subr.bf16.mxu0 %v2336
    %2737 = vmatpush2.bf16.msra.mxu0 %v2335
    %2738 = vmatprep.subr.bf16.mxu0 %v2328
    %2739 = vmatpush2.bf16.msra.mxu0 %v2327
    %2740 = vmatprep.subr.bf16.mxu0 %v2320
    %2741 = vmatpush2.bf16.msra.mxu0 %v2319
    %2742 = vmatprep.subr.bf16.mxu0 %v2312
    %2743 = vmatpush2.bf16.msra.mxu0 %v2311
    %2744 = vmatprep.subr.bf16.mxu0 %v2304
    %2745 = vmatpush2.bf16.msra.mxu0 %v2303
    %2746 = vmatprep.subr.bf16.mxu0 %v2296
    %2747 = vmatpush2.bf16.msra.mxu0 %v2295
    %2748 = vmatprep.subr.bf16.mxu0 %v2288
    %2749 = vmatpush2.bf16.msra.mxu0 %v2287
    %2750 = vmatprep.subr.bf16.mxu0 %v2280
    %2751 = vmatpush2.bf16.msra.mxu0 %v2279
    %2752 = vmatprep.mubr.bf16.mxu0 %v1018
    %2753 = vmatmul.mubr.bf16.gmra.mxu0 %v1017
    %v2754 = vpop.f32.mrf.mxu0
    %v2755 = vadd.f32 %v2714, %v2754
    %v2756 = vpop.f32.mrf.mxu0
    %v2757 = vadd.f32 %v2716, %v2756
    %v2758 = vpop.f32.mrf.mxu0
    %v2759 = vpop.f32.mrf.mxu0
    %2760 = vdwg.mxu0
    %2761 = vmatprep.subr.bf16.mxu0 %v2146
    %2762 = vmatpush1.bf16.msra.mxu0 %v2145
    %2763 = vmatprep.subr.bf16.mxu0 %v2138
    %2764 = vmatpush1.bf16.msra.mxu0 %v2137
    %2765 = vmatprep.subr.bf16.mxu0 %v2130
    %2766 = vmatpush1.bf16.msra.mxu0 %v2129
    %2767 = vmatprep.subr.bf16.mxu0 %v2122
    %2768 = vmatpush1.bf16.msra.mxu0 %v2121
    %2769 = vmatprep.subr.bf16.mxu0 %v2114
    %2770 = vmatpush1.bf16.msra.mxu0 %v2113
    %2771 = vmatprep.subr.bf16.mxu0 %v2106
    %2772 = vmatpush1.bf16.msra.mxu0 %v2105
    %2773 = vmatprep.subr.bf16.mxu0 %v2098
    %2774 = vmatpush1.bf16.msra.mxu0 %v2097
    %2775 = vmatprep.subr.bf16.mxu0 %v2090
    %2776 = vmatpush1.bf16.msra.mxu0 %v2089
    %2777 = vmatprep.subr.bf16.mxu0 %v2210
    %2778 = vmatpush2.bf16.msra.mxu0 %v2209
    %2779 = vmatprep.subr.bf16.mxu0 %v2202
    %2780 = vmatpush2.bf16.msra.mxu0 %v2201
    %2781 = vmatprep.subr.bf16.mxu0 %v2194
    %2782 = vmatpush2.bf16.msra.mxu0 %v2193
    %2783 = vmatprep.subr.bf16.mxu0 %v2186
    %2784 = vmatpush2.bf16.msra.mxu0 %v2185
    %2785 = vmatprep.subr.bf16.mxu0 %v2178
    %2786 = vmatpush2.bf16.msra.mxu0 %v2177
    %2787 = vmatprep.subr.bf16.mxu0 %v2170
    %2788 = vmatpush2.bf16.msra.mxu0 %v2169
    %2789 = vmatprep.subr.bf16.mxu0 %v2162
    %2790 = vmatpush2.bf16.msra.mxu0 %v2161
    %2791 = vmatprep.subr.bf16.mxu0 %v2154
    %2792 = vmatpush2.bf16.msra.mxu0 %v2153
    %2793 = vmatprep.mubr.bf16.mxu0 %v1016
    %2794 = vmatmul.mubr.bf16.gmra.mxu0 %v1015
    %v2795 = vpop.f32.mrf.mxu0
    %v2796 = vadd.f32 %v1296, %v2795
    %v2797 = vpop.f32.mrf.mxu0
    %v2798 = vadd.f32 %v1300, %v2797
    %v2799 = vpop.f32.mrf.mxu0
    %v2800 = vpop.f32.mrf.mxu0
    %2801 = vdwg.mxu0
    %2802 = vmatprep.subr.bf16.mxu0 %v2274
    %2803 = vmatpush1.bf16.msra.mxu0 %v2273
    %2804 = vmatprep.subr.bf16.mxu0 %v2266
    %2805 = vmatpush1.bf16.msra.mxu0 %v2265
    %2806 = vmatprep.subr.bf16.mxu0 %v2258
    %2807 = vmatpush1.bf16.msra.mxu0 %v2257
    %2808 = vmatprep.subr.bf16.mxu0 %v2250
    %2809 = vmatpush1.bf16.msra.mxu0 %v2249
    %2810 = vmatprep.subr.bf16.mxu0 %v2242
    %2811 = vmatpush1.bf16.msra.mxu0 %v2241
    %2812 = vmatprep.subr.bf16.mxu0 %v2234
    %2813 = vmatpush1.bf16.msra.mxu0 %v2233
    %2814 = vmatprep.subr.bf16.mxu0 %v2226
    %2815 = vmatpush1.bf16.msra.mxu0 %v2225
    %2816 = vmatprep.subr.bf16.mxu0 %v2218
    %2817 = vmatpush1.bf16.msra.mxu0 %v2217
    %2818 = vmatprep.subr.bf16.mxu0 %v2338
    %2819 = vmatpush2.bf16.msra.mxu0 %v2337
    %2820 = vmatprep.subr.bf16.mxu0 %v2330
    %2821 = vmatpush2.bf16.msra.mxu0 %v2329
    %2822 = vmatprep.subr.bf16.mxu0 %v2322
    %2823 = vmatpush2.bf16.msra.mxu0 %v2321
    %2824 = vmatprep.subr.bf16.mxu0 %v2314
    %2825 = vmatpush2.bf16.msra.mxu0 %v2313
    %2826 = vmatprep.subr.bf16.mxu0 %v2306
    %2827 = vmatpush2.bf16.msra.mxu0 %v2305
    %2828 = vmatprep.subr.bf16.mxu0 %v2298
    %2829 = vmatpush2.bf16.msra.mxu0 %v2297
    %2830 = vmatprep.subr.bf16.mxu0 %v2290
    %2831 = vmatpush2.bf16.msra.mxu0 %v2289
    %2832 = vmatprep.subr.bf16.mxu0 %v2282
    %2833 = vmatpush2.bf16.msra.mxu0 %v2281
    %2834 = vmatprep.mubr.bf16.mxu0 %v1018
    %2835 = vmatmul.mubr.bf16.gmra.mxu0 %v1017
    %v2836 = vpop.f32.mrf.mxu0
    %v2837 = vadd.f32 %v2796, %v2836
    %v2838 = vpop.f32.mrf.mxu0
    %v2839 = vadd.f32 %v2798, %v2838
    %v2840 = vpop.f32.mrf.mxu0
    %v2841 = vpop.f32.mrf.mxu0
    %2842 = vdwg.mxu0
    %2843 = vmatprep.subr.bf16.mxu0 %v2148
    %2844 = vmatpush1.bf16.msra.mxu0 %v2147
    %2845 = vmatprep.subr.bf16.mxu0 %v2140
    %2846 = vmatpush1.bf16.msra.mxu0 %v2139
    %2847 = vmatprep.subr.bf16.mxu0 %v2132
    %2848 = vmatpush1.bf16.msra.mxu0 %v2131
    %2849 = vmatprep.subr.bf16.mxu0 %v2124
    %2850 = vmatpush1.bf16.msra.mxu0 %v2123
    %2851 = vmatprep.subr.bf16.mxu0 %v2116
    %2852 = vmatpush1.bf16.msra.mxu0 %v2115
    %2853 = vmatprep.subr.bf16.mxu0 %v2108
    %2854 = vmatpush1.bf16.msra.mxu0 %v2107
    %2855 = vmatprep.subr.bf16.mxu0 %v2100
    %2856 = vmatpush1.bf16.msra.mxu0 %v2099
    %2857 = vmatprep.subr.bf16.mxu0 %v2092
    %2858 = vmatpush1.bf16.msra.mxu0 %v2091
    %2859 = vmatprep.subr.bf16.mxu0 %v2212
    %2860 = vmatpush2.bf16.msra.mxu0 %v2211
    %2861 = vmatprep.subr.bf16.mxu0 %v2204
    %2862 = vmatpush2.bf16.msra.mxu0 %v2203
    %2863 = vmatprep.subr.bf16.mxu0 %v2196
    %2864 = vmatpush2.bf16.msra.mxu0 %v2195
    %2865 = vmatprep.subr.bf16.mxu0 %v2188
    %2866 = vmatpush2.bf16.msra.mxu0 %v2187
    %2867 = vmatprep.subr.bf16.mxu0 %v2180
    %2868 = vmatpush2.bf16.msra.mxu0 %v2179
    %2869 = vmatprep.subr.bf16.mxu0 %v2172
    %2870 = vmatpush2.bf16.msra.mxu0 %v2171
    %2871 = vmatprep.subr.bf16.mxu0 %v2164
    %2872 = vmatpush2.bf16.msra.mxu0 %v2163
    %2873 = vmatprep.subr.bf16.mxu0 %v2156
    %2874 = vmatpush2.bf16.msra.mxu0 %v2155
    %2875 = vmatprep.mubr.bf16.mxu0 %v1016
    %2876 = vmatmul.mubr.bf16.gmra.mxu0 %v1015
    %v2877 = vpop.f32.mrf.mxu0
    %v2878 = vadd.f32 %v1304, %v2877
    %v2879 = vpop.f32.mrf.mxu0
    %v2880 = vadd.f32 %v1308, %v2879
    %v2881 = vpop.f32.mrf.mxu0
    %v2882 = vpop.f32.mrf.mxu0
    %2883 = vdwg.mxu0
    %2884 = vmatprep.subr.bf16.mxu0 %v2276
    %2885 = vmatpush1.bf16.msra.mxu0 %v2275
    %2886 = vmatprep.subr.bf16.mxu0 %v2268
    %2887 = vmatpush1.bf16.msra.mxu0 %v2267
    %2888 = vmatprep.subr.bf16.mxu0 %v2260
    %2889 = vmatpush1.bf16.msra.mxu0 %v2259
    %2890 = vmatprep.subr.bf16.mxu0 %v2252
    %2891 = vmatpush1.bf16.msra.mxu0 %v2251
    %2892 = vmatprep.subr.bf16.mxu0 %v2244
    %2893 = vmatpush1.bf16.msra.mxu0 %v2243
    %2894 = vmatprep.subr.bf16.mxu0 %v2236
    %2895 = vmatpush1.bf16.msra.mxu0 %v2235
    %2896 = vmatprep.subr.bf16.mxu0 %v2228
    %2897 = vmatpush1.bf16.msra.mxu0 %v2227
    %2898 = vmatprep.subr.bf16.mxu0 %v2220
    %2899 = vmatpush1.bf16.msra.mxu0 %v2219
    %2900 = vmatprep.subr.bf16.mxu0 %v2340
    %2901 = vmatpush2.bf16.msra.mxu0 %v2339
    %2902 = vmatprep.subr.bf16.mxu0 %v2332
    %2903 = vmatpush2.bf16.msra.mxu0 %v2331
    %2904 = vmatprep.subr.bf16.mxu0 %v2324
    %2905 = vmatpush2.bf16.msra.mxu0 %v2323
    %2906 = vmatprep.subr.bf16.mxu0 %v2316
    %2907 = vmatpush2.bf16.msra.mxu0 %v2315
    %2908 = vmatprep.subr.bf16.mxu0 %v2308
    %2909 = vmatpush2.bf16.msra.mxu0 %v2307
    %2910 = vmatprep.subr.bf16.mxu0 %v2300
    %2911 = vmatpush2.bf16.msra.mxu0 %v2299
    %2912 = vmatprep.subr.bf16.mxu0 %v2292
    %2913 = vmatpush2.bf16.msra.mxu0 %v2291
    %2914 = vmatprep.subr.bf16.mxu0 %v2284
    %2915 = vmatpush2.bf16.msra.mxu0 %v2283
    %2916 = vmatprep.mubr.bf16.mxu0 %v1018
    %2917 = vmatmul.mubr.bf16.gmra.mxu0 %v1017
    %v2918 = vpop.f32.mrf.mxu0
    %v2919 = vadd.f32 %v2878, %v2918
    %v2920 = vpop.f32.mrf.mxu0
    %v2921 = vadd.f32 %v2880, %v2920
    %v2922 = vpop.f32.mrf.mxu0
    %v2923 = vpop.f32.mrf.mxu0
    %2924 = vdwg.mxu0
    %vm2925 = vcmp.gt.f32.partialorder %v2673, 0.0
    %vm2926 = vcmp.gt.f32.partialorder %v2675, 0.0
    %vm2927 = vcmp.gt.f32.partialorder %v2755, 0.0
    %vm2928 = vcmp.gt.f32.partialorder %v2757, 0.0
    %vm2929 = vcmp.gt.f32.partialorder %v2837, 0.0
    %vm2930 = vcmp.gt.f32.partialorder %v2839, 0.0
    %vm2931 = vcmp.gt.f32.partialorder %v2919, 0.0
    %vm2932 = vcmp.gt.f32.partialorder %v2921, 0.0
    %v2933 = vmul.f32 %v2673, 0.2
    %v2934 = vmul.f32 %v2675, 0.2
    %v2935 = vmul.f32 %v2755, 0.2
    %v2936 = vmul.f32 %v2757, 0.2
    %v2937 = vmul.f32 %v2837, 0.2
    %v2938 = vmul.f32 %v2839, 0.2
    %v2939 = vmul.f32 %v2919, 0.2
    %v2940 = vmul.f32 %v2921, 0.2
    %v2941 = vsel %vm2925, %v2673, %v2933
    %v2942 = vsel %vm2926, %v2675, %v2934
    %v2943 = vsel %vm2927, %v2755, %v2935
    %v2944 = vsel %vm2928, %v2757, %v2936
    %v2945 = vsel %vm2929, %v2837, %v2937
    %v2946 = vsel %vm2930, %v2839, %v2938
    %v2947 = vsel %vm2931, %v2919, %v2939
    %v2948 = vsel %vm2932, %v2921, %v2940
    %v2949 = vpack.c.bf16 %v2941, %v2941
    %v2950 = vpack.c.bf16 %v2942, %v2942
    %v2951 = vpack.c.bf16 %v2943, %v2943
    %v2952 = vpack.c.bf16 %v2944, %v2944
    %v2953 = vpack.c.bf16 %v2945, %v2945
    %v2954 = vpack.c.bf16 %v2946, %v2946
    %v2955 = vpack.c.bf16 %v2947, %v2947
    %v2956 = vpack.c.bf16 %v2948, %v2948
    %v2957 = vld [vmem:[#allocation11] sm:$0xff]
    %v2958 = vld [vmem:[#allocation11 + $0x8] sm:$0xff]
    %v2959 = vld [vmem:[#allocation11 + $0x10] sm:$0xff]
    %v2960 = vld [vmem:[#allocation11 + $0x18] sm:$0xff]
    %v2961 = vld [vmem:[#allocation11 + $0x20] sm:$0xff]
    %v2962 = vld [vmem:[#allocation11 + $0x28] sm:$0xff]
    %v2963 = vld [vmem:[#allocation11 + $0x30] sm:$0xff]
    %v2964 = vld [vmem:[#allocation11 + $0x38] sm:$0xff]
    %v2965 = vld [vmem:[#allocation11 + $0x40] sm:$0xff]
    %v2966 = vld [vmem:[#allocation11 + $0x48] sm:$0xff]
    %v2967 = vld [vmem:[#allocation11 + $0x50] sm:$0xff]
    %v2968 = vld [vmem:[#allocation11 + $0x58] sm:$0xff]
    %v2969 = vld [vmem:[#allocation11 + $0x60] sm:$0xff]
    %v2970 = vld [vmem:[#allocation11 + $0x68] sm:$0xff]
    %v2971 = vld [vmem:[#allocation11 + $0x70] sm:$0xff]
    %v2972 = vld [vmem:[#allocation11 + $0x78] sm:$0xff]
    %v2973 = vld [vmem:[#allocation11 + $0x80] sm:$0xff]
    %v2974 = vld [vmem:[#allocation11 + $0x88] sm:$0xff]
    %v2975 = vld [vmem:[#allocation11 + $0x90] sm:$0xff]
    %v2976 = vld [vmem:[#allocation11 + $0x98] sm:$0xff]
    %v2977 = vld [vmem:[#allocation11 + $0xa0] sm:$0xff]
    %v2978 = vld [vmem:[#allocation11 + $0xa8] sm:$0xff]
    %v2979 = vld [vmem:[#allocation11 + $0xb0] sm:$0xff]
    %v2980 = vld [vmem:[#allocation11 + $0xb8] sm:$0xff]
    %v2981 = vld [vmem:[#allocation11 + $0xc0] sm:$0xff]
    %v2982 = vld [vmem:[#allocation11 + $0xc8] sm:$0xff]
    %v2983 = vld [vmem:[#allocation11 + $0xd0] sm:$0xff]
    %v2984 = vld [vmem:[#allocation11 + $0xd8] sm:$0xff]
    %v2985 = vld [vmem:[#allocation11 + $0xe0] sm:$0xff]
    %v2986 = vld [vmem:[#allocation11 + $0xe8] sm:$0xff]
    %v2987 = vld [vmem:[#allocation11 + $0xf0] sm:$0xff]
    %v2988 = vld [vmem:[#allocation11 + $0xf8] sm:$0xff]
    %v2989 = vld [vmem:[#allocation11 + $0x100] sm:$0xff]
    %v2990 = vld [vmem:[#allocation11 + $0x108] sm:$0xff]
    %v2991 = vld [vmem:[#allocation11 + $0x110] sm:$0xff]
    %v2992 = vld [vmem:[#allocation11 + $0x118] sm:$0xff]
    %v2993 = vld [vmem:[#allocation11 + $0x120] sm:$0xff]
    %v2994 = vld [vmem:[#allocation11 + $0x128] sm:$0xff]
    %v2995 = vld [vmem:[#allocation11 + $0x130] sm:$0xff]
    %v2996 = vld [vmem:[#allocation11 + $0x138] sm:$0xff]
    %v2997 = vld [vmem:[#allocation11 + $0x140] sm:$0xff]
    %v2998 = vld [vmem:[#allocation11 + $0x148] sm:$0xff]
    %v2999 = vld [vmem:[#allocation11 + $0x150] sm:$0xff]
    %v3000 = vld [vmem:[#allocation11 + $0x158] sm:$0xff]
    %v3001 = vld [vmem:[#allocation11 + $0x160] sm:$0xff]
    %v3002 = vld [vmem:[#allocation11 + $0x168] sm:$0xff]
    %v3003 = vld [vmem:[#allocation11 + $0x170] sm:$0xff]
    %v3004 = vld [vmem:[#allocation11 + $0x178] sm:$0xff]
    %v3005 = vld [vmem:[#allocation11 + $0x180] sm:$0xff]
    %v3006 = vld [vmem:[#allocation11 + $0x188] sm:$0xff]
    %v3007 = vld [vmem:[#allocation11 + $0x190] sm:$0xff]
    %v3008 = vld [vmem:[#allocation11 + $0x198] sm:$0xff]
    %v3009 = vld [vmem:[#allocation11 + $0x1a0] sm:$0xff]
    %v3010 = vld [vmem:[#allocation11 + $0x1a8] sm:$0xff]
    %v3011 = vld [vmem:[#allocation11 + $0x1b0] sm:$0xff]
    %v3012 = vld [vmem:[#allocation11 + $0x1b8] sm:$0xff]
    %v3013 = vld [vmem:[#allocation11 + $0x1c0] sm:$0xff]
    %v3014 = vld [vmem:[#allocation11 + $0x1c8] sm:$0xff]
    %v3015 = vld [vmem:[#allocation11 + $0x1d0] sm:$0xff]
    %v3016 = vld [vmem:[#allocation11 + $0x1d8] sm:$0xff]
    %v3017 = vld [vmem:[#allocation11 + $0x1e0] sm:$0xff]
    %v3018 = vld [vmem:[#allocation11 + $0x1e8] sm:$0xff]
    %v3019 = vld [vmem:[#allocation11 + $0x1f0] sm:$0xff]
    %v3020 = vld [vmem:[#allocation11 + $0x1f8] sm:$0xff]
    %v3021 = vld [vmem:[#allocation11 + $0x200] sm:$0xff]
    %v3022 = vld [vmem:[#allocation11 + $0x208] sm:$0xff]
    %v3023 = vld [vmem:[#allocation11 + $0x210] sm:$0xff]
    %v3024 = vld [vmem:[#allocation11 + $0x218] sm:$0xff]
    %v3025 = vld [vmem:[#allocation11 + $0x220] sm:$0xff]
    %v3026 = vld [vmem:[#allocation11 + $0x228] sm:$0xff]
    %v3027 = vld [vmem:[#allocation11 + $0x230] sm:$0xff]
    %v3028 = vld [vmem:[#allocation11 + $0x238] sm:$0xff]
    %v3029 = vld [vmem:[#allocation11 + $0x240] sm:$0xff]
    %v3030 = vld [vmem:[#allocation11 + $0x248] sm:$0xff]
    %v3031 = vld [vmem:[#allocation11 + $0x250] sm:$0xff]
    %v3032 = vld [vmem:[#allocation11 + $0x258] sm:$0xff]
    %v3033 = vld [vmem:[#allocation11 + $0x260] sm:$0xff]
    %v3034 = vld [vmem:[#allocation11 + $0x268] sm:$0xff]
    %v3035 = vld [vmem:[#allocation11 + $0x270] sm:$0xff]
    %v3036 = vld [vmem:[#allocation11 + $0x278] sm:$0xff]
    %v3037 = vld [vmem:[#allocation11 + $0x280] sm:$0xff]
    %v3038 = vld [vmem:[#allocation11 + $0x288] sm:$0xff]
    %v3039 = vld [vmem:[#allocation11 + $0x290] sm:$0xff]
    %v3040 = vld [vmem:[#allocation11 + $0x298] sm:$0xff]
    %v3041 = vld [vmem:[#allocation11 + $0x2a0] sm:$0xff]
    %v3042 = vld [vmem:[#allocation11 + $0x2a8] sm:$0xff]
    %v3043 = vld [vmem:[#allocation11 + $0x2b0] sm:$0xff]
    %v3044 = vld [vmem:[#allocation11 + $0x2b8] sm:$0xff]
    %v3045 = vld [vmem:[#allocation11 + $0x2c0] sm:$0xff]
    %v3046 = vld [vmem:[#allocation11 + $0x2c8] sm:$0xff]
    %v3047 = vld [vmem:[#allocation11 + $0x2d0] sm:$0xff]
    %v3048 = vld [vmem:[#allocation11 + $0x2d8] sm:$0xff]
    %v3049 = vld [vmem:[#allocation11 + $0x2e0] sm:$0xff]
    %v3050 = vld [vmem:[#allocation11 + $0x2e8] sm:$0xff]
    %v3051 = vld [vmem:[#allocation11 + $0x2f0] sm:$0xff]
    %v3052 = vld [vmem:[#allocation11 + $0x2f8] sm:$0xff]
    %v3053 = vld [vmem:[#allocation11 + $0x300] sm:$0xff]
    %v3054 = vld [vmem:[#allocation11 + $0x308] sm:$0xff]
    %v3055 = vld [vmem:[#allocation11 + $0x310] sm:$0xff]
    %v3056 = vld [vmem:[#allocation11 + $0x318] sm:$0xff]
    %v3057 = vld [vmem:[#allocation11 + $0x320] sm:$0xff]
    %v3058 = vld [vmem:[#allocation11 + $0x328] sm:$0xff]
    %v3059 = vld [vmem:[#allocation11 + $0x330] sm:$0xff]
    %v3060 = vld [vmem:[#allocation11 + $0x338] sm:$0xff]
    %v3061 = vld [vmem:[#allocation11 + $0x340] sm:$0xff]
    %v3062 = vld [vmem:[#allocation11 + $0x348] sm:$0xff]
    %v3063 = vld [vmem:[#allocation11 + $0x350] sm:$0xff]
    %v3064 = vld [vmem:[#allocation11 + $0x358] sm:$0xff]
    %v3065 = vld [vmem:[#allocation11 + $0x360] sm:$0xff]
    %v3066 = vld [vmem:[#allocation11 + $0x368] sm:$0xff]
    %v3067 = vld [vmem:[#allocation11 + $0x370] sm:$0xff]
    %v3068 = vld [vmem:[#allocation11 + $0x378] sm:$0xff]
    %v3069 = vld [vmem:[#allocation11 + $0x380] sm:$0xff]
    %v3070 = vld [vmem:[#allocation11 + $0x388] sm:$0xff]
    %v3071 = vld [vmem:[#allocation11 + $0x390] sm:$0xff]
    %v3072 = vld [vmem:[#allocation11 + $0x398] sm:$0xff]
    %v3073 = vld [vmem:[#allocation11 + $0x3a0] sm:$0xff]
    %v3074 = vld [vmem:[#allocation11 + $0x3a8] sm:$0xff]
    %v3075 = vld [vmem:[#allocation11 + $0x3b0] sm:$0xff]
    %v3076 = vld [vmem:[#allocation11 + $0x3b8] sm:$0xff]
    %v3077 = vld [vmem:[#allocation11 + $0x3c0] sm:$0xff]
    %v3078 = vld [vmem:[#allocation11 + $0x3c8] sm:$0xff]
    %v3079 = vld [vmem:[#allocation11 + $0x3d0] sm:$0xff]
    %v3080 = vld [vmem:[#allocation11 + $0x3d8] sm:$0xff]
    %v3081 = vld [vmem:[#allocation11 + $0x3e0] sm:$0xff]
    %v3082 = vld [vmem:[#allocation11 + $0x3e8] sm:$0xff]
    %v3083 = vld [vmem:[#allocation11 + $0x3f0] sm:$0xff]
    %v3084 = vld [vmem:[#allocation11 + $0x3f8] sm:$0xff]
    %v3085 = vld [vmem:[%s8] sm:$0x3]
    %v3087 = vlaneseq
    %v3088 = vshrl.u32 %v3087, 7
    %v3089 = vsub.s32 0, %v3088
    %v3090 = vrot.slane %v3085, %v3089
    %v3091 = vlaneseq
    %v3092 = vshrl.u32 %v3091, 7
    %v3093 = vsub.s32 1, %v3092
    %v3094 = vrot.slane %v3085, %v3093
    %v3225 = vunpack.c.l.b16 %v2957
    %v3226 = vunpack.c.h.b16 %v2957
    %v3227 = vunpack.c.l.b16 %v2958
    %v3228 = vunpack.c.h.b16 %v2958
    %v3229 = vunpack.c.l.b16 %v2959
    %v3230 = vunpack.c.h.b16 %v2959
    %v3231 = vunpack.c.l.b16 %v2960
    %v3232 = vunpack.c.h.b16 %v2960
    %v3233 = vunpack.c.l.b16 %v2961
    %v3234 = vunpack.c.h.b16 %v2961
    %v3235 = vunpack.c.l.b16 %v2962
    %v3236 = vunpack.c.h.b16 %v2962
    %v3237 = vunpack.c.l.b16 %v2963
    %v3238 = vunpack.c.h.b16 %v2963
    %v3239 = vunpack.c.l.b16 %v2964
    %v3240 = vunpack.c.h.b16 %v2964
    %v3241 = vunpack.c.l.b16 %v2965
    %v3242 = vunpack.c.h.b16 %v2965
    %v3243 = vunpack.c.l.b16 %v2966
    %v3244 = vunpack.c.h.b16 %v2966
    %v3245 = vunpack.c.l.b16 %v2967
    %v3246 = vunpack.c.h.b16 %v2967
    %v3247 = vunpack.c.l.b16 %v2968
    %v3248 = vunpack.c.h.b16 %v2968
    %v3249 = vunpack.c.l.b16 %v2969
    %v3250 = vunpack.c.h.b16 %v2969
    %v3251 = vunpack.c.l.b16 %v2970
    %v3252 = vunpack.c.h.b16 %v2970
    %v3253 = vunpack.c.l.b16 %v2971
    %v3254 = vunpack.c.h.b16 %v2971
    %v3255 = vunpack.c.l.b16 %v2972
    %v3256 = vunpack.c.h.b16 %v2972
    %v3257 = vunpack.c.l.b16 %v2973
    %v3258 = vunpack.c.h.b16 %v2973
    %v3259 = vunpack.c.l.b16 %v2974
    %v3260 = vunpack.c.h.b16 %v2974
    %v3261 = vunpack.c.l.b16 %v2975
    %v3262 = vunpack.c.h.b16 %v2975
    %v3263 = vunpack.c.l.b16 %v2976
    %v3264 = vunpack.c.h.b16 %v2976
    %v3265 = vunpack.c.l.b16 %v2977
    %v3266 = vunpack.c.h.b16 %v2977
    %v3267 = vunpack.c.l.b16 %v2978
    %v3268 = vunpack.c.h.b16 %v2978
    %v3269 = vunpack.c.l.b16 %v2979
    %v3270 = vunpack.c.h.b16 %v2979
    %v3271 = vunpack.c.l.b16 %v2980
    %v3272 = vunpack.c.h.b16 %v2980
    %v3273 = vunpack.c.l.b16 %v2981
    %v3274 = vunpack.c.h.b16 %v2981
    %v3275 = vunpack.c.l.b16 %v2982
    %v3276 = vunpack.c.h.b16 %v2982
    %v3277 = vunpack.c.l.b16 %v2983
    %v3278 = vunpack.c.h.b16 %v2983
    %v3279 = vunpack.c.l.b16 %v2984
    %v3280 = vunpack.c.h.b16 %v2984
    %v3281 = vunpack.c.l.b16 %v2985
    %v3282 = vunpack.c.h.b16 %v2985
    %v3283 = vunpack.c.l.b16 %v2986
    %v3284 = vunpack.c.h.b16 %v2986
    %v3285 = vunpack.c.l.b16 %v2987
    %v3286 = vunpack.c.h.b16 %v2987
    %v3287 = vunpack.c.l.b16 %v2988
    %v3288 = vunpack.c.h.b16 %v2988
    %v3289 = vunpack.c.l.b16 %v2989
    %v3290 = vunpack.c.h.b16 %v2989
    %v3291 = vunpack.c.l.b16 %v2990
    %v3292 = vunpack.c.h.b16 %v2990
    %v3293 = vunpack.c.l.b16 %v2991
    %v3294 = vunpack.c.h.b16 %v2991
    %v3295 = vunpack.c.l.b16 %v2992
    %v3296 = vunpack.c.h.b16 %v2992
    %v3297 = vunpack.c.l.b16 %v2993
    %v3298 = vunpack.c.h.b16 %v2993
    %v3299 = vunpack.c.l.b16 %v2994
    %v3300 = vunpack.c.h.b16 %v2994
    %v3301 = vunpack.c.l.b16 %v2995
    %v3302 = vunpack.c.h.b16 %v2995
    %v3303 = vunpack.c.l.b16 %v2996
    %v3304 = vunpack.c.h.b16 %v2996
    %v3305 = vunpack.c.l.b16 %v2997
    %v3306 = vunpack.c.h.b16 %v2997
    %v3307 = vunpack.c.l.b16 %v2998
    %v3308 = vunpack.c.h.b16 %v2998
    %v3309 = vunpack.c.l.b16 %v2999
    %v3310 = vunpack.c.h.b16 %v2999
    %v3311 = vunpack.c.l.b16 %v3000
    %v3312 = vunpack.c.h.b16 %v3000
    %v3313 = vunpack.c.l.b16 %v3001
    %v3314 = vunpack.c.h.b16 %v3001
    %v3315 = vunpack.c.l.b16 %v3002
    %v3316 = vunpack.c.h.b16 %v3002
    %v3317 = vunpack.c.l.b16 %v3003
    %v3318 = vunpack.c.h.b16 %v3003
    %v3319 = vunpack.c.l.b16 %v3004
    %v3320 = vunpack.c.h.b16 %v3004
    %v3321 = vunpack.c.l.b16 %v3005
    %v3322 = vunpack.c.h.b16 %v3005
    %v3323 = vunpack.c.l.b16 %v3006
    %v3324 = vunpack.c.h.b16 %v3006
    %v3325 = vunpack.c.l.b16 %v3007
    %v3326 = vunpack.c.h.b16 %v3007
    %v3327 = vunpack.c.l.b16 %v3008
    %v3328 = vunpack.c.h.b16 %v3008
    %v3329 = vunpack.c.l.b16 %v3009
    %v3330 = vunpack.c.h.b16 %v3009
    %v3331 = vunpack.c.l.b16 %v3010
    %v3332 = vunpack.c.h.b16 %v3010
    %v3333 = vunpack.c.l.b16 %v3011
    %v3334 = vunpack.c.h.b16 %v3011
    %v3335 = vunpack.c.l.b16 %v3012
    %v3336 = vunpack.c.h.b16 %v3012
    %v3337 = vunpack.c.l.b16 %v3013
    %v3338 = vunpack.c.h.b16 %v3013
    %v3339 = vunpack.c.l.b16 %v3014
    %v3340 = vunpack.c.h.b16 %v3014
    %v3341 = vunpack.c.l.b16 %v3015
    %v3342 = vunpack.c.h.b16 %v3015
    %v3343 = vunpack.c.l.b16 %v3016
    %v3344 = vunpack.c.h.b16 %v3016
    %v3345 = vunpack.c.l.b16 %v3017
    %v3346 = vunpack.c.h.b16 %v3017
    %v3347 = vunpack.c.l.b16 %v3018
    %v3348 = vunpack.c.h.b16 %v3018
    %v3349 = vunpack.c.l.b16 %v3019
    %v3350 = vunpack.c.h.b16 %v3019
    %v3351 = vunpack.c.l.b16 %v3020
    %v3352 = vunpack.c.h.b16 %v3020
    %v3353 = vunpack.c.l.b16 %v3021
    %v3354 = vunpack.c.h.b16 %v3021
    %v3355 = vunpack.c.l.b16 %v3022
    %v3356 = vunpack.c.h.b16 %v3022
    %v3357 = vunpack.c.l.b16 %v3023
    %v3358 = vunpack.c.h.b16 %v3023
    %v3359 = vunpack.c.l.b16 %v3024
    %v3360 = vunpack.c.h.b16 %v3024
    %v3361 = vunpack.c.l.b16 %v3025
    %v3362 = vunpack.c.h.b16 %v3025
    %v3363 = vunpack.c.l.b16 %v3026
    %v3364 = vunpack.c.h.b16 %v3026
    %v3365 = vunpack.c.l.b16 %v3027
    %v3366 = vunpack.c.h.b16 %v3027
    %v3367 = vunpack.c.l.b16 %v3028
    %v3368 = vunpack.c.h.b16 %v3028
    %v3369 = vunpack.c.l.b16 %v3029
    %v3370 = vunpack.c.h.b16 %v3029
    %v3371 = vunpack.c.l.b16 %v3030
    %v3372 = vunpack.c.h.b16 %v3030
    %v3373 = vunpack.c.l.b16 %v3031
    %v3374 = vunpack.c.h.b16 %v3031
    %v3375 = vunpack.c.l.b16 %v3032
    %v3376 = vunpack.c.h.b16 %v3032
    %v3377 = vunpack.c.l.b16 %v3033
    %v3378 = vunpack.c.h.b16 %v3033
    %v3379 = vunpack.c.l.b16 %v3034
    %v3380 = vunpack.c.h.b16 %v3034
    %v3381 = vunpack.c.l.b16 %v3035
    %v3382 = vunpack.c.h.b16 %v3035
    %v3383 = vunpack.c.l.b16 %v3036
    %v3384 = vunpack.c.h.b16 %v3036
    %v3385 = vunpack.c.l.b16 %v3037
    %v3386 = vunpack.c.h.b16 %v3037
    %v3387 = vunpack.c.l.b16 %v3038
    %v3388 = vunpack.c.h.b16 %v3038
    %v3389 = vunpack.c.l.b16 %v3039
    %v3390 = vunpack.c.h.b16 %v3039
    %v3391 = vunpack.c.l.b16 %v3040
    %v3392 = vunpack.c.h.b16 %v3040
    %v3393 = vunpack.c.l.b16 %v3041
    %v3394 = vunpack.c.h.b16 %v3041
    %v3395 = vunpack.c.l.b16 %v3042
    %v3396 = vunpack.c.h.b16 %v3042
    %v3397 = vunpack.c.l.b16 %v3043
    %v3398 = vunpack.c.h.b16 %v3043
    %v3399 = vunpack.c.l.b16 %v3044
    %v3400 = vunpack.c.h.b16 %v3044
    %v3401 = vunpack.c.l.b16 %v3045
    %v3402 = vunpack.c.h.b16 %v3045
    %v3403 = vunpack.c.l.b16 %v3046
    %v3404 = vunpack.c.h.b16 %v3046
    %v3405 = vunpack.c.l.b16 %v3047
    %v3406 = vunpack.c.h.b16 %v3047
    %v3407 = vunpack.c.l.b16 %v3048
    %v3408 = vunpack.c.h.b16 %v3048
    %v3409 = vunpack.c.l.b16 %v3049
    %v3410 = vunpack.c.h.b16 %v3049
    %v3411 = vunpack.c.l.b16 %v3050
    %v3412 = vunpack.c.h.b16 %v3050
    %v3413 = vunpack.c.l.b16 %v3051
    %v3414 = vunpack.c.h.b16 %v3051
    %v3415 = vunpack.c.l.b16 %v3052
    %v3416 = vunpack.c.h.b16 %v3052
    %v3417 = vunpack.c.l.b16 %v3053
    %v3418 = vunpack.c.h.b16 %v3053
    %v3419 = vunpack.c.l.b16 %v3054
    %v3420 = vunpack.c.h.b16 %v3054
    %v3421 = vunpack.c.l.b16 %v3055
    %v3422 = vunpack.c.h.b16 %v3055
    %v3423 = vunpack.c.l.b16 %v3056
    %v3424 = vunpack.c.h.b16 %v3056
    %v3425 = vunpack.c.l.b16 %v3057
    %v3426 = vunpack.c.h.b16 %v3057
    %v3427 = vunpack.c.l.b16 %v3058
    %v3428 = vunpack.c.h.b16 %v3058
    %v3429 = vunpack.c.l.b16 %v3059
    %v3430 = vunpack.c.h.b16 %v3059
    %v3431 = vunpack.c.l.b16 %v3060
    %v3432 = vunpack.c.h.b16 %v3060
    %v3433 = vunpack.c.l.b16 %v3061
    %v3434 = vunpack.c.h.b16 %v3061
    %v3435 = vunpack.c.l.b16 %v3062
    %v3436 = vunpack.c.h.b16 %v3062
    %v3437 = vunpack.c.l.b16 %v3063
    %v3438 = vunpack.c.h.b16 %v3063
    %v3439 = vunpack.c.l.b16 %v3064
    %v3440 = vunpack.c.h.b16 %v3064
    %v3441 = vunpack.c.l.b16 %v3065
    %v3442 = vunpack.c.h.b16 %v3065
    %v3443 = vunpack.c.l.b16 %v3066
    %v3444 = vunpack.c.h.b16 %v3066
    %v3445 = vunpack.c.l.b16 %v3067
    %v3446 = vunpack.c.h.b16 %v3067
    %v3447 = vunpack.c.l.b16 %v3068
    %v3448 = vunpack.c.h.b16 %v3068
    %v3449 = vunpack.c.l.b16 %v3069
    %v3450 = vunpack.c.h.b16 %v3069
    %v3451 = vunpack.c.l.b16 %v3070
    %v3452 = vunpack.c.h.b16 %v3070
    %v3453 = vunpack.c.l.b16 %v3071
    %v3454 = vunpack.c.h.b16 %v3071
    %v3455 = vunpack.c.l.b16 %v3072
    %v3456 = vunpack.c.h.b16 %v3072
    %v3457 = vunpack.c.l.b16 %v3073
    %v3458 = vunpack.c.h.b16 %v3073
    %v3459 = vunpack.c.l.b16 %v3074
    %v3460 = vunpack.c.h.b16 %v3074
    %v3461 = vunpack.c.l.b16 %v3075
    %v3462 = vunpack.c.h.b16 %v3075
    %v3463 = vunpack.c.l.b16 %v3076
    %v3464 = vunpack.c.h.b16 %v3076
    %v3465 = vunpack.c.l.b16 %v3077
    %v3466 = vunpack.c.h.b16 %v3077
    %v3467 = vunpack.c.l.b16 %v3078
    %v3468 = vunpack.c.h.b16 %v3078
    %v3469 = vunpack.c.l.b16 %v3079
    %v3470 = vunpack.c.h.b16 %v3079
    %v3471 = vunpack.c.l.b16 %v3080
    %v3472 = vunpack.c.h.b16 %v3080
    %v3473 = vunpack.c.l.b16 %v3081
    %v3474 = vunpack.c.h.b16 %v3081
    %v3475 = vunpack.c.l.b16 %v3082
    %v3476 = vunpack.c.h.b16 %v3082
    %v3477 = vunpack.c.l.b16 %v3083
    %v3478 = vunpack.c.h.b16 %v3083
    %v3479 = vunpack.c.l.b16 %v3084
    %v3480 = vunpack.c.h.b16 %v3084
    %v3481 = vpack.c.b16 %v3227, %v3225
    %v3482 = vpack.c.b16 %v3228, %v3226
    %v3483 = vpack.c.b16 %v3231, %v3229
    %v3484 = vpack.c.b16 %v3232, %v3230
    %v3485 = vpack.c.b16 %v3235, %v3233
    %v3486 = vpack.c.b16 %v3236, %v3234
    %v3487 = vpack.c.b16 %v3239, %v3237
    %v3488 = vpack.c.b16 %v3240, %v3238
    %v3489 = vpack.c.b16 %v3243, %v3241
    %v3490 = vpack.c.b16 %v3244, %v3242
    %v3491 = vpack.c.b16 %v3247, %v3245
    %v3492 = vpack.c.b16 %v3248, %v3246
    %v3493 = vpack.c.b16 %v3251, %v3249
    %v3494 = vpack.c.b16 %v3252, %v3250
    %v3495 = vpack.c.b16 %v3255, %v3253
    %v3496 = vpack.c.b16 %v3256, %v3254
    %v3497 = vpack.c.b16 %v3259, %v3257
    %v3498 = vpack.c.b16 %v3260, %v3258
    %v3499 = vpack.c.b16 %v3263, %v3261
    %v3500 = vpack.c.b16 %v3264, %v3262
    %v3501 = vpack.c.b16 %v3267, %v3265
    %v3502 = vpack.c.b16 %v3268, %v3266
    %v3503 = vpack.c.b16 %v3271, %v3269
    %v3504 = vpack.c.b16 %v3272, %v3270
    %v3505 = vpack.c.b16 %v3275, %v3273
    %v3506 = vpack.c.b16 %v3276, %v3274
    %v3507 = vpack.c.b16 %v3279, %v3277
    %v3508 = vpack.c.b16 %v3280, %v3278
    %v3509 = vpack.c.b16 %v3283, %v3281
    %v3510 = vpack.c.b16 %v3284, %v3282
    %v3511 = vpack.c.b16 %v3287, %v3285
    %v3512 = vpack.c.b16 %v3288, %v3286
    %v3513 = vpack.c.b16 %v3291, %v3289
    %v3514 = vpack.c.b16 %v3292, %v3290
    %v3515 = vpack.c.b16 %v3295, %v3293
    %v3516 = vpack.c.b16 %v3296, %v3294
    %v3517 = vpack.c.b16 %v3299, %v3297
    %v3518 = vpack.c.b16 %v3300, %v3298
    %v3519 = vpack.c.b16 %v3303, %v3301
    %v3520 = vpack.c.b16 %v3304, %v3302
    %v3521 = vpack.c.b16 %v3307, %v3305
    %v3522 = vpack.c.b16 %v3308, %v3306
    %v3523 = vpack.c.b16 %v3311, %v3309
    %v3524 = vpack.c.b16 %v3312, %v3310
    %v3525 = vpack.c.b16 %v3315, %v3313
    %v3526 = vpack.c.b16 %v3316, %v3314
    %v3527 = vpack.c.b16 %v3319, %v3317
    %v3528 = vpack.c.b16 %v3320, %v3318
    %v3529 = vpack.c.b16 %v3323, %v3321
    %v3530 = vpack.c.b16 %v3324, %v3322
    %v3531 = vpack.c.b16 %v3327, %v3325
    %v3532 = vpack.c.b16 %v3328, %v3326
    %v3533 = vpack.c.b16 %v3331, %v3329
    %v3534 = vpack.c.b16 %v3332, %v3330
    %v3535 = vpack.c.b16 %v3335, %v3333
    %v3536 = vpack.c.b16 %v3336, %v3334
    %v3537 = vpack.c.b16 %v3339, %v3337
    %v3538 = vpack.c.b16 %v3340, %v3338
    %v3539 = vpack.c.b16 %v3343, %v3341
    %v3540 = vpack.c.b16 %v3344, %v3342
    %v3541 = vpack.c.b16 %v3347, %v3345
    %v3542 = vpack.c.b16 %v3348, %v3346
    %v3543 = vpack.c.b16 %v3351, %v3349
    %v3544 = vpack.c.b16 %v3352, %v3350
    %v3545 = vpack.c.b16 %v3355, %v3353
    %v3546 = vpack.c.b16 %v3356, %v3354
    %v3547 = vpack.c.b16 %v3359, %v3357
    %v3548 = vpack.c.b16 %v3360, %v3358
    %v3549 = vpack.c.b16 %v3363, %v3361
    %v3550 = vpack.c.b16 %v3364, %v3362
    %v3551 = vpack.c.b16 %v3367, %v3365
    %v3552 = vpack.c.b16 %v3368, %v3366
    %v3553 = vpack.c.b16 %v3371, %v3369
    %v3554 = vpack.c.b16 %v3372, %v3370
    %v3555 = vpack.c.b16 %v3375, %v3373
    %v3556 = vpack.c.b16 %v3376, %v3374
    %v3557 = vpack.c.b16 %v3379, %v3377
    %v3558 = vpack.c.b16 %v3380, %v3378
    %v3559 = vpack.c.b16 %v3383, %v3381
    %v3560 = vpack.c.b16 %v3384, %v3382
    %v3561 = vpack.c.b16 %v3387, %v3385
    %v3562 = vpack.c.b16 %v3388, %v3386
    %v3563 = vpack.c.b16 %v3391, %v3389
    %v3564 = vpack.c.b16 %v3392, %v3390
    %v3565 = vpack.c.b16 %v3395, %v3393
    %v3566 = vpack.c.b16 %v3396, %v3394
    %v3567 = vpack.c.b16 %v3399, %v3397
    %v3568 = vpack.c.b16 %v3400, %v3398
    %v3569 = vpack.c.b16 %v3403, %v3401
    %v3570 = vpack.c.b16 %v3404, %v3402
    %v3571 = vpack.c.b16 %v3407, %v3405
    %v3572 = vpack.c.b16 %v3408, %v3406
    %v3573 = vpack.c.b16 %v3411, %v3409
    %v3574 = vpack.c.b16 %v3412, %v3410
    %v3575 = vpack.c.b16 %v3415, %v3413
    %v3576 = vpack.c.b16 %v3416, %v3414
    %v3577 = vpack.c.b16 %v3419, %v3417
    %v3578 = vpack.c.b16 %v3420, %v3418
    %v3579 = vpack.c.b16 %v3423, %v3421
    %v3580 = vpack.c.b16 %v3424, %v3422
    %v3581 = vpack.c.b16 %v3427, %v3425
    %v3582 = vpack.c.b16 %v3428, %v3426
    %v3583 = vpack.c.b16 %v3431, %v3429
    %v3584 = vpack.c.b16 %v3432, %v3430
    %v3585 = vpack.c.b16 %v3435, %v3433
    %v3586 = vpack.c.b16 %v3436, %v3434
    %v3587 = vpack.c.b16 %v3439, %v3437
    %v3588 = vpack.c.b16 %v3440, %v3438
    %v3589 = vpack.c.b16 %v3443, %v3441
    %v3590 = vpack.c.b16 %v3444, %v3442
    %v3591 = vpack.c.b16 %v3447, %v3445
    %v3592 = vpack.c.b16 %v3448, %v3446
    %v3593 = vpack.c.b16 %v3451, %v3449
    %v3594 = vpack.c.b16 %v3452, %v3450
    %v3595 = vpack.c.b16 %v3455, %v3453
    %v3596 = vpack.c.b16 %v3456, %v3454
    %v3597 = vpack.c.b16 %v3459, %v3457
    %v3598 = vpack.c.b16 %v3460, %v3458
    %v3599 = vpack.c.b16 %v3463, %v3461
    %v3600 = vpack.c.b16 %v3464, %v3462
    %v3601 = vpack.c.b16 %v3467, %v3465
    %v3602 = vpack.c.b16 %v3468, %v3466
    %v3603 = vpack.c.b16 %v3471, %v3469
    %v3604 = vpack.c.b16 %v3472, %v3470
    %v3605 = vpack.c.b16 %v3475, %v3473
    %v3606 = vpack.c.b16 %v3476, %v3474
    %v3607 = vpack.c.b16 %v3479, %v3477
    %v3608 = vpack.c.b16 %v3480, %v3478
    %3737 = vmatprep.subr.bf16.mxu0 %v3496
    %3738 = vmatpush1.bf16.msra.mxu0 %v3495
    %3739 = vmatprep.subr.bf16.mxu0 %v3494
    %3740 = vmatpush1.bf16.msra.mxu0 %v3493
    %3741 = vmatprep.subr.bf16.mxu0 %v3492
    %3742 = vmatpush1.bf16.msra.mxu0 %v3491
    %3743 = vmatprep.subr.bf16.mxu0 %v3490
    %3744 = vmatpush1.bf16.msra.mxu0 %v3489
    %3745 = vmatprep.subr.bf16.mxu0 %v3488
    %3746 = vmatpush1.bf16.msra.mxu0 %v3487
    %3747 = vmatprep.subr.bf16.mxu0 %v3486
    %3748 = vmatpush1.bf16.msra.mxu0 %v3485
    %3749 = vmatprep.subr.bf16.mxu0 %v3484
    %3750 = vmatpush1.bf16.msra.mxu0 %v3483
    %3751 = vmatprep.subr.bf16.mxu0 %v3482
    %3752 = vmatpush1.bf16.msra.mxu0 %v3481
    %3753 = vmatprep.subr.bf16.mxu0 %v3512
    %3754 = vmatpush2.bf16.msra.mxu0 %v3511
    %3755 = vmatprep.subr.bf16.mxu0 %v3510
    %3756 = vmatpush2.bf16.msra.mxu0 %v3509
    %3757 = vmatprep.subr.bf16.mxu0 %v3508
    %3758 = vmatpush2.bf16.msra.mxu0 %v3507
    %3759 = vmatprep.subr.bf16.mxu0 %v3506
    %3760 = vmatpush2.bf16.msra.mxu0 %v3505
    %3761 = vmatprep.subr.bf16.mxu0 %v3504
    %3762 = vmatpush2.bf16.msra.mxu0 %v3503
    %3763 = vmatprep.subr.bf16.mxu0 %v3502
    %3764 = vmatpush2.bf16.msra.mxu0 %v3501
    %3765 = vmatprep.subr.bf16.mxu0 %v3500
    %3766 = vmatpush2.bf16.msra.mxu0 %v3499
    %3767 = vmatprep.subr.bf16.mxu0 %v3498
    %3768 = vmatpush2.bf16.msra.mxu0 %v3497
    %3769 = vmatprep.mubr.bf16.mxu0 %v2950
    %3770 = vmatmul.mubr.bf16.gmra.mxu0 %v2949
    %v3771 = vpop.f32.mrf.mxu0
    %v3772 = vadd.f32 %v3090, %v3771
    %v3773 = vpop.f32.mrf.mxu0
    %v3774 = vadd.f32 %v3094, %v3773
    %v3775 = vpop.f32.mrf.mxu0
    %v3776 = vpop.f32.mrf.mxu0
    %3777 = vdwg.mxu0
    %3778 = vmatprep.subr.bf16.mxu0 %v3528
    %3779 = vmatpush1.bf16.msra.mxu0 %v3527
    %3780 = vmatprep.subr.bf16.mxu0 %v3526
    %3781 = vmatpush1.bf16.msra.mxu0 %v3525
    %3782 = vmatprep.subr.bf16.mxu0 %v3524
    %3783 = vmatpush1.bf16.msra.mxu0 %v3523
    %3784 = vmatprep.subr.bf16.mxu0 %v3522
    %3785 = vmatpush1.bf16.msra.mxu0 %v3521
    %3786 = vmatprep.subr.bf16.mxu0 %v3520
    %3787 = vmatpush1.bf16.msra.mxu0 %v3519
    %3788 = vmatprep.subr.bf16.mxu0 %v3518
    %3789 = vmatpush1.bf16.msra.mxu0 %v3517
    %3790 = vmatprep.subr.bf16.mxu0 %v3516
    %3791 = vmatpush1.bf16.msra.mxu0 %v3515
    %3792 = vmatprep.subr.bf16.mxu0 %v3514
    %3793 = vmatpush1.bf16.msra.mxu0 %v3513
    %3794 = vmatprep.subr.bf16.mxu0 %v3544
    %3795 = vmatpush2.bf16.msra.mxu0 %v3543
    %3796 = vmatprep.subr.bf16.mxu0 %v3542
    %3797 = vmatpush2.bf16.msra.mxu0 %v3541
    %3798 = vmatprep.subr.bf16.mxu0 %v3540
    %3799 = vmatpush2.bf16.msra.mxu0 %v3539
    %3800 = vmatprep.subr.bf16.mxu0 %v3538
    %3801 = vmatpush2.bf16.msra.mxu0 %v3537
    %3802 = vmatprep.subr.bf16.mxu0 %v3536
    %3803 = vmatpush2.bf16.msra.mxu0 %v3535
    %3804 = vmatprep.subr.bf16.mxu0 %v3534
    %3805 = vmatpush2.bf16.msra.mxu0 %v3533
    %3806 = vmatprep.subr.bf16.mxu0 %v3532
    %3807 = vmatpush2.bf16.msra.mxu0 %v3531
    %3808 = vmatprep.subr.bf16.mxu0 %v3530
    %3809 = vmatpush2.bf16.msra.mxu0 %v3529
    %3810 = vmatprep.mubr.bf16.mxu0 %v2952
    %3811 = vmatmul.mubr.bf16.gmra.mxu0 %v2951
    %v3812 = vpop.f32.mrf.mxu0
    %v3813 = vadd.f32 %v3772, %v3812
    %v3814 = vpop.f32.mrf.mxu0
    %v3815 = vadd.f32 %v3774, %v3814
    %v3816 = vpop.f32.mrf.mxu0
    %v3817 = vpop.f32.mrf.mxu0
    %3818 = vdwg.mxu0
    %3819 = vmatprep.subr.bf16.mxu0 %v3560
    %3820 = vmatpush1.bf16.msra.mxu0 %v3559
    %3821 = vmatprep.subr.bf16.mxu0 %v3558
    %3822 = vmatpush1.bf16.msra.mxu0 %v3557
    %3823 = vmatprep.subr.bf16.mxu0 %v3556
    %3824 = vmatpush1.bf16.msra.mxu0 %v3555
    %3825 = vmatprep.subr.bf16.mxu0 %v3554
    %3826 = vmatpush1.bf16.msra.mxu0 %v3553
    %3827 = vmatprep.subr.bf16.mxu0 %v3552
    %3828 = vmatpush1.bf16.msra.mxu0 %v3551
    %3829 = vmatprep.subr.bf16.mxu0 %v3550
    %3830 = vmatpush1.bf16.msra.mxu0 %v3549
    %3831 = vmatprep.subr.bf16.mxu0 %v3548
    %3832 = vmatpush1.bf16.msra.mxu0 %v3547
    %3833 = vmatprep.subr.bf16.mxu0 %v3546
    %3834 = vmatpush1.bf16.msra.mxu0 %v3545
    %3835 = vmatprep.subr.bf16.mxu0 %v3576
    %3836 = vmatpush2.bf16.msra.mxu0 %v3575
    %3837 = vmatprep.subr.bf16.mxu0 %v3574
    %3838 = vmatpush2.bf16.msra.mxu0 %v3573
    %3839 = vmatprep.subr.bf16.mxu0 %v3572
    %3840 = vmatpush2.bf16.msra.mxu0 %v3571
    %3841 = vmatprep.subr.bf16.mxu0 %v3570
    %3842 = vmatpush2.bf16.msra.mxu0 %v3569
    %3843 = vmatprep.subr.bf16.mxu0 %v3568
    %3844 = vmatpush2.bf16.msra.mxu0 %v3567
    %3845 = vmatprep.subr.bf16.mxu0 %v3566
    %3846 = vmatpush2.bf16.msra.mxu0 %v3565
    %3847 = vmatprep.subr.bf16.mxu0 %v3564
    %3848 = vmatpush2.bf16.msra.mxu0 %v3563
    %3849 = vmatprep.subr.bf16.mxu0 %v3562
    %3850 = vmatpush2.bf16.msra.mxu0 %v3561
    %3851 = vmatprep.mubr.bf16.mxu0 %v2954
    %3852 = vmatmul.mubr.bf16.gmra.mxu0 %v2953
    %v3853 = vpop.f32.mrf.mxu0
    %v3854 = vadd.f32 %v3813, %v3853
    %v3855 = vpop.f32.mrf.mxu0
    %v3856 = vadd.f32 %v3815, %v3855
    %v3857 = vpop.f32.mrf.mxu0
    %v3858 = vpop.f32.mrf.mxu0
    %3859 = vdwg.mxu0
    %3860 = vmatprep.subr.bf16.mxu0 %v3592
    %3861 = vmatpush1.bf16.msra.mxu0 %v3591
    %3862 = vmatprep.subr.bf16.mxu0 %v3590
    %3863 = vmatpush1.bf16.msra.mxu0 %v3589
    %3864 = vmatprep.subr.bf16.mxu0 %v3588
    %3865 = vmatpush1.bf16.msra.mxu0 %v3587
    %3866 = vmatprep.subr.bf16.mxu0 %v3586
    %3867 = vmatpush1.bf16.msra.mxu0 %v3585
    %3868 = vmatprep.subr.bf16.mxu0 %v3584
    %3869 = vmatpush1.bf16.msra.mxu0 %v3583
    %3870 = vmatprep.subr.bf16.mxu0 %v3582
    %3871 = vmatpush1.bf16.msra.mxu0 %v3581
    %3872 = vmatprep.subr.bf16.mxu0 %v3580
    %3873 = vmatpush1.bf16.msra.mxu0 %v3579
    %3874 = vmatprep.subr.bf16.mxu0 %v3578
    %3875 = vmatpush1.bf16.msra.mxu0 %v3577
    %3876 = vmatprep.subr.bf16.mxu0 %v3608
    %3877 = vmatpush2.bf16.msra.mxu0 %v3607
    %3878 = vmatprep.subr.bf16.mxu0 %v3606
    %3879 = vmatpush2.bf16.msra.mxu0 %v3605
    %3880 = vmatprep.subr.bf16.mxu0 %v3604
    %3881 = vmatpush2.bf16.msra.mxu0 %v3603
    %3882 = vmatprep.subr.bf16.mxu0 %v3602
    %3883 = vmatpush2.bf16.msra.mxu0 %v3601
    %3884 = vmatprep.subr.bf16.mxu0 %v3600
    %3885 = vmatpush2.bf16.msra.mxu0 %v3599
    %3886 = vmatprep.subr.bf16.mxu0 %v3598
    %3887 = vmatpush2.bf16.msra.mxu0 %v3597
    %3888 = vmatprep.subr.bf16.mxu0 %v3596
    %3889 = vmatpush2.bf16.msra.mxu0 %v3595
    %3890 = vmatprep.subr.bf16.mxu0 %v3594
    %3891 = vmatpush2.bf16.msra.mxu0 %v3593
    %3892 = vmatprep.mubr.bf16.mxu0 %v2956
    %3893 = vmatmul.mubr.bf16.gmra.mxu0 %v2955
    %v3894 = vpop.f32.mrf.mxu0
    %v3895 = vadd.f32 %v3854, %v3894
    %v3896 = vpop.f32.mrf.mxu0
    %v3897 = vadd.f32 %v3856, %v3896
    %v3898 = vpop.f32.mrf.mxu0
    %v3899 = vpop.f32.mrf.mxu0
    %3900 = vdwg.mxu0
    %v3901 = vtanh.pop %v3895
    %v3902 = vtanh.pop %v3897
    %3903 = vst [vmem:[#allocation13] sm:$0xff] %v3901
    %3904 = vst [vmem:[#allocation13 + $0x8] sm:$0xff] %v3902
    // Predicated region
    $region62: #{tpu_custom_call.1} parent=1 // pred_check
      _
    $region63: #{tpu_custom_call.1} parent=1 // pred_check_branch
      %3906 = sbr.rel (0) target = $region65
    $region64: #{tpu_custom_call.1} parent=1 // pred_region
      %s3908 = ssub.s32 256, 256
      %3909 = vsyncadd [#allocation4], %s3908
      %s3911 = sshll.u32 [#allocation13], 4
      %s3912 = int_to_ptr.vmem [resolvable:$true] %s3911
      %3914 = dma.vmem_to_hbm [thread:$0]  %s3912, 256, %s9, [#allocation4]
    $region65: #{tpu_custom_call.1} parent=1 // pred_fallthru
      _
    // Predicated region
    $region66: #{tpu_custom_call.1} parent=1 // pred_check
      _
    $region67: #{tpu_custom_call.1} parent=1 // pred_check_branch
      %3916 = sbr.rel (0) target = $region69
    $region68: #{tpu_custom_call.1} parent=1 // pred_region
      %3917 = dma.done [#allocation4], 256
    $region69: #{tpu_custom_call.1} parent=1 // pred_fallthru
      _
    %3918 = vsyncpa [#allocation3], 1
    %3919 = vsyncpa [#allocation6], 1
    %3920 = vsyncpa [#allocation9], 1
    %3921 = vsyncpa [#allocation12], 1
    %3922 = vsyncpa [#allocation4], 1

</llo_original>
